<compile_context>
chip_gen: v7x
topology: tpu7x:2x2x1
jax: 0.10.0
libtpu: 0.0.40
codegen_flags: <defaults>
</compile_context>

<pallas_src>
import math
from functools import partial

import numpy as np
import jax
import jax.numpy as jnp
from jax.experimental import pallas as pl
from jax.experimental.pallas import tpu as pltpu


# ----------------------------------------------------------------------------- #
# helpers
# ----------------------------------------------------------------------------- #
# 32 MiB is safe scoped-VMEM on every generation (v7x only has 64 MiB physical);
# all tiles below are <= a few MiB so this never binds.
_VMEM_LIMIT = 32 * 1024 * 1024


def _cparams(*sem):
    return pltpu.CompilerParams(dimension_semantics=tuple(sem),
                                vmem_limit_bytes=_VMEM_LIMIT)


def _pick_row_tile(n, cap, prefer_multi=True):
    """Largest 8-multiple divisor of n that is <= cap.  Prefers a choice giving
    >= 2 grid steps (keeps both v7x TensorCores busy).  Falls back to the full
    dimension, which is always a legal block shape (may be large for awkward n)."""
    cands = [b for b in range(min(n, cap), 0, -1) if n % b == 0 and b % 8 == 0]
    if prefer_multi:
        multi = [b for b in cands if n // b >= 2]
        if multi:
            return multi[0]
    if n <= cap:
        return n
    if cands:
        return cands[0]
    return n


def _pick_lane_tile(n, cap, prefer_multi=False):
    """Largest 128-multiple divisor of n that is <= cap (or the full dim)."""
    start = (min(n, cap) // 128) * 128
    cands = [b for b in range(start, 0, -128) if n % b == 0]
    if prefer_multi:
        multi = [b for b in cands if n // b >= 2]
        if multi:
            return multi[0]
    if n <= cap:
        return n
    if cands:
        return cands[0]
    return n


def _pick_windows(n_windows, t, cap_rows=128):
    """Windows per attention grid step: MB = wb*t <= cap_rows (128 matches the
    v5e MXU and bounds the masked-score waste), 8-aligned rows, wb | n_windows,
    and >= 2 grid steps whenever possible (v7x megacore)."""
    cands = [w for w in range(n_windows, 0, -1)
             if n_windows % w == 0 and w * t <= cap_rows and (w * t) % 8 == 0]
    multi = [w for w in cands if n_windows // w >= 2]
    if multi:
        return multi[0]
    if cands:
        return cands[0]
    return n_windows


def _block_diag_mask(wb, t):
    """Additive per-window mask (0 on the block diagonal, -inf elsewhere),
    precomputed once and kept resident in VMEM (constant index_map)."""
    mb = wb * t
    wid = np.arange(mb) // t
    m = np.where(wid[:, None] == wid[None, :], 0.0, -np.inf).astype(np.float32)
    return jnp.asarray(m)


# ----------------------------------------------------------------------------- #
# Pallas kernels
# ----------------------------------------------------------------------------- #
def _matmul_bias_kernel(x_ref, w_ref, b_ref, o_ref):
    x = x_ref[...].astype(jnp.bfloat16)
    w = w_ref[...].astype(jnp.bfloat16)
    o_ref[...] = (jnp.dot(x, w, preferred_element_type=jnp.float32) + b_ref[...])


def matmul_bias(x, w, b, row_tile=1024):
    """x: (M, K) @ w: (K, N) + b: (N,) -> (M, N) f32; bf16 MXU, tiled over M."""
    M, K = x.shape
    N = w.shape[1]
    tm = _pick_row_tile(M, row_tile)
    return pl.pallas_call(
        _matmul_bias_kernel,
        out_shape=jax.ShapeDtypeStruct((M, N), jnp.float32),
        grid=(M // tm,),
        in_specs=[pl.BlockSpec((tm, K), lambda i: (i, 0)),
                  pl.BlockSpec((K, N), lambda i: (0, 0)),
                  pl.BlockSpec((1, N), lambda i: (0, 0))],
        out_specs=pl.BlockSpec((tm, N), lambda i: (i, 0)),
        compiler_params=_cparams("parallel"),
    )(x, w, b.reshape(1, N).astype(jnp.float32))


def _lepe_kernel(vpad_ref, w_ref, b_ref, o_ref, *, offsets, pad):
    """Depthwise 3x3 conv on the flat per-window buffer: 9 shifted multiply-adds.
    Out-of-window taps have zero weight, so the shifted reads that land in the
    halo / a neighbouring channel contribute nothing (assumes finite inputs)."""
    tc = o_ref.shape[-1]
    vp = vpad_ref[...]                 # (rows, TC + 2*pad), f32
    taps = w_ref[...]                  # (9, TC) position-dependent tap weights
    acc = jnp.zeros(o_ref.shape, jnp.float32)
    for k, off in enumerate(offsets):  # unrolled: VPU FMAs on static lane slices
        shifted = vp[:, pad + off: pad + off + tc]
        acc = acc + taps[k:k + 1, :] * shifted
    o_ref[...] = acc + b_ref[...]


def lepe_conv(v2, taps_w, taps_b, n_windows, t, c, ws, row_tile=128):
    """Locally-enhanced PE: depthwise 3x3 conv (pad=1, groups=C) applied to the
    *flat* per-window view of v (exactly what the PyTorch .reshape(N,C,ws,ws)
    does), computed as 9 position-weighted shifted adds."""
    tc = t * c
    pad = ws + 1                                    # max |tap offset| = ws + 1
    offsets = tuple(di * ws + dj for di in (-1, 0, 1) for dj in (-1, 0, 1))
    v_flat = v2.reshape(n_windows, tc)              # free row-major reshape
    v_pad = jnp.pad(v_flat, ((0, 0), (pad, pad)))   # zero halo for shifted slices
    wb = _pick_row_tile(n_windows, row_tile)
    kern = partial(_lepe_kernel, offsets=offsets, pad=pad)
    return pl.pallas_call(
        kern,
        out_shape=jax.ShapeDtypeStruct((n_windows, tc), jnp.float32),
        grid=(n_windows // wb,),
        in_specs=[pl.BlockSpec((wb, tc + 2 * pad), lambda i: (i, 0)),
                  pl.BlockSpec((9, tc), lambda i: (0, 0)),
                  pl.BlockSpec((1, tc), lambda i: (0, 0))],
        out_specs=pl.BlockSpec((wb, tc), lambda i: (i, 0)),
        compiler_params=_cparams("parallel"),
    )(v_pad, taps_w, taps_b.reshape(1, tc))


def _win_attn_kernel(x_ref, lepe_ref, mask_ref, wqkv_ref, bqkv_ref, wo_ref, bo_ref,
                     o_ref, *, c, n_win):
    """Fused qkv-proj + per-window SDPA + lepe add + out-proj (bf16 MXU, f32 acc).
    The block holds n_win whole windows as a (n_win*T, C) slab; per-window
    attention is enforced with a precomputed block-diagonal additive mask."""
    x = x_ref[...].astype(jnp.bfloat16)                                # (MB, C)
    qkv = (jnp.dot(x, wqkv_ref[...].astype(jnp.bfloat16),
                   preferred_element_type=jnp.float32) + bqkv_ref[...])
    q = qkv[:, :c].astype(jnp.bfloat16)        # 1/sqrt(C) already folded into Wq/bq
    k = qkv[:, c:2 * c].astype(jnp.bfloat16)
    v = qkv[:, 2 * c:3 * c].astype(jnp.bfloat16)
    s = jax.lax.dot_general(q, k, (((1,), (1,)), ((), ())),
                            preferred_element_type=jnp.float32)        # (MB, MB)
    if n_win > 1:
        s = s + mask_ref[...]              # 0 / -inf -> exact per-window softmax
    m = jnp.max(s, axis=-1, keepdims=True)
    p = jnp.exp(s - m)
    p = p * pl.reciprocal(jnp.sum(p, axis=-1, keepdims=True), approx=True)
    attn = jnp.dot(p.astype(jnp.bfloat16), v,
                   preferred_element_type=jnp.float32)                 # (MB, C)
    y = (attn + lepe_ref[...]).astype(jnp.bfloat16)
    o_ref[...] = (jnp.dot(y, wo_ref[...].astype(jnp.bfloat16),
                          preferred_element_type=jnp.float32) + bo_ref[...])


def window_attention_fused(xw_flat, lepe_flat, mask, wqkv_t, bqkv, wo_t, bo,
                           n_windows, t, c, wb):
    nt = n_windows * t
    mb = wb * t
    kern = partial(_win_attn_kernel, c=c, n_win=wb)
    tok_spec = pl.BlockSpec((mb, c), lambda i: (i, 0))
    const = lambda i: (0, 0)
    return pl.pallas_call(
        kern,
        out_shape=jax.ShapeDtypeStruct((nt, c), jnp.float32),
        grid=(nt // mb,),
        in_specs=[tok_spec,
                  pl.BlockSpec((mb, c), lambda i: (i, 0)),
                  pl.BlockSpec((mb, mb), const),
                  pl.BlockSpec((c, 3 * c), const),
                  pl.BlockSpec((1, 3 * c), const),
                  pl.BlockSpec((c, c), const),
                  pl.BlockSpec((1, c), const)],
        out_specs=tok_spec,
        compiler_params=_cparams("parallel"),
    )(xw_flat, lepe_flat, mask,
      wqkv_t, bqkv.reshape(1, 3 * c).astype(jnp.float32),
      wo_t, bo.reshape(1, c).astype(jnp.float32))


def _aggr_kernel(x_ref, w_ref, b_ref, o_ref):
    # x_ref: (1, C, thw) f32; w_ref: (Cout, Cin) bf16; b_ref: (Cout, 1) f32
    x = x_ref[0].astype(jnp.bfloat16)
    o_ref[0] = (jnp.dot(w_ref[...].astype(jnp.bfloat16), x,
                        preferred_element_type=jnp.float32) + b_ref[...])


def aggr_1x1(x_bchw, w, b, lane_tile=2048):
    """1x1 conv computed directly in the (B, C, H*W) layout: lane-dense output,
    resident (C, C) weight, no transpose round-trips through HBM."""
    B, C, H, W = x_bchw.shape
    hw = H * W
    thw = _pick_lane_tile(hw, lane_tile, prefer_multi=(B == 1))
    x2 = x_bchw.reshape(B, C, hw)
    out = pl.pallas_call(
        _aggr_kernel,
        out_shape=jax.ShapeDtypeStruct((B, C, hw), jnp.float32),
        grid=(B, hw // thw),
        in_specs=[pl.BlockSpec((1, C, thw), lambda bi, j: (bi, 0, j)),
                  pl.BlockSpec((C, C), lambda bi, j: (0, 0)),
                  pl.BlockSpec((C, 1), lambda bi, j: (0, 0))],
        out_specs=pl.BlockSpec((1, C, thw), lambda bi, j: (bi, 0, j)),
        compiler_params=_cparams("parallel", "parallel"),
    )(x2, w, b.reshape(C, 1).astype(jnp.float32))
    return out.reshape(B, C, H, W)


# ----------------------------------------------------------------------------- #
# Glue (exact PyTorch semantics, plain JAX)
# ----------------------------------------------------------------------------- #
# TODO(synk): window (un)partition could be folded into the attention kernel by
# reading (1, ws, wb*ws, C)-shaped blocks straight from the (B,C,H,W) map and
# reordering in VMEM; kept as XLA transposes for lowering safety.
def window_partition(x, ws):
    B, C, H, W = x.shape
    x = x.reshape(B, H // ws, ws, W // ws, ws, C)            # raw view, as in torch
    x = jnp.transpose(x, (0, 1, 3, 2, 4, 5))
    return x.reshape(-1, ws * ws, C)


def reverse_window_partition(x, h, w, ws):
    b = x.shape[0] // ((w // ws) * (h // ws))
    x = x.reshape(b, h // ws, w // ws, ws, ws, -1)
    x = jnp.transpose(x, (0, 1, 3, 2, 4, 5))
    return x.reshape(b, -1, h, w)                            # raw view, as in torch


def adaptive_max_pool_pow2(x, factor):
    # adaptive_max_pool2d with exact divisibility == blocked max pool
    B, C, H, W = x.shape
    x = x.reshape(B, C, H // factor, factor, W // factor, factor)
    return jnp.max(x, axis=(3, 5))


def _bicubic_weights_idx(in_size, out_size):
    # PyTorch bicubic, align_corners=False, A = -0.75
    A = -0.75
    scale = in_size / out_size
    d = jnp.arange(out_size, dtype=jnp.float32)
    src = (d + 0.5) * scale - 0.5
    fl = jnp.floor(src)
    t = src - fl
    i0 = fl.astype(jnp.int32)
    idx = jnp.stack([jnp.clip(i0 + k - 1, 0, in_size - 1) for k in range(4)], axis=0)

    def cub1(x): return ((A + 2.0) * x - (A + 3.0)) * x * x + 1.0
    def cub2(x): return ((A * x - 5.0 * A) * x + 8.0 * A) * x - 4.0 * A

    w = jnp.stack([cub2(t + 1.0), cub1(t), cub1(1.0 - t), cub2(2.0 - t)], axis=0)
    return idx, w


def bicubic_upsample(x, out_h, out_w):
    B, C, H, W = x.shape
    idx_h, w_h = _bicubic_weights_idx(H, out_h)
    idx_w, w_w = _bicubic_weights_idx(W, out_w)
    xg = x[:, :, idx_h, :]                                   # (B, C, 4, out_h, W)
    xh = jnp.einsum("bckhw,kh->bchw", xg, w_h)               # (B, C, out_h, W)
    xg2 = xh[:, :, :, idx_w]                                 # (B, C, out_h, 4, out_w)
    return jnp.einsum("bchkw,kw->bchw", xg2, w_w)            # (B, C, out_h, out_w)


# ----------------------------------------------------------------------------- #
# ViTBlock / LHSABlock forward
# ----------------------------------------------------------------------------- #
def vit_block(x, p, ws):
    B, C, H, W = x.shape
    t = ws * ws
    xw = window_partition(x, ws)                             # (N, T, C)
    n = xw.shape[0]
    # bf16 activations for all MXU consumers (cast fuses into the partition copy)
    xw_flat = xw.reshape(n * t, C).astype(jnp.bfloat16)
    # TODO(synk): fuse v-proj + lepe into the attention kernel (needs an in-kernel
    # (MB,C)->(wb,T*C) minor-dim reshape or lane rolls); kept standalone for safe
    # lowering at small / unaligned C.
    wv_t = p["w_qkv_t"][:, 2 * C:]                           # v columns (unscaled)
    bv = p["b_qkv"][2 * C:]
    v2 = matmul_bias(xw_flat, wv_t, bv)                      # (N*T, C) f32
    lepe = lepe_conv(v2, p["lepe_w"], p["lepe_b"], n, t, C, ws)   # (N, T*C)
    lepe2 = lepe.reshape(n * t, C)                           # free reshape back
    wb = _pick_windows(n, t)
    mask = _block_diag_mask(wb, t)
    out2 = window_attention_fused(xw_flat, lepe2, mask, p["w_qkv_t"], p["b_qkv"],
                                  p["w_out_t"], p["b_out"], n, t, C, wb)
    return reverse_window_partition(out2.reshape(n, t, C), H, W, ws)


def lhsa_block(x, params, levels, ws):
    B, H, W, C = x.shape
    x_r = x.reshape(B, C, H, W)                              # raw view, as in torch
    Cl = C // levels
    chunks = [x_r[:, i * Cl:(i + 1) * Cl] for i in range(levels)]
    dmaps = []
    for i in range(levels):
        dmaps.append(adaptive_max_pool_pow2(chunks[i], 2 ** i) if i > 0 else chunks[i])

    out_maps = []
    for i in reversed(range(levels)):
        z = vit_block(dmaps[i], params["vit"][i], ws)
        if i > 0:
            z_up = bicubic_upsample(z, z.shape[2] * 2, z.shape[3] * 2)
            dmaps[i - 1] = dmaps[i - 1] + z_up
            z = bicubic_upsample(z_up, H, W)
        out_maps.append(z)

    cat = jnp.concatenate(out_maps, axis=1)                  # (B, C, H, W)
    y = aggr_1x1(cat, params["w_aggr"], params["b_aggr"])    # 1x1 conv, (B,C,HW) layout
    # TODO(synk): exact-erf GELU * x kept in plain-JAX glue (erf lowering in Mosaic
    # unverified); it is a single fused elementwise pass under XLA.
    out = jax.nn.gelu(y, approximate=False) * x_r
    return out.reshape(B, H, W, C)


# ----------------------------------------------------------------------------- #
# Deterministic parameter construction
# ----------------------------------------------------------------------------- #
def build_lepe_taps(conv_w, conv_b, ws, C):
    """Depthwise 3x3 conv (pad 1, groups=C) on the flat (C, ws, ws) view of v,
    as 9 tap-weight vectors over the flat index f = c*ws*ws + i*ws + j:
      lepe[f] = conv_b[f//T] + sum_k W[k, f] * v_flat[f + off_k]."""
    T = ws * ws
    TC = T * C
    f = np.arange(TC)
    c = f // T
    s = f % T
    i = s // ws
    j = s % ws
    W = np.zeros((9, TC), np.float32)
    taps = [(di, dj) for di in (-1, 0, 1) for dj in (-1, 0, 1)]
    for k, (di, dj) in enumerate(taps):
        valid = (i + di >= 0) & (i + di < ws) & (j + dj >= 0) & (j + dj < ws)
        W[k] = np.where(valid, conv_w[c, 0, di + 1, dj + 1], 0.0)
    bias = conv_b[c].astype(np.float32)
    return W, bias


def init_params(seed, levels, ws, dim):
    Cl = dim // levels
    inv_sqrt_c = 1.0 / math.sqrt(Cl)
    key = jax.random.PRNGKey(seed)

    def nxt():
        nonlocal key
        key, sub = jax.random.split(key)
        return sub

    vit_params = []
    for _ in range(levels):
        w_qkv = jax.random.normal(nxt(), (3 * Cl, Cl), jnp.float32) * 0.2
        b_qkv = jax.random.normal(nxt(), (3 * Cl,), jnp.float32) * 0.1
        w_pe = jax.random.normal(nxt(), (Cl, 1, 3, 3), jnp.float32) * 0.2
        b_pe = jax.random.normal(nxt(), (Cl,), jnp.float32) * 0.1
        w_out = jax.random.normal(nxt(), (Cl, Cl), jnp.float32) * 0.2
        b_out = jax.random.normal(nxt(), (Cl,), jnp.float32) * 0.1
        taps_w, taps_b = build_lepe_taps(np.asarray(w_pe), np.asarray(b_pe), ws, Cl)
        # Fold the SDPA 1/sqrt(C) scale into the q columns / q bias; store the MXU
        # weights in bf16 (accumulation stays f32 in the kernels).
        w_qkv_t = np.asarray(w_qkv).T.copy()                 # (Cl, 3Cl)
        w_qkv_t[:, :Cl] *= inv_sqrt_c
        b_qkv_s = np.asarray(b_qkv).copy()
        b_qkv_s[:Cl] *= inv_sqrt_c
        vit_params.append(dict(
            w_qkv_t=jnp.asarray(w_qkv_t, jnp.bfloat16),      # (Cl, 3Cl) bf16
            b_qkv=jnp.asarray(b_qkv_s, jnp.float32),
            w_out_t=jnp.asarray(np.asarray(w_out).T, jnp.bfloat16),   # (Cl, Cl) bf16
            b_out=b_out,
            lepe_w=jnp.asarray(taps_w),                      # (9, T*Cl) f32
            lepe_b=jnp.asarray(taps_b),                      # (T*Cl,)   f32
        ))
    w_aggr = jax.random.normal(nxt(), (dim, dim, 1, 1), jnp.float32) * 0.2
    b_aggr = jax.random.normal(nxt(), (dim,), jnp.float32) * 0.1
    return dict(vit=vit_params,
                w_aggr=jnp.asarray(w_aggr[:, :, 0, 0], jnp.bfloat16),  # (dim, dim)
                b_aggr=b_aggr)


# ----------------------------------------------------------------------------- #
if __name__ == "__main__":
    levels, window_size, dim = 2, 4, 4
    B, H, W = 2, 16, 16

    x = jax.random.normal(jax.random.PRNGKey(0), (B, H, W, dim), jnp.float32)
    params = init_params(42, levels, window_size, dim)

    fwd = jax.jit(partial(lhsa_block, levels=levels, ws=window_size))
    out = fwd(x, params)
    out = jax.block_until_ready(out)
    assert out.shape == (B, H, W, dim) and out.dtype == jnp.float32
    assert bool(jnp.all(jnp.isfinite(out)))
    print("KERNEL_OK")
</pallas_src>

<mosaic_0001>
module attributes {stable_mosaic.version = 11 : i64} {
  func.func @_matmul_bias_kernel(%arg0: i32, %arg1: memref<64x2xbf16, #tpu.memory_space<vmem>>, %arg2: memref<2x2xbf16, #tpu.memory_space<vmem>>, %arg3: memref<1x2xf32, #tpu.memory_space<vmem>>, %arg4: memref<64x2xf32, #tpu.memory_space<vmem>>) attributes {dimension_semantics = [#tpu.dimension_semantics<parallel>], iteration_bounds = array<i64: 2>, scalar_prefetch = 0 : i64, scratch_operands = 0 : i64, tpu.core_type = #tpu.core_type<tc>, window_params = [{transform_indices = @transform_0, window_bounds = array<i64: 64, 2>}, {pipeline_mode = #tpu.pipeline_mode<synchronous>, transform_indices = @transform_1, window_bounds = array<i64: 2, 2>}, {pipeline_mode = #tpu.pipeline_mode<synchronous>, transform_indices = @transform_2, window_bounds = array<i64: 1, 2>}, {transform_indices = @transform_3, window_bounds = array<i64: 64, 2>}]} {
    %c0 = arith.constant 0 : index
    %c0_0 = arith.constant 0 : index
    %0 = vector.load %arg1[%c0, %c0_0] : memref<64x2xbf16, #tpu.memory_space<vmem>>, vector<64x2xbf16>
    %c0_1 = arith.constant 0 : index
    %c0_2 = arith.constant 0 : index
    %1 = vector.load %arg2[%c0_1, %c0_2] : memref<2x2xbf16, #tpu.memory_space<vmem>>, vector<2x2xbf16>
    %cst = arith.constant dense<0.000000e+00> : vector<64x2xf32>
    %2 = tpu.matmul %0, %1, %cst {dimension_numbers = #tpu.dot_dimension_numbers<[1], [0], [0], [1], [0, 0, 1, 1], [], []>} : vector<64x2xbf16>, vector<2x2xbf16>, vector<64x2xf32> -> vector<64x2xf32>
    %c0_3 = arith.constant 0 : index
    %c0_4 = arith.constant 0 : index
    %3 = vector.load %arg3[%c0_3, %c0_4] : memref<1x2xf32, #tpu.memory_space<vmem>>, vector<1x2xf32>
    %4 = vector.broadcast %3 : vector<1x2xf32> to vector<64x2xf32>
    %5 = arith.addf %2, %4 : vector<64x2xf32>
    %c0_5 = arith.constant 0 : index
    %c0_6 = arith.constant 0 : index
    %6 = vector.load %arg4[%c0_5, %c0_6] : memref<64x2xf32, #tpu.memory_space<vmem>>, vector<64x2xf32>
    tpu.vector_store %arg4[%c0_5, %c0_6], %5 {strides = array<i32>} : memref<64x2xf32, #tpu.memory_space<vmem>>, vector<64x2xf32>,
    return
  }
  func.func @transform_0(%arg0: i32) -> (i32, i32) {
    %c0_i32 = arith.constant 0 : i32
    %c0_i32_0 = arith.constant 0 : i32
    return %arg0, %c0_i32 : i32, i32
  }
  func.func @transform_1(%arg0: i32) -> (i32, i32) {
    %c0_i32 = arith.constant 0 : i32
    %c0_i32_0 = arith.constant 0 : i32
    %c0_i32_1 = arith.constant 0 : i32
    return %c0_i32, %c0_i32_0 : i32, i32
  }
  func.func @transform_2(%arg0: i32) -> (i32, i32) {
    %c0_i32 = arith.constant 0 : i32
    %c0_i32_0 = arith.constant 0 : i32
    %c0_i32_1 = arith.constant 0 : i32
    return %c0_i32, %c0_i32_0 : i32, i32
  }
  func.func @transform_3(%arg0: i32) -> (i32, i32) {
    %c0_i32 = arith.constant 0 : i32
    %c0_i32_0 = arith.constant 0 : i32
    return %arg0, %c0_i32 : i32, i32
  }
}

module attributes {stable_mosaic.version = 11 : i64} {
  func.func @_lepe_kernel(%arg0: i32, %arg1: memref<8x42xf32, #tpu.memory_space<vmem>>, %arg2: memref<9x32xf32, #tpu.memory_space<vmem>>, %arg3: memref<1x32xf32, #tpu.memory_space<vmem>>, %arg4: memref<8x32xf32, #tpu.memory_space<vmem>>) attributes {dimension_semantics = [#tpu.dimension_semantics<parallel>], iteration_bounds = array<i64: 1>, scalar_prefetch = 0 : i64, scratch_operands = 0 : i64, tpu.core_type = #tpu.core_type<tc>, window_params = [{transform_indices = @transform_0, window_bounds = array<i64: 8, 42>}, {pipeline_mode = #tpu.pipeline_mode<synchronous>, transform_indices = @transform_1, window_bounds = array<i64: 9, 32>}, {pipeline_mode = #tpu.pipeline_mode<synchronous>, transform_indices = @transform_2, window_bounds = array<i64: 1, 32>}, {transform_indices = @transform_3, window_bounds = array<i64: 8, 32>}]} {
    %c0 = arith.constant 0 : index
    %c0_0 = arith.constant 0 : index
    %0 = vector.load %arg1[%c0, %c0_0] : memref<8x42xf32, #tpu.memory_space<vmem>>, vector<8x42xf32>
    %c0_1 = arith.constant 0 : index
    %c0_2 = arith.constant 0 : index
    %1 = vector.load %arg2[%c0_1, %c0_2] : memref<9x32xf32, #tpu.memory_space<vmem>>, vector<9x32xf32>
    %cst = arith.constant 0.000000e+00 : f32
    %2 = vector.broadcast %cst : f32 to vector<8x32xf32>
    %3 = vector.extract_strided_slice %0 {offsets = [0, 0], sizes = [8, 32], strides = [1, 1]} : vector<8x42xf32> to vector<8x32xf32>
    %4 = vector.extract_strided_slice %1 {offsets = [0, 0], sizes = [1, 32], strides = [1, 1]} : vector<9x32xf32> to vector<1x32xf32>
    %5 = vector.broadcast %4 : vector<1x32xf32> to vector<8x32xf32>
    %6 = arith.mulf %5, %3 : vector<8x32xf32>
    %7 = arith.addf %2, %6 : vector<8x32xf32>
    %8 = vector.extract_strided_slice %0 {offsets = [0, 1], sizes = [8, 32], strides = [1, 1]} : vector<8x42xf32> to vector<8x32xf32>
    %9 = vector.extract_strided_slice %1 {offsets = [1, 0], sizes = [1, 32], strides = [1, 1]} : vector<9x32xf32> to vector<1x32xf32>
    %10 = vector.broadcast %9 : vector<1x32xf32> to vector<8x32xf32>
    %11 = arith.mulf %10, %8 : vector<8x32xf32>
    %12 = arith.addf %7, %11 : vector<8x32xf32>
    %13 = vector.extract_strided_slice %0 {offsets = [0, 2], sizes = [8, 32], strides = [1, 1]} : vector<8x42xf32> to vector<8x32xf32>
    %14 = vector.extract_strided_slice %1 {offsets = [2, 0], sizes = [1, 32], strides = [1, 1]} : vector<9x32xf32> to vector<1x32xf32>
    %15 = vector.broadcast %14 : vector<1x32xf32> to vector<8x32xf32>
    %16 = arith.mulf %15, %13 : vector<8x32xf32>
    %17 = arith.addf %12, %16 : vector<8x32xf32>
    %18 = vector.extract_strided_slice %0 {offsets = [0, 4], sizes = [8, 32], strides = [1, 1]} : vector<8x42xf32> to vector<8x32xf32>
    %19 = vector.extract_strided_slice %1 {offsets = [3, 0], sizes = [1, 32], strides = [1, 1]} : vector<9x32xf32> to vector<1x32xf32>
    %20 = vector.broadcast %19 : vector<1x32xf32> to vector<8x32xf32>
    %21 = arith.mulf %20, %18 : vector<8x32xf32>
    %22 = arith.addf %17, %21 : vector<8x32xf32>
    %23 = vector.extract_strided_slice %0 {offsets = [0, 5], sizes = [8, 32], strides = [1, 1]} : vector<8x42xf32> to vector<8x32xf32>
    %24 = vector.extract_strided_slice %1 {offsets = [4, 0], sizes = [1, 32], strides = [1, 1]} : vector<9x32xf32> to vector<1x32xf32>
    %25 = vector.broadcast %24 : vector<1x32xf32> to vector<8x32xf32>
    %26 = arith.mulf %25, %23 : vector<8x32xf32>
    %27 = arith.addf %22, %26 : vector<8x32xf32>
    %28 = vector.extract_strided_slice %0 {offsets = [0, 6], sizes = [8, 32], strides = [1, 1]} : vector<8x42xf32> to vector<8x32xf32>
    %29 = vector.extract_strided_slice %1 {offsets = [5, 0], sizes = [1, 32], strides = [1, 1]} : vector<9x32xf32> to vector<1x32xf32>
    %30 = vector.broadcast %29 : vector<1x32xf32> to vector<8x32xf32>
    %31 = arith.mulf %30, %28 : vector<8x32xf32>
    %32 = arith.addf %27, %31 : vector<8x32xf32>
    %33 = vector.extract_strided_slice %0 {offsets = [0, 8], sizes = [8, 32], strides = [1, 1]} : vector<8x42xf32> to vector<8x32xf32>
    %34 = vector.extract_strided_slice %1 {offsets = [6, 0], sizes = [1, 32], strides = [1, 1]} : vector<9x32xf32> to vector<1x32xf32>
    %35 = vector.broadcast %34 : vector<1x32xf32> to vector<8x32xf32>
    %36 = arith.mulf %35, %33 : vector<8x32xf32>
    %37 = arith.addf %32, %36 : vector<8x32xf32>
    %38 = vector.extract_strided_slice %0 {offsets = [0, 9], sizes = [8, 32], strides = [1, 1]} : vector<8x42xf32> to vector<8x32xf32>
    %39 = vector.extract_strided_slice %1 {offsets = [7, 0], sizes = [1, 32], strides = [1, 1]} : vector<9x32xf32> to vector<1x32xf32>
    %40 = vector.broadcast %39 : vector<1x32xf32> to vector<8x32xf32>
    %41 = arith.mulf %40, %38 : vector<8x32xf32>
    %42 = arith.addf %37, %41 : vector<8x32xf32>
    %43 = vector.extract_strided_slice %0 {offsets = [0, 10], sizes = [8, 32], strides = [1, 1]} : vector<8x42xf32> to vector<8x32xf32>
    %44 = vector.extract_strided_slice %1 {offsets = [8, 0], sizes = [1, 32], strides = [1, 1]} : vector<9x32xf32> to vector<1x32xf32>
    %45 = vector.broadcast %44 : vector<1x32xf32> to vector<8x32xf32>
    %46 = arith.mulf %45, %43 : vector<8x32xf32>
    %47 = arith.addf %42, %46 : vector<8x32xf32>
    %c0_3 = arith.constant 0 : index
    %c0_4 = arith.constant 0 : index
    %48 = vector.load %arg3[%c0_3, %c0_4] : memref<1x32xf32, #tpu.memory_space<vmem>>, vector<1x32xf32>
    %49 = vector.broadcast %48 : vector<1x32xf32> to vector<8x32xf32>
    %50 = arith.addf %47, %49 : vector<8x32xf32>
    %c0_5 = arith.constant 0 : index
    %c0_6 = arith.constant 0 : index
    %51 = vector.load %arg4[%c0_5, %c0_6] : memref<8x32xf32, #tpu.memory_space<vmem>>, vector<8x32xf32>
    tpu.vector_store %arg4[%c0_5, %c0_6], %50 {strides = array<i32>} : memref<8x32xf32, #tpu.memory_space<vmem>>, vector<8x32xf32>,
    return
  }
  func.func @transform_0(%arg0: i32) -> (i32, i32) {
    %c0_i32 = arith.constant 0 : i32
    %c0_i32_0 = arith.constant 0 : i32
    return %arg0, %c0_i32 : i32, i32
  }
  func.func @transform_1(%arg0: i32) -> (i32, i32) {
    %c0_i32 = arith.constant 0 : i32
    %c0_i32_0 = arith.constant 0 : i32
    %c0_i32_1 = arith.constant 0 : i32
    return %c0_i32, %c0_i32_0 : i32, i32
  }
  func.func @transform_2(%arg0: i32) -> (i32, i32) {
    %c0_i32 = arith.constant 0 : i32
    %c0_i32_0 = arith.constant 0 : i32
    %c0_i32_1 = arith.constant 0 : i32
    return %c0_i32, %c0_i32_0 : i32, i32
  }
  func.func @transform_3(%arg0: i32) -> (i32, i32) {
    %c0_i32 = arith.constant 0 : i32
    %c0_i32_0 = arith.constant 0 : i32
    return %arg0, %c0_i32 : i32, i32
  }
}

module attributes {stable_mosaic.version = 11 : i64} {
  func.func @_win_attn_kernel(%arg0: i32, %arg1: memref<64x2xbf16, #tpu.memory_space<vmem>>, %arg2: memref<64x2xf32, #tpu.memory_space<vmem>>, %arg3: memref<64x64xf32, #tpu.memory_space<vmem>>, %arg4: memref<2x6xbf16, #tpu.memory_space<vmem>>, %arg5: memref<1x6xf32, #tpu.memory_space<vmem>>, %arg6: memref<2x2xbf16, #tpu.memory_space<vmem>>, %arg7: memref<1x2xf32, #tpu.memory_space<vmem>>, %arg8: memref<64x2xf32, #tpu.memory_space<vmem>>) attributes {dimension_semantics = [#tpu.dimension_semantics<parallel>], iteration_bounds = array<i64: 2>, scalar_prefetch = 0 : i64, scratch_operands = 0 : i64, tpu.core_type = #tpu.core_type<tc>, window_params = [{transform_indices = @transform_0, window_bounds = array<i64: 64, 2>}, {transform_indices = @transform_1, window_bounds = array<i64: 64, 2>}, {pipeline_mode = #tpu.pipeline_mode<synchronous>, transform_indices = @transform_2, window_bounds = array<i64: 64, 64>}, {pipeline_mode = #tpu.pipeline_mode<synchronous>, transform_indices = @transform_3, window_bounds = array<i64: 2, 6>}, {pipeline_mode = #tpu.pipeline_mode<synchronous>, transform_indices = @transform_4, window_bounds = array<i64: 1, 6>}, {pipeline_mode = #tpu.pipeline_mode<synchronous>, transform_indices = @transform_5, window_bounds = array<i64: 2, 2>}, {pipeline_mode = #tpu.pipeline_mode<synchronous>, transform_indices = @transform_6, window_bounds = array<i64: 1, 2>}, {transform_indices = @transform_7, window_bounds = array<i64: 64, 2>}]} {
    %c0 = arith.constant 0 : index
    %c0_0 = arith.constant 0 : index
    %0 = vector.load %arg1[%c0, %c0_0] : memref<64x2xbf16, #tpu.memory_space<vmem>>, vector<64x2xbf16>
    %c0_1 = arith.constant 0 : index
    %c0_2 = arith.constant 0 : index
    %1 = vector.load %arg4[%c0_1, %c0_2] : memref<2x6xbf16, #tpu.memory_space<vmem>>, vector<2x6xbf16>
    %cst = arith.constant dense<0.000000e+00> : vector<64x6xf32>
    %2 = tpu.matmul %0, %1, %cst {dimension_numbers = #tpu.dot_dimension_numbers<[1], [0], [0], [1], [0, 0, 1, 1], [], []>} : vector<64x2xbf16>, vector<2x6xbf16>, vector<64x6xf32> -> vector<64x6xf32>
    %c0_3 = arith.constant 0 : index
    %c0_4 = arith.constant 0 : index
    %3 = vector.load %arg5[%c0_3, %c0_4] : memref<1x6xf32, #tpu.memory_space<vmem>>, vector<1x6xf32>
    %4 = vector.broadcast %3 : vector<1x6xf32> to vector<64x6xf32>
    %5 = arith.addf %2, %4 : vector<64x6xf32>
    %6 = vector.extract_strided_slice %5 {offsets = [0, 0], sizes = [64, 2], strides = [1, 1]} : vector<64x6xf32> to vector<64x2xf32>
    %7 = arith.truncf %6 : vector<64x2xf32> to vector<64x2xbf16>
    %8 = vector.extract_strided_slice %5 {offsets = [0, 2], sizes = [64, 2], strides = [1, 1]} : vector<64x6xf32> to vector<64x2xf32>
    %9 = arith.truncf %8 : vector<64x2xf32> to vector<64x2xbf16>
    %10 = vector.extract_strided_slice %5 {offsets = [0, 4], sizes = [64, 2], strides = [1, 1]} : vector<64x6xf32> to vector<64x2xf32>
    %11 = arith.truncf %10 : vector<64x2xf32> to vector<64x2xbf16>
    %cst_5 = arith.constant dense<0.000000e+00> : vector<64x64xf32>
    %12 = tpu.matmul %7, %9, %cst_5 {dimension_numbers = #tpu.dot_dimension_numbers<[1], [1], [0], [0], [0, 0, 1, 0], [], []>} : vector<64x2xbf16>, vector<64x2xbf16>, vector<64x64xf32> -> vector<64x64xf32>
    %c0_6 = arith.constant 0 : index
    %c0_7 = arith.constant 0 : index
    %13 = vector.load %arg3[%c0_6, %c0_7] : memref<64x64xf32, #tpu.memory_space<vmem>>, vector<64x64xf32>
    %14 = arith.addf %12, %13 : vector<64x64xf32>
    %cst_8 = arith.constant dense<0xFF800000> : vector<64xf32>
    %15 = vector.multi_reduction <maximumf>, %14, %cst_8 [1] : vector<64x64xf32> to vector<64xf32>
    %16 = vector.shape_cast %15 : vector<64xf32> to vector<64x1xf32>
    %17 = vector.broadcast %16 : vector<64x1xf32> to vector<64x64xf32>
    %18 = arith.subf %14, %17 : vector<64x64xf32>
    %19 = math.exp %18 : vector<64x64xf32>
    %cst_9 = arith.constant dense<0.000000e+00> : vector<64xf32>
    %20 = vector.multi_reduction <add>, %19, %cst_9 [1] : vector<64x64xf32> to vector<64xf32>
    %21 = vector.shape_cast %20 : vector<64xf32> to vector<64x1xf32>
    %22 = tpu.reciprocal %21 {approx = true} : vector<64x1xf32> -> vector<64x1xf32>
    %23 = vector.broadcast %22 : vector<64x1xf32> to vector<64x64xf32>
    %24 = arith.mulf %19, %23 : vector<64x64xf32>
    %25 = arith.truncf %24 : vector<64x64xf32> to vector<64x64xbf16>
    %cst_10 = arith.constant dense<0.000000e+00> : vector<64x2xf32>
    %26 = tpu.matmul %25, %11, %cst_10 {dimension_numbers = #tpu.dot_dimension_numbers<[1], [0], [0], [1], [0, 0, 1, 1], [], []>} : vector<64x64xbf16>, vector<64x2xbf16>, vector<64x2xf32> -> vector<64x2xf32>
    %c0_11 = arith.constant 0 : index
    %c0_12 = arith.constant 0 : index
    %27 = vector.load %arg2[%c0_11, %c0_12] : memref<64x2xf32, #tpu.memory_space<vmem>>, vector<64x2xf32>
    %28 = arith.addf %26, %27 : vector<64x2xf32>
    %29 = arith.truncf %28 : vector<64x2xf32> to vector<64x2xbf16>
    %c0_13 = arith.constant 0 : index
    %c0_14 = arith.constant 0 : index
    %30 = vector.load %arg6[%c0_13, %c0_14] : memref<2x2xbf16, #tpu.memory_space<vmem>>, vector<2x2xbf16>
    %cst_15 = arith.constant dense<0.000000e+00> : vector<64x2xf32>
    %31 = tpu.matmul %29, %30, %cst_15 {dimension_numbers = #tpu.dot_dimension_numbers<[1], [0], [0], [1], [0, 0, 1, 1], [], []>} : vector<64x2xbf16>, vector<2x2xbf16>, vector<64x2xf32> -> vector<64x2xf32>
    %c0_16 = arith.constant 0 : index
    %c0_17 = arith.constant 0 : index
    %32 = vector.load %arg7[%c0_16, %c0_17] : memref<1x2xf32, #tpu.memory_space<vmem>>, vector<1x2xf32>
    %33 = vector.broadcast %32 : vector<1x2xf32> to vector<64x2xf32>
    %34 = arith.addf %31, %33 : vector<64x2xf32>
    %c0_18 = arith.constant 0 : index
    %c0_19 = arith.constant 0 : index
    %35 = vector.load %arg8[%c0_18, %c0_19] : memref<64x2xf32, #tpu.memory_space<vmem>>, vector<64x2xf32>
    tpu.vector_store %arg8[%c0_18, %c0_19], %34 {strides = array<i32>} : memref<64x2xf32, #tpu.memory_space<vmem>>, vector<64x2xf32>,
    return
  }
  func.func @transform_0(%arg0: i32) -> (i32, i32) {
    %c0_i32 = arith.constant 0 : i32
    %c0_i32_0 = arith.constant 0 : i32
    return %arg0, %c0_i32 : i32, i32
  }
  func.func @transform_1(%arg0: i32) -> (i32, i32) {
    %c0_i32 = arith.constant 0 : i32
    %c0_i32_0 = arith.constant 0 : i32
    return %arg0, %c0_i32 : i32, i32
  }
  func.func @transform_2(%arg0: i32) -> (i32, i32) {
    %c0_i32 = arith.constant 0 : i32
    %c0_i32_0 = arith.constant 0 : i32
    %c0_i32_1 = arith.constant 0 : i32
    return %c0_i32, %c0_i32_0 : i32, i32
  }
  func.func @transform_3(%arg0: i32) -> (i32, i32) {
    %c0_i32 = arith.constant 0 : i32
    %c0_i32_0 = arith.constant 0 : i32
    %c0_i32_1 = arith.constant 0 : i32
    return %c0_i32, %c0_i32_0 : i32, i32
  }
  func.func @transform_4(%arg0: i32) -> (i32, i32) {
    %c0_i32 = arith.constant 0 : i32
    %c0_i32_0 = arith.constant 0 : i32
    %c0_i32_1 = arith.constant 0 : i32
    return %c0_i32, %c0_i32_0 : i32, i32
  }
  func.func @transform_5(%arg0: i32) -> (i32, i32) {
    %c0_i32 = arith.constant 0 : i32
    %c0_i32_0 = arith.constant 0 : i32
    %c0_i32_1 = arith.constant 0 : i32
    return %c0_i32, %c0_i32_0 : i32, i32
  }
  func.func @transform_6(%arg0: i32) -> (i32, i32) {
    %c0_i32 = arith.constant 0 : i32
    %c0_i32_0 = arith.constant 0 : i32
    %c0_i32_1 = arith.constant 0 : i32
    return %c0_i32, %c0_i32_0 : i32, i32
  }
  func.func @transform_7(%arg0: i32) -> (i32, i32) {
    %c0_i32 = arith.constant 0 : i32
    %c0_i32_0 = arith.constant 0 : i32
    return %arg0, %c0_i32 : i32, i32
  }
}

module attributes {stable_mosaic.version = 11 : i64} {
  func.func @_matmul_bias_kernel(%arg0: i32, %arg1: memref<256x2xbf16, #tpu.memory_space<vmem>>, %arg2: memref<2x2xbf16, #tpu.memory_space<vmem>>, %arg3: memref<1x2xf32, #tpu.memory_space<vmem>>, %arg4: memref<256x2xf32, #tpu.memory_space<vmem>>) attributes {dimension_semantics = [#tpu.dimension_semantics<parallel>], iteration_bounds = array<i64: 2>, scalar_prefetch = 0 : i64, scratch_operands = 0 : i64, tpu.core_type = #tpu.core_type<tc>, window_params = [{transform_indices = @transform_0, window_bounds = array<i64: 256, 2>}, {pipeline_mode = #tpu.pipeline_mode<synchronous>, transform_indices = @transform_1, window_bounds = array<i64: 2, 2>}, {pipeline_mode = #tpu.pipeline_mode<synchronous>, transform_indices = @transform_2, window_bounds = array<i64: 1, 2>}, {transform_indices = @transform_3, window_bounds = array<i64: 256, 2>}]} {
    %c0 = arith.constant 0 : index
    %c0_0 = arith.constant 0 : index
    %0 = vector.load %arg1[%c0, %c0_0] : memref<256x2xbf16, #tpu.memory_space<vmem>>, vector<256x2xbf16>
    %c0_1 = arith.constant 0 : index
    %c0_2 = arith.constant 0 : index
    %1 = vector.load %arg2[%c0_1, %c0_2] : memref<2x2xbf16, #tpu.memory_space<vmem>>, vector<2x2xbf16>
    %cst = arith.constant dense<0.000000e+00> : vector<256x2xf32>
    %2 = tpu.matmul %0, %1, %cst {dimension_numbers = #tpu.dot_dimension_numbers<[1], [0], [0], [1], [0, 0, 1, 1], [], []>} : vector<256x2xbf16>, vector<2x2xbf16>, vector<256x2xf32> -> vector<256x2xf32>
    %c0_3 = arith.constant 0 : index
    %c0_4 = arith.constant 0 : index
    %3 = vector.load %arg3[%c0_3, %c0_4] : memref<1x2xf32, #tpu.memory_space<vmem>>, vector<1x2xf32>
    %4 = vector.broadcast %3 : vector<1x2xf32> to vector<256x2xf32>
    %5 = arith.addf %2, %4 : vector<256x2xf32>
    %c0_5 = arith.constant 0 : index
    %c0_6 = arith.constant 0 : index
    %6 = vector.load %arg4[%c0_5, %c0_6] : memref<256x2xf32, #tpu.memory_space<vmem>>, vector<256x2xf32>
    tpu.vector_store %arg4[%c0_5, %c0_6], %5 {strides = array<i32>} : memref<256x2xf32, #tpu.memory_space<vmem>>, vector<256x2xf32>,
    return
  }
  func.func @transform_0(%arg0: i32) -> (i32, i32) {
    %c0_i32 = arith.constant 0 : i32
    %c0_i32_0 = arith.constant 0 : i32
    return %arg0, %c0_i32 : i32, i32
  }
  func.func @transform_1(%arg0: i32) -> (i32, i32) {
    %c0_i32 = arith.constant 0 : i32
    %c0_i32_0 = arith.constant 0 : i32
    %c0_i32_1 = arith.constant 0 : i32
    return %c0_i32, %c0_i32_0 : i32, i32
  }
  func.func @transform_2(%arg0: i32) -> (i32, i32) {
    %c0_i32 = arith.constant 0 : i32
    %c0_i32_0 = arith.constant 0 : i32
    %c0_i32_1 = arith.constant 0 : i32
    return %c0_i32, %c0_i32_0 : i32, i32
  }
  func.func @transform_3(%arg0: i32) -> (i32, i32) {
    %c0_i32 = arith.constant 0 : i32
    %c0_i32_0 = arith.constant 0 : i32
    return %arg0, %c0_i32 : i32, i32
  }
}

module attributes {stable_mosaic.version = 11 : i64} {
  func.func @_lepe_kernel(%arg0: i32, %arg1: memref<16x42xf32, #tpu.memory_space<vmem>>, %arg2: memref<9x32xf32, #tpu.memory_space<vmem>>, %arg3: memref<1x32xf32, #tpu.memory_space<vmem>>, %arg4: memref<16x32xf32, #tpu.memory_space<vmem>>) attributes {dimension_semantics = [#tpu.dimension_semantics<parallel>], iteration_bounds = array<i64: 2>, scalar_prefetch = 0 : i64, scratch_operands = 0 : i64, tpu.core_type = #tpu.core_type<tc>, window_params = [{transform_indices = @transform_0, window_bounds = array<i64: 16, 42>}, {pipeline_mode = #tpu.pipeline_mode<synchronous>, transform_indices = @transform_1, window_bounds = array<i64: 9, 32>}, {pipeline_mode = #tpu.pipeline_mode<synchronous>, transform_indices = @transform_2, window_bounds = array<i64: 1, 32>}, {transform_indices = @transform_3, window_bounds = array<i64: 16, 32>}]} {
    %c0 = arith.constant 0 : index
    %c0_0 = arith.constant 0 : index
    %0 = vector.load %arg1[%c0, %c0_0] : memref<16x42xf32, #tpu.memory_space<vmem>>, vector<16x42xf32>
    %c0_1 = arith.constant 0 : index
    %c0_2 = arith.constant 0 : index
    %1 = vector.load %arg2[%c0_1, %c0_2] : memref<9x32xf32, #tpu.memory_space<vmem>>, vector<9x32xf32>
    %cst = arith.constant 0.000000e+00 : f32
    %2 = vector.broadcast %cst : f32 to vector<16x32xf32>
    %3 = vector.extract_strided_slice %0 {offsets = [0, 0], sizes = [16, 32], strides = [1, 1]} : vector<16x42xf32> to vector<16x32xf32>
    %4 = vector.extract_strided_slice %1 {offsets = [0, 0], sizes = [1, 32], strides = [1, 1]} : vector<9x32xf32> to vector<1x32xf32>
    %5 = vector.broadcast %4 : vector<1x32xf32> to vector<16x32xf32>
    %6 = arith.mulf %5, %3 : vector<16x32xf32>
    %7 = arith.addf %2, %6 : vector<16x32xf32>
    %8 = vector.extract_strided_slice %0 {offsets = [0, 1], sizes = [16, 32], strides = [1, 1]} : vector<16x42xf32> to vector<16x32xf32>
    %9 = vector.extract_strided_slice %1 {offsets = [1, 0], sizes = [1, 32], strides = [1, 1]} : vector<9x32xf32> to vector<1x32xf32>
    %10 = vector.broadcast %9 : vector<1x32xf32> to vector<16x32xf32>
    %11 = arith.mulf %10, %8 : vector<16x32xf32>
    %12 = arith.addf %7, %11 : vector<16x32xf32>
    %13 = vector.extract_strided_slice %0 {offsets = [0, 2], sizes = [16, 32], strides = [1, 1]} : vector<16x42xf32> to vector<16x32xf32>
    %14 = vector.extract_strided_slice %1 {offsets = [2, 0], sizes = [1, 32], strides = [1, 1]} : vector<9x32xf32> to vector<1x32xf32>
    %15 = vector.broadcast %14 : vector<1x32xf32> to vector<16x32xf32>
    %16 = arith.mulf %15, %13 : vector<16x32xf32>
    %17 = arith.addf %12, %16 : vector<16x32xf32>
    %18 = vector.extract_strided_slice %0 {offsets = [0, 4], sizes = [16, 32], strides = [1, 1]} : vector<16x42xf32> to vector<16x32xf32>
    %19 = vector.extract_strided_slice %1 {offsets = [3, 0], sizes = [1, 32], strides = [1, 1]} : vector<9x32xf32> to vector<1x32xf32>
    %20 = vector.broadcast %19 : vector<1x32xf32> to vector<16x32xf32>
    %21 = arith.mulf %20, %18 : vector<16x32xf32>
    %22 = arith.addf %17, %21 : vector<16x32xf32>
    %23 = vector.extract_strided_slice %0 {offsets = [0, 5], sizes = [16, 32], strides = [1, 1]} : vector<16x42xf32> to vector<16x32xf32>
    %24 = vector.extract_strided_slice %1 {offsets = [4, 0], sizes = [1, 32], strides = [1, 1]} : vector<9x32xf32> to vector<1x32xf32>
    %25 = vector.broadcast %24 : vector<1x32xf32> to vector<16x32xf32>
    %26 = arith.mulf %25, %23 : vector<16x32xf32>
    %27 = arith.addf %22, %26 : vector<16x32xf32>
    %28 = vector.extract_strided_slice %0 {offsets = [0, 6], sizes = [16, 32], strides = [1, 1]} : vector<16x42xf32> to vector<16x32xf32>
    %29 = vector.extract_strided_slice %1 {offsets = [5, 0], sizes = [1, 32], strides = [1, 1]} : vector<9x32xf32> to vector<1x32xf32>
    %30 = vector.broadcast %29 : vector<1x32xf32> to vector<16x32xf32>
    %31 = arith.mulf %30, %28 : vector<16x32xf32>
    %32 = arith.addf %27, %31 : vector<16x32xf32>
    %33 = vector.extract_strided_slice %0 {offsets = [0, 8], sizes = [16, 32], strides = [1, 1]} : vector<16x42xf32> to vector<16x32xf32>
    %34 = vector.extract_strided_slice %1 {offsets = [6, 0], sizes = [1, 32], strides = [1, 1]} : vector<9x32xf32> to vector<1x32xf32>
    %35 = vector.broadcast %34 : vector<1x32xf32> to vector<16x32xf32>
    %36 = arith.mulf %35, %33 : vector<16x32xf32>
    %37 = arith.addf %32, %36 : vector<16x32xf32>
    %38 = vector.extract_strided_slice %0 {offsets = [0, 9], sizes = [16, 32], strides = [1, 1]} : vector<16x42xf32> to vector<16x32xf32>
    %39 = vector.extract_strided_slice %1 {offsets = [7, 0], sizes = [1, 32], strides = [1, 1]} : vector<9x32xf32> to vector<1x32xf32>
    %40 = vector.broadcast %39 : vector<1x32xf32> to vector<16x32xf32>
    %41 = arith.mulf %40, %38 : vector<16x32xf32>
    %42 = arith.addf %37, %41 : vector<16x32xf32>
    %43 = vector.extract_strided_slice %0 {offsets = [0, 10], sizes = [16, 32], strides = [1, 1]} : vector<16x42xf32> to vector<16x32xf32>
    %44 = vector.extract_strided_slice %1 {offsets = [8, 0], sizes = [1, 32], strides = [1, 1]} : vector<9x32xf32> to vector<1x32xf32>
    %45 = vector.broadcast %44 : vector<1x32xf32> to vector<16x32xf32>
    %46 = arith.mulf %45, %43 : vector<16x32xf32>
    %47 = arith.addf %42, %46 : vector<16x32xf32>
    %c0_3 = arith.constant 0 : index
    %c0_4 = arith.constant 0 : index
    %48 = vector.load %arg3[%c0_3, %c0_4] : memref<1x32xf32, #tpu.memory_space<vmem>>, vector<1x32xf32>
    %49 = vector.broadcast %48 : vector<1x32xf32> to vector<16x32xf32>
    %50 = arith.addf %47, %49 : vector<16x32xf32>
    %c0_5 = arith.constant 0 : index
    %c0_6 = arith.constant 0 : index
    %51 = vector.load %arg4[%c0_5, %c0_6] : memref<16x32xf32, #tpu.memory_space<vmem>>, vector<16x32xf32>
    tpu.vector_store %arg4[%c0_5, %c0_6], %50 {strides = array<i32>} : memref<16x32xf32, #tpu.memory_space<vmem>>, vector<16x32xf32>,
    return
  }
  func.func @transform_0(%arg0: i32) -> (i32, i32) {
    %c0_i32 = arith.constant 0 : i32
    %c0_i32_0 = arith.constant 0 : i32
    return %arg0, %c0_i32 : i32, i32
  }
  func.func @transform_1(%arg0: i32) -> (i32, i32) {
    %c0_i32 = arith.constant 0 : i32
    %c0_i32_0 = arith.constant 0 : i32
    %c0_i32_1 = arith.constant 0 : i32
    return %c0_i32, %c0_i32_0 : i32, i32
  }
  func.func @transform_2(%arg0: i32) -> (i32, i32) {
    %c0_i32 = arith.constant 0 : i32
    %c0_i32_0 = arith.constant 0 : i32
    %c0_i32_1 = arith.constant 0 : i32
    return %c0_i32, %c0_i32_0 : i32, i32
  }
  func.func @transform_3(%arg0: i32) -> (i32, i32) {
    %c0_i32 = arith.constant 0 : i32
    %c0_i32_0 = arith.constant 0 : i32
    return %arg0, %c0_i32 : i32, i32
  }
}

module attributes {stable_mosaic.version = 11 : i64} {
  func.func @_win_attn_kernel(%arg0: i32, %arg1: memref<128x2xbf16, #tpu.memory_space<vmem>>, %arg2: memref<128x2xf32, #tpu.memory_space<vmem>>, %arg3: memref<128x128xf32, #tpu.memory_space<vmem>>, %arg4: memref<2x6xbf16, #tpu.memory_space<vmem>>, %arg5: memref<1x6xf32, #tpu.memory_space<vmem>>, %arg6: memref<2x2xbf16, #tpu.memory_space<vmem>>, %arg7: memref<1x2xf32, #tpu.memory_space<vmem>>, %arg8: memref<128x2xf32, #tpu.memory_space<vmem>>) attributes {dimension_semantics = [#tpu.dimension_semantics<parallel>], iteration_bounds = array<i64: 4>, scalar_prefetch = 0 : i64, scratch_operands = 0 : i64, tpu.core_type = #tpu.core_type<tc>, window_params = [{transform_indices = @transform_0, window_bounds = array<i64: 128, 2>}, {transform_indices = @transform_1, window_bounds = array<i64: 128, 2>}, {pipeline_mode = #tpu.pipeline_mode<synchronous>, transform_indices = @transform_2, window_bounds = array<i64: 128, 128>}, {pipeline_mode = #tpu.pipeline_mode<synchronous>, transform_indices = @transform_3, window_bounds = array<i64: 2, 6>}, {pipeline_mode = #tpu.pipeline_mode<synchronous>, transform_indices = @transform_4, window_bounds = array<i64: 1, 6>}, {pipeline_mode = #tpu.pipeline_mode<synchronous>, transform_indices = @transform_5, window_bounds = array<i64: 2, 2>}, {pipeline_mode = #tpu.pipeline_mode<synchronous>, transform_indices = @transform_6, window_bounds = array<i64: 1, 2>}, {transform_indices = @transform_7, window_bounds = array<i64: 128, 2>}]} {
    %c0 = arith.constant 0 : index
    %c0_0 = arith.constant 0 : index
    %0 = vector.load %arg1[%c0, %c0_0] : memref<128x2xbf16, #tpu.memory_space<vmem>>, vector<128x2xbf16>
    %c0_1 = arith.constant 0 : index
    %c0_2 = arith.constant 0 : index
    %1 = vector.load %arg4[%c0_1, %c0_2] : memref<2x6xbf16, #tpu.memory_space<vmem>>, vector<2x6xbf16>
    %cst = arith.constant dense<0.000000e+00> : vector<128x6xf32>
    %2 = tpu.matmul %0, %1, %cst {dimension_numbers = #tpu.dot_dimension_numbers<[1], [0], [0], [1], [0, 0, 1, 1], [], []>} : vector<128x2xbf16>, vector<2x6xbf16>, vector<128x6xf32> -> vector<128x6xf32>
    %c0_3 = arith.constant 0 : index
    %c0_4 = arith.constant 0 : index
    %3 = vector.load %arg5[%c0_3, %c0_4] : memref<1x6xf32, #tpu.memory_space<vmem>>, vector<1x6xf32>
    %4 = vector.broadcast %3 : vector<1x6xf32> to vector<128x6xf32>
    %5 = arith.addf %2, %4 : vector<128x6xf32>
    %6 = vector.extract_strided_slice %5 {offsets = [0, 0], sizes = [128, 2], strides = [1, 1]} : vector<128x6xf32> to vector<128x2xf32>
    %7 = arith.truncf %6 : vector<128x2xf32> to vector<128x2xbf16>
    %8 = vector.extract_strided_slice %5 {offsets = [0, 2], sizes = [128, 2], strides = [1, 1]} : vector<128x6xf32> to vector<128x2xf32>
    %9 = arith.truncf %8 : vector<128x2xf32> to vector<128x2xbf16>
    %10 = vector.extract_strided_slice %5 {offsets = [0, 4], sizes = [128, 2], strides = [1, 1]} : vector<128x6xf32> to vector<128x2xf32>
    %11 = arith.truncf %10 : vector<128x2xf32> to vector<128x2xbf16>
    %cst_5 = arith.constant dense<0.000000e+00> : vector<128x128xf32>
    %12 = tpu.matmul %7, %9, %cst_5 {dimension_numbers = #tpu.dot_dimension_numbers<[1], [1], [0], [0], [0, 0, 1, 0], [], []>} : vector<128x2xbf16>, vector<128x2xbf16>, vector<128x128xf32> -> vector<128x128xf32>
    %c0_6 = arith.constant 0 : index
    %c0_7 = arith.constant 0 : index
    %13 = vector.load %arg3[%c0_6, %c0_7] : memref<128x128xf32, #tpu.memory_space<vmem>>, vector<128x128xf32>
    %14 = arith.addf %12, %13 : vector<128x128xf32>
    %cst_8 = arith.constant dense<0xFF800000> : vector<128xf32>
    %15 = vector.multi_reduction <maximumf>, %14, %cst_8 [1] : vector<128x128xf32> to vector<128xf32>
    %16 = vector.shape_cast %15 : vector<128xf32> to vector<128x1xf32>
    %17 = vector.broadcast %16 : vector<128x1xf32> to vector<128x128xf32>
    %18 = arith.subf %14, %17 : vector<128x128xf32>
    %19 = math.exp %18 : vector<128x128xf32>
    %cst_9 = arith.constant dense<0.000000e+00> : vector<128xf32>
    %20 = vector.multi_reduction <add>, %19, %cst_9 [1] : vector<128x128xf32> to vector<128xf32>
    %21 = vector.shape_cast %20 : vector<128xf32> to vector<128x1xf32>
    %22 = tpu.reciprocal %21 {approx = true} : vector<128x1xf32> -> vector<128x1xf32>
    %23 = vector.broadcast %22 : vector<128x1xf32> to vector<128x128xf32>
    %24 = arith.mulf %19, %23 : vector<128x128xf32>
    %25 = arith.truncf %24 : vector<128x128xf32> to vector<128x128xbf16>
    %cst_10 = arith.constant dense<0.000000e+00> : vector<128x2xf32>
    %26 = tpu.matmul %25, %11, %cst_10 {dimension_numbers = #tpu.dot_dimension_numbers<[1], [0], [0], [1], [0, 0, 1, 1], [], []>} : vector<128x128xbf16>, vector<128x2xbf16>, vector<128x2xf32> -> vector<128x2xf32>
    %c0_11 = arith.constant 0 : index
    %c0_12 = arith.constant 0 : index
    %27 = vector.load %arg2[%c0_11, %c0_12] : memref<128x2xf32, #tpu.memory_space<vmem>>, vector<128x2xf32>
    %28 = arith.addf %26, %27 : vector<128x2xf32>
    %29 = arith.truncf %28 : vector<128x2xf32> to vector<128x2xbf16>
    %c0_13 = arith.constant 0 : index
    %c0_14 = arith.constant 0 : index
    %30 = vector.load %arg6[%c0_13, %c0_14] : memref<2x2xbf16, #tpu.memory_space<vmem>>, vector<2x2xbf16>
    %cst_15 = arith.constant dense<0.000000e+00> : vector<128x2xf32>
    %31 = tpu.matmul %29, %30, %cst_15 {dimension_numbers = #tpu.dot_dimension_numbers<[1], [0], [0], [1], [0, 0, 1, 1], [], []>} : vector<128x2xbf16>, vector<2x2xbf16>, vector<128x2xf32> -> vector<128x2xf32>
    %c0_16 = arith.constant 0 : index
    %c0_17 = arith.constant 0 : index
    %32 = vector.load %arg7[%c0_16, %c0_17] : memref<1x2xf32, #tpu.memory_space<vmem>>, vector<1x2xf32>
    %33 = vector.broadcast %32 : vector<1x2xf32> to vector<128x2xf32>
    %34 = arith.addf %31, %33 : vector<128x2xf32>
    %c0_18 = arith.constant 0 : index
    %c0_19 = arith.constant 0 : index
    %35 = vector.load %arg8[%c0_18, %c0_19] : memref<128x2xf32, #tpu.memory_space<vmem>>, vector<128x2xf32>
    tpu.vector_store %arg8[%c0_18, %c0_19], %34 {strides = array<i32>} : memref<128x2xf32, #tpu.memory_space<vmem>>, vector<128x2xf32>,
    return
  }
  func.func @transform_0(%arg0: i32) -> (i32, i32) {
    %c0_i32 = arith.constant 0 : i32
    %c0_i32_0 = arith.constant 0 : i32
    return %arg0, %c0_i32 : i32, i32
  }
  func.func @transform_1(%arg0: i32) -> (i32, i32) {
    %c0_i32 = arith.constant 0 : i32
    %c0_i32_0 = arith.constant 0 : i32
    return %arg0, %c0_i32 : i32, i32
  }
  func.func @transform_2(%arg0: i32) -> (i32, i32) {
    %c0_i32 = arith.constant 0 : i32
    %c0_i32_0 = arith.constant 0 : i32
    %c0_i32_1 = arith.constant 0 : i32
    return %c0_i32, %c0_i32_0 : i32, i32
  }
  func.func @transform_3(%arg0: i32) -> (i32, i32) {
    %c0_i32 = arith.constant 0 : i32
    %c0_i32_0 = arith.constant 0 : i32
    %c0_i32_1 = arith.constant 0 : i32
    return %c0_i32, %c0_i32_0 : i32, i32
  }
  func.func @transform_4(%arg0: i32) -> (i32, i32) {
    %c0_i32 = arith.constant 0 : i32
    %c0_i32_0 = arith.constant 0 : i32
    %c0_i32_1 = arith.constant 0 : i32
    return %c0_i32, %c0_i32_0 : i32, i32
  }
  func.func @transform_5(%arg0: i32) -> (i32, i32) {
    %c0_i32 = arith.constant 0 : i32
    %c0_i32_0 = arith.constant 0 : i32
    %c0_i32_1 = arith.constant 0 : i32
    return %c0_i32, %c0_i32_0 : i32, i32
  }
  func.func @transform_6(%arg0: i32) -> (i32, i32) {
    %c0_i32 = arith.constant 0 : i32
    %c0_i32_0 = arith.constant 0 : i32
    %c0_i32_1 = arith.constant 0 : i32
    return %c0_i32, %c0_i32_0 : i32, i32
  }
  func.func @transform_7(%arg0: i32) -> (i32, i32) {
    %c0_i32 = arith.constant 0 : i32
    %c0_i32_0 = arith.constant 0 : i32
    return %arg0, %c0_i32 : i32, i32
  }
}

module attributes {stable_mosaic.version = 11 : i64} {
  func.func @_aggr_kernel(%arg0: i32, %arg1: i32, %arg2: memref<1x4x256xf32, #tpu.memory_space<vmem>>, %arg3: memref<4x4xbf16, #tpu.memory_space<vmem>>, %arg4: memref<4x1xf32, #tpu.memory_space<vmem>>, %arg5: memref<1x4x256xf32, #tpu.memory_space<vmem>>) attributes {dimension_semantics = [#tpu.dimension_semantics<parallel>, #tpu.dimension_semantics<parallel>], iteration_bounds = array<i64: 2, 1>, scalar_prefetch = 0 : i64, scratch_operands = 0 : i64, tpu.core_type = #tpu.core_type<tc>, window_params = [{transform_indices = @transform_0, window_bounds = array<i64: 1, 4, 256>}, {pipeline_mode = #tpu.pipeline_mode<synchronous>, transform_indices = @transform_1, window_bounds = array<i64: 4, 4>}, {pipeline_mode = #tpu.pipeline_mode<synchronous>, transform_indices = @transform_2, window_bounds = array<i64: 4, 1>}, {transform_indices = @transform_3, window_bounds = array<i64: 1, 4, 256>}]} {
    %c0 = arith.constant 0 : index
    %c0_0 = arith.constant 0 : index
    %c0_1 = arith.constant 0 : index
    %0 = vector.load %arg2[%c0, %c0_0, %c0_1] : memref<1x4x256xf32, #tpu.memory_space<vmem>>, vector<1x4x256xf32>
    %1 = vector.shape_cast %0 : vector<1x4x256xf32> to vector<4x256xf32>
    %2 = arith.truncf %1 : vector<4x256xf32> to vector<4x256xbf16>
    %c0_2 = arith.constant 0 : index
    %c0_3 = arith.constant 0 : index
    %3 = vector.load %arg3[%c0_2, %c0_3] : memref<4x4xbf16, #tpu.memory_space<vmem>>, vector<4x4xbf16>
    %cst = arith.constant dense<0.000000e+00> : vector<4x256xf32>
    %4 = tpu.matmul %3, %2, %cst {dimension_numbers = #tpu.dot_dimension_numbers<[1], [0], [0], [1], [0, 0, 1, 1], [], []>} : vector<4x4xbf16>, vector<4x256xbf16>, vector<4x256xf32> -> vector<4x256xf32>
    %c0_4 = arith.constant 0 : index
    %c0_5 = arith.constant 0 : index
    %5 = vector.load %arg4[%c0_4, %c0_5] : memref<4x1xf32, #tpu.memory_space<vmem>>, vector<4x1xf32>
    %6 = vector.broadcast %5 : vector<4x1xf32> to vector<4x256xf32>
    %7 = arith.addf %4, %6 : vector<4x256xf32>
    %c0_6 = arith.constant 0 : index
    %c0_7 = arith.constant 0 : index
    %c0_8 = arith.constant 0 : index
    %8 = vector.load %arg5[%c0_6, %c0_7, %c0_8] : memref<1x4x256xf32, #tpu.memory_space<vmem>>, vector<1x4x256xf32>
    %9 = vector.shape_cast %8 : vector<1x4x256xf32> to vector<4x256xf32>
    %10 = vector.shape_cast %7 : vector<4x256xf32> to vector<1x4x256xf32>
    tpu.vector_store %arg5[%c0_6, %c0_7, %c0_8], %10 {strides = array<i32>} : memref<1x4x256xf32, #tpu.memory_space<vmem>>, vector<1x4x256xf32>,
    return
  }
  func.func @transform_0(%arg0: i32, %arg1: i32) -> (i32, i32, i32) {
    %c0_i32 = arith.constant 0 : i32
    %c0_i32_0 = arith.constant 0 : i32
    return %arg0, %c0_i32, %arg1 : i32, i32, i32
  }
  func.func @transform_1(%arg0: i32, %arg1: i32) -> (i32, i32) {
    %c0_i32 = arith.constant 0 : i32
    %c0_i32_0 = arith.constant 0 : i32
    %c0_i32_1 = arith.constant 0 : i32
    return %c0_i32, %c0_i32_0 : i32, i32
  }
  func.func @transform_2(%arg0: i32, %arg1: i32) -> (i32, i32) {
    %c0_i32 = arith.constant 0 : i32
    %c0_i32_0 = arith.constant 0 : i32
    %c0_i32_1 = arith.constant 0 : i32
    return %c0_i32, %c0_i32_0 : i32, i32
  }
  func.func @transform_3(%arg0: i32, %arg1: i32) -> (i32, i32, i32) {
    %c0_i32 = arith.constant 0 : i32
    %c0_i32_0 = arith.constant 0 : i32
    return %arg0, %c0_i32, %arg1 : i32, i32, i32
  }
}

</mosaic_0001>

<llo_original>
// kernel: lhsa_block.8
$region0: #{lhsa_block.8}
  #allocation0 [shape = 'u32[]', space=smem, size = 0x4, offset = 0x4, fixed_abs, tag = 'smem constant byte address 0x4 - core index']
  #allocation1 [shape = 'u32[144,128]{1,0:T(1,128)}', space=vmem, size = 0x12000, scoped, tag = 'internal scratch']
  %s0 = inlined_call_operand.vmem [shape: f32[8,42], index: 0, kind: input, shape index: {}]
  %s1 = inlined_call_operand.vmem [shape: f32[9,32], index: 1, kind: input, shape index: {}]
  %s2 = inlined_call_operand.vmem [shape: f32[1,32], index: 2, kind: input, shape index: {}]
  %s3 = inlined_call_operand.vmem [shape: f32[8,32], index: 3, kind: output, shape index: {}]
  %s4 = sld [smem:[#allocation0]]
  $region22: #{lhsa_block.8} parent=0
    _
  %s6 = ssub.s32 1, %s4
  %s7 = scalar_select 0, %s6, %s4
  // Predicated region
  $region2: #{lhsa_block.8} parent=0 // pred_check
    _
  $region3: #{lhsa_block.8} parent=0 // pred_check_branch
    %9 = sbr.rel (0) target = $region5
  $region4: #{lhsa_block.8} parent=0 // pred_region
    _
  $region5: #{lhsa_block.8} parent=0 // pred_fallthru
    _
  // Predicated region
  $region6: #{lhsa_block.8} parent=0 // pred_check
    _
  $region7: #{lhsa_block.8} parent=0 // pred_check_branch
    %11 = sbr.rel (0) target = $region9
  $region8: #{lhsa_block.8} parent=0 // pred_region
    _
  $region9: #{lhsa_block.8} parent=0 // pred_fallthru
    _
  // Predicated region
  $region10: #{lhsa_block.8} parent=0 // pred_check
    _
  $region11: #{lhsa_block.8} parent=0 // pred_check_branch
    %13 = sbr.rel (0) target = $region13
  $region12: #{lhsa_block.8} parent=0 // pred_region
    _
  $region13: #{lhsa_block.8} parent=0 // pred_fallthru
    _
  %v14 = vld [vmem:[%s0] sm:$0xff]
  %v15 = vld [vmem:[%s1] sm:$0xff]
  %v16 = vld [vmem:[%s1 + $0x8] sm:$0x1]
  %v17 = vlaneseq
  %v18 = vshrl.u32 %v17, 7
  %v19 = vsub.s32 0, %v18
  %v20 = vrot.slane %v15, %v19
  %v21 = vmul.f32 %v20, %v14
  %v22 = vadd.f32 %v21, 0.0
  %v23 = vlaneseq
  %v24 = vshrl.u32 %v23, 7
  %v25 = vsub.s32 1, %v24
  %v26 = vrot.slane %v15, %v25
  %28 = vrot.lane.b32.xlu0 %v14, 127
  %v29 = vpop.permute.xlu0 %28
  %v31 = vmul.f32 %v26, %v29
  %v32 = vadd.f32 %v22, %v31
  %v33 = vlaneseq
  %v34 = vshrl.u32 %v33, 7
  %v35 = vsub.s32 2, %v34
  %v36 = vrot.slane %v15, %v35
  %37 = vrot.lane.b32.xlu0 %v14, 126
  %v38 = vpop.permute.xlu0 %37
  %v40 = vmul.f32 %v36, %v38
  %v41 = vadd.f32 %v32, %v40
  %v42 = vlaneseq
  %v43 = vshrl.u32 %v42, 7
  %v44 = vsub.s32 3, %v43
  %v45 = vrot.slane %v15, %v44
  %46 = vrot.lane.b32.xlu0 %v14, 124
  %v47 = vpop.permute.xlu0 %46
  %v49 = vmul.f32 %v45, %v47
  %v50 = vadd.f32 %v41, %v49
  %v51 = vlaneseq
  %v52 = vshrl.u32 %v51, 7
  %v53 = vsub.s32 4, %v52
  %v54 = vrot.slane %v15, %v53
  %55 = vrot.lane.b32.xlu0 %v14, 123
  %v56 = vpop.permute.xlu0 %55
  %v58 = vmul.f32 %v54, %v56
  %v59 = vadd.f32 %v50, %v58
  %v60 = vlaneseq
  %v61 = vshrl.u32 %v60, 7
  %v62 = vsub.s32 5, %v61
  %v63 = vrot.slane %v15, %v62
  %64 = vrot.lane.b32.xlu0 %v14, 122
  %v65 = vpop.permute.xlu0 %64
  %v67 = vmul.f32 %v63, %v65
  %v68 = vadd.f32 %v59, %v67
  %v69 = vlaneseq
  %v70 = vshrl.u32 %v69, 7
  %v71 = vsub.s32 6, %v70
  %v72 = vrot.slane %v15, %v71
  %73 = vrot.lane.b32.xlu0 %v14, 120
  %v74 = vpop.permute.xlu0 %73
  %v76 = vmul.f32 %v72, %v74
  %v77 = vadd.f32 %v68, %v76
  %v78 = vlaneseq
  %v79 = vshrl.u32 %v78, 7
  %v80 = vsub.s32 7, %v79
  %v81 = vrot.slane %v15, %v80
  %82 = vrot.lane.b32.xlu0 %v14, 119
  %v83 = vpop.permute.xlu0 %82
  %v85 = vmul.f32 %v81, %v83
  %v86 = vadd.f32 %v77, %v85
  %v87 = vlaneseq
  %v88 = vshrl.u32 %v87, 7
  %v89 = vsub.s32 0, %v88
  %v90 = vrot.slane %v16, %v89
  %91 = vrot.lane.b32.xlu0 %v14, 118
  %v92 = vpop.permute.xlu0 %91
  %v94 = vmul.f32 %v90, %v92
  %v95 = vadd.f32 %v86, %v94
  %v96 = vld [vmem:[%s2] sm:$0x1]
  %v98 = vlaneseq
  %v99 = vshrl.u32 %v98, 7
  %v100 = vsub.s32 0, %v99
  %v101 = vrot.slane %v96, %v100
  %v103 = vadd.f32 %v95, %v101
  %vm104 = vcmask 261120
  %105 = vst.msk [vmem:[%s3] sm:$0xff] %vm104, %v103
  // Predicated region
  $region14: #{lhsa_block.8} parent=0 // pred_check
    _
  $region15: #{lhsa_block.8} parent=0 // pred_check_branch
    %107 = sbr.rel (0) target = $region17
  $region16: #{lhsa_block.8} parent=0 // pred_region
    _
  $region17: #{lhsa_block.8} parent=0 // pred_fallthru
    _
  // Predicated region
  $region18: #{lhsa_block.8} parent=0 // pred_check
    _
  $region19: #{lhsa_block.8} parent=0 // pred_check_branch
    %109 = sbr.rel (0) target = $region21
  $region20: #{lhsa_block.8} parent=0 // pred_region
    _
  $region21: #{lhsa_block.8} parent=0 // pred_fallthru
    _

// kernel: lhsa_block.7
$region0: #{lhsa_block.7}
  #allocation0 [shape = 'u32[]', space=smem, size = 0x4, offset = 0x4, fixed_abs, tag = 'smem constant byte address 0x4 - core index']
  #allocation1 [shape = 'u32[144,128]{1,0:T(1,128)}', space=vmem, size = 0x12000, scoped, tag = 'internal scratch']
  %s0 = inlined_call_operand.vmem [shape: bf16[128,2], index: 0, kind: input, shape index: {}]
  %s1 = inlined_call_operand.vmem [shape: bf16[2,2], index: 1, kind: input, shape index: {}]
  %s2 = inlined_call_operand.vmem [shape: f32[1,2], index: 2, kind: input, shape index: {}]
  %s3 = inlined_call_operand.vmem [shape: f32[128,2], index: 3, kind: output, shape index: {}]
  %s4 = sld [smem:[#allocation0]]
  $region45: #{lhsa_block.7} parent=0
    _
  %s6 = ssub.s32 1, %s4
  %s7 = scalar_select 0, %s6, %s4
  loop: start=0, step=1, limit=4
  $region2: #{lhsa_block.7} parent=0 // loop_pre_header
    _
  $region3: #{lhsa_block.7} parent=0 // loop_header
    %s9 = sphi 0, %s13
    %p10 = scmp.ge.s32.totalorder %s9, 4
    %s19 = sphi 0, %s21
    %s22 = sphi 0, %s19
    %s23 = sphi 0, %s22
    %s39 = sphi 0, %s23
    %s43 = sphi 0, %s43
    %s45 = sphi 0, %s43
    %s46 = sphi 0, %s45
    %s60 = sphi 0, %s46
    %s64 = sphi 0, %s64
    %s66 = sphi 0, %s64
    %s67 = sphi 0, %s66
    %s81 = sphi 0, %s67
    %s87 = sphi 0, %s89
    %s90 = sphi 0, %s87
    %s91 = sphi 0, %s90
    %s107 = sphi 0, %s91
  $region4: #{lhsa_block.7} parent=0 // loop_header_branch
    %12 = sbr.rel (%p10) target = $region8
  $region5: #{lhsa_block.7} parent=0 // loop_body
    %s14 = ssub.s32 %s9, 1
    %s15 = ssub.s32 %s9, 2
    %s16 = sadd.s32 %s9, 1
    %s17 = ssub.s32 %s9, %s16
    %p18 = scmp.eq.s32.totalorder %s17, 0
    %s20 = sadd.s32 %s19, 1
    %s21 = scalar_select %p18, %s19, %s20
    %p24 = pneg %p18
    %p25 = scmp.eq.s32.totalorder %s9, 1
    %p26 = por %p24, %p25
    %p27 = scmp.ne.s32.totalorder %s19, %s22
    %p28 = scmp.eq.s32.totalorder %s9, 0
    %p29 = por %p27, %p28
    %p30 = scmp.ne.s32.totalorder %s19, %s22
    %p31 = scmp.eq.s32.totalorder %s14, 1
    %p32 = por %p30, %p31
    %p33 = scmp.ne.s32.totalorder %s22, %s23
    %p34 = scmp.eq.s32.totalorder %s14, 0
    %p35 = por %p33, %p34
    %p36 = scmp.ne.s32.totalorder %s22, %s23
    %p37 = scmp.eq.s32.totalorder %s15, 1
    %p38 = por %p36, %p37
    %p40 = scmp.ne.s32.totalorder %s23, %s39
    %p41 = scmp.eq.s32.totalorder %s15, 0
    %p42 = por %p40, %p41
    %s44 = sadd.s32 %s43, 1
    %p47 = scmp.eq.s32.totalorder %s9, 1
    %p48 = scmp.ne.s32.totalorder %s43, %s45
    %p49 = scmp.eq.s32.totalorder %s9, 0
    %p50 = por %p48, %p49
    %p51 = scmp.ne.s32.totalorder %s43, %s45
    %p52 = scmp.eq.s32.totalorder %s14, 1
    %p53 = por %p51, %p52
    %p54 = scmp.ne.s32.totalorder %s45, %s46
    %p55 = scmp.eq.s32.totalorder %s14, 0
    %p56 = por %p54, %p55
    %p57 = scmp.ne.s32.totalorder %s45, %s46
    %p58 = scmp.eq.s32.totalorder %s15, 1
    %p59 = por %p57, %p58
    %p61 = scmp.ne.s32.totalorder %s46, %s60
    %p62 = scmp.eq.s32.totalorder %s15, 0
    %p63 = por %p61, %p62
    %s65 = sadd.s32 %s64, 1
    %p68 = scmp.eq.s32.totalorder %s9, 1
    %p69 = scmp.ne.s32.totalorder %s64, %s66
    %p70 = scmp.eq.s32.totalorder %s9, 0
    %p71 = por %p69, %p70
    %p72 = scmp.ne.s32.totalorder %s64, %s66
    %p73 = scmp.eq.s32.totalorder %s14, 1
    %p74 = por %p72, %p73
    %p75 = scmp.ne.s32.totalorder %s66, %s67
    %p76 = scmp.eq.s32.totalorder %s14, 0
    %p77 = por %p75, %p76
    %p78 = scmp.ne.s32.totalorder %s66, %s67
    %p79 = scmp.eq.s32.totalorder %s15, 1
    %p80 = por %p78, %p79
    %p82 = scmp.ne.s32.totalorder %s67, %s81
    %p83 = scmp.eq.s32.totalorder %s15, 0
    %p84 = por %p82, %p83
    %s85 = ssub.s32 %s9, %s16
    %p86 = scmp.eq.s32.totalorder %s85, 0
    %s88 = sadd.s32 %s87, 1
    %s89 = scalar_select %p86, %s87, %s88
    %p92 = pneg %p86
    %p93 = scmp.eq.s32.totalorder %s9, 1
    %p94 = por %p92, %p93
    %p95 = scmp.ne.s32.totalorder %s87, %s90
    %p96 = scmp.eq.s32.totalorder %s9, 0
    %p97 = por %p95, %p96
    %p98 = scmp.ne.s32.totalorder %s87, %s90
    %p99 = scmp.eq.s32.totalorder %s14, 1
    %p100 = por %p98, %p99
    %p101 = scmp.ne.s32.totalorder %s90, %s91
    %p102 = scmp.eq.s32.totalorder %s14, 0
    %p103 = por %p101, %p102
    %p104 = scmp.ne.s32.totalorder %s90, %s91
    %p105 = scmp.eq.s32.totalorder %s15, 1
    %p106 = por %p104, %p105
    %p108 = scmp.ne.s32.totalorder %s91, %s107
    %p109 = scmp.eq.s32.totalorder %s15, 0
    %p110 = por %p108, %p109
    %p111 = scmp.le.s32.totalorder 1, %s9
    %p112 = scmp.lt.s32.totalorder %s9, 3
    %p113 = pnand %p111, %p112
    %p114 = pneg %p113
    // Predicated region
    $region9: #{lhsa_block.7} parent=5 // pred_check
      _
    $region10: #{lhsa_block.7} parent=5 // pred_check_branch
      %116 = sbr.rel (%p113) target = $region12
    $region11: #{lhsa_block.7} parent=5 // pred_region
      %s117 = ssub.s32 %s9, 1
      // Predicated region
      $region13: #{lhsa_block.7} parent=11 // pred_check
        %p118 = pneg %p56
      $region14: #{lhsa_block.7} parent=11 // pred_check_branch
        %120 = sbr.rel (%p118) target = $region16
      $region15: #{lhsa_block.7} parent=11 // pred_region
        _
      $region16: #{lhsa_block.7} parent=11 // pred_fallthru
        _
      // Predicated region
      $region17: #{lhsa_block.7} parent=11 // pred_check
        %p121 = pneg %p77
      $region18: #{lhsa_block.7} parent=11 // pred_check_branch
        %123 = sbr.rel (%p121) target = $region20
      $region19: #{lhsa_block.7} parent=11 // pred_region
        _
      $region20: #{lhsa_block.7} parent=11 // pred_fallthru
        _
    $region12: #{lhsa_block.7} parent=5 // pred_fallthru
      _
    %p124 = scmp.lt.s32.totalorder %s9, 2
    // Predicated region
    $region21: #{lhsa_block.7} parent=5 // pred_check
      %p125 = pneg %p124
    $region22: #{lhsa_block.7} parent=5 // pred_check_branch
      %127 = sbr.rel (%p125) target = $region24
    $region23: #{lhsa_block.7} parent=5 // pred_region
      // Predicated region
      $region25: #{lhsa_block.7} parent=23 // pred_check
        %p128 = pneg %p29
      $region26: #{lhsa_block.7} parent=23 // pred_check_branch
        %130 = sbr.rel (%p128) target = $region28
      $region27: #{lhsa_block.7} parent=23 // pred_region
        %s131 = smul.u32 8, %s9
        %p132 = scmp.lt.s32.totalorder %s131, 15
        %s133 = scalar_select %p132, %s131, 15
        %s134 = smul.addr %s133, 4
        %s135 = scalar_lea.vmem %s0, %s134
        %s136 = smul.u32 8, %s9
      $region28: #{lhsa_block.7} parent=23 // pred_fallthru
        _
    $region24: #{lhsa_block.7} parent=5 // pred_fallthru
      _
    %p137 = scmp.le.s32.totalorder 1, %s9
    %p138 = scmp.lt.s32.totalorder %s9, 3
    %p139 = pnand %p137, %p138
    %p140 = pneg %p139
    // Predicated region
    $region29: #{lhsa_block.7} parent=5 // pred_check
      _
    $region30: #{lhsa_block.7} parent=5 // pred_check_branch
      %142 = sbr.rel (%p139) target = $region32
    $region31: #{lhsa_block.7} parent=5 // pred_region
      %s143 = ssub.s32 %s9, 1
      %s144 = smul.u32 8, %s14
      %p145 = scmp.lt.s32.totalorder %s144, 15
      %s146 = scalar_select %p145, %s144, 15
      %s147 = smul.addr %s146, 4
      %s148 = scalar_lea.vmem %s0, %s147
      %p149 = pneg %p35
      %p150 = pneg %p32
      %p151 = pneg %p56
      %p152 = pneg %p53
      %p153 = pneg %p77
      %p154 = pneg %p74
      %p155 = pneg %p103
      %p156 = pneg %p100
      %s157 = smul.u32 8, %s14
      %p158 = scmp.lt.s32.totalorder %s157, 15
      %s159 = scalar_select %p158, %s157, 15
      %s160 = smul.addr %s159, 8
      %s161 = scalar_lea.vmem %s3, %s160
      %s162 = smul.u32 8, %s14
      %p163 = scmp.lt.s32.totalorder %s162, 15
      %s164 = scalar_select %p163, %s162, 15
      %s165 = smul.addr %s164, 4
      %s166 = scalar_lea.vmem %s0, %s165
      %s167 = smul.u32 8, %s14
      %s168 = smul.u32 8, %s14
      %p169 = scmp.lt.s32.totalorder %s168, 15
      %s170 = scalar_select %p169, %s168, 15
      %s171 = smul.addr %s170, 8
      %s172 = scalar_lea.vmem %s3, %s171
      %s173 = smul.u32 8, %s14
      %v175 = vld [vmem:[%s166] sm:$0xf]
      %v176 = vld [vmem:[%s166 + $0x4] sm:$0xf]
      %v177 = vld [vmem:[%s166 + $0x8] sm:$0xf]
      %v178 = vld [vmem:[%s166 + $0xc] sm:$0xf]
      %v179 = vld [vmem:[%s166 + $0x10] sm:$0xf]
      %v180 = vld [vmem:[%s166 + $0x14] sm:$0xf]
      %v181 = vld [vmem:[%s166 + $0x18] sm:$0xf]
      %v182 = vld [vmem:[%s166 + $0x1c] sm:$0xf]
      %v183 = vld [vmem:[%s1] sm:$0x1]
      %v184 = vld [vmem:[%s2] sm:$0x1]
      %v186 = vlaneseq
      %v187 = vshrl.u32 %v186, 7
      %v188 = vsub.s32 0, %v187
      %v189 = vrot.slane %v184, %v188
      %v199 = vunpack.c.l.b16 %v175
      %v200 = vunpack.c.l.b16 %v176
      %v201 = vunpack.c.l.b16 %v177
      %v202 = vunpack.c.l.b16 %v178
      %v203 = vunpack.c.l.b16 %v179
      %v204 = vunpack.c.l.b16 %v180
      %v205 = vunpack.c.l.b16 %v181
      %v206 = vunpack.c.l.b16 %v182
      %v207 = vpack.c.b16 %v200, %v199
      %v208 = vpack.c.b16 %v202, %v201
      %v209 = vpack.c.b16 %v204, %v203
      %v210 = vpack.c.b16 %v206, %v205
      %vm211 = vcmask 15360
      %v213 = vsel %vm211, %v207, 0
      %v216 = vsel %vm211, %v208, 0
      %v219 = vsel %vm211, %v209, 0
      %v222 = vsel %vm211, %v210, 0
      %vm224 = vcmask 1040384
      %v226 = vsel %vm224, %v183, 0
      %228 = vmatprep.subr.bf16.mxu0 0
      %229 = vmatpush1.bf16.msra.mxu0 %v226
      %230 = vmatprep.subr.bf16.mxu0 0
      %231 = vmatpush1.bf16.msra.mxu0 0
      %232 = vmatprep.subr.bf16.mxu0 0
      %233 = vmatpush1.bf16.msra.mxu0 0
      %234 = vmatprep.subr.bf16.mxu0 0
      %235 = vmatpush1.bf16.msra.mxu0 0
      %236 = vmatprep.subr.bf16.mxu0 0
      %237 = vmatpush1.bf16.msra.mxu0 0
      %238 = vmatprep.subr.bf16.mxu0 0
      %239 = vmatpush1.bf16.msra.mxu0 0
      %240 = vmatprep.subr.bf16.mxu0 0
      %241 = vmatpush1.bf16.msra.mxu0 0
      %242 = vmatprep.subr.bf16.mxu0 0
      %243 = vmatpush1.bf16.msra.mxu0 0
      %244 = vmatprep.subr.bf16.mxu0 0
      %245 = vmatpush1.bf16.msra.mxu0 0
      %246 = vmatprep.subr.bf16.mxu0 0
      %247 = vmatpush1.bf16.msra.mxu0 0
      %248 = vmatprep.subr.bf16.mxu0 0
      %249 = vmatpush1.bf16.msra.mxu0 0
      %250 = vmatprep.subr.bf16.mxu0 0
      %251 = vmatpush1.bf16.msra.mxu0 0
      %252 = vmatprep.subr.bf16.mxu0 0
      %253 = vmatpush1.bf16.msra.mxu0 0
      %254 = vmatprep.subr.bf16.mxu0 0
      %255 = vmatpush1.bf16.msra.mxu0 0
      %256 = vmatprep.subr.bf16.mxu0 0
      %257 = vmatpush1.bf16.msra.mxu0 0
      %258 = vmatprep.subr.bf16.mxu0 0
      %259 = vmatpush1.bf16.msra.mxu0 0
      %260 = vmatprep.mubr.bf16.mxu0 0
      %261 = vmatmul.mubr.bf16.gmra.mrb[0].mxu0 %v213
      %v262 = vpop.f32.mrb[0].mxu0
      %v263 = vadd.f32 %v189, %v262
      %v264 = vpop.f32.mrb[0].mxu0
      %v265 = vpop.f32.mrb[0].mxu0
      %v266 = vadd.f32 %v189, %v265
      %v267 = vpop.f32.mrb[0].mxu0
      %268 = vmatprep.mubr.bf16.mxu0 0
      %269 = vmatmul.mubr.bf16.gmra.mrb[0].mxu0 %v216
      %v270 = vpop.f32.mrb[0].mxu0
      %v271 = vadd.f32 %v189, %v270
      %v272 = vpop.f32.mrb[0].mxu0
      %v273 = vpop.f32.mrb[0].mxu0
      %v274 = vadd.f32 %v189, %v273
      %v275 = vpop.f32.mrb[0].mxu0
      %276 = vmatprep.mubr.bf16.mxu0 0
      %277 = vmatmul.mubr.bf16.gmra.mrb[0].mxu0 %v219
      %v278 = vpop.f32.mrb[0].mxu0
      %v279 = vadd.f32 %v189, %v278
      %v280 = vpop.f32.mrb[0].mxu0
      %v281 = vpop.f32.mrb[0].mxu0
      %v282 = vadd.f32 %v189, %v281
      %v283 = vpop.f32.mrb[0].mxu0
      %284 = vmatprep.mubr.bf16.mxu0 0
      %285 = vmatmul.mubr.bf16.gmra.mrb[0].mxu0 %v222
      %v286 = vpop.f32.mrb[0].mxu0
      %v287 = vadd.f32 %v189, %v286
      %v288 = vpop.f32.mrb[0].mxu0
      %v289 = vpop.f32.mrb[0].mxu0
      %v290 = vadd.f32 %v189, %v289
      %v291 = vpop.f32.mrb[0].mxu0
      %292 = vdwg.mxu0
      %293 = vst.msk [vmem:[%s172] sm:$0xff] %vm211, %v263
      %294 = vst.msk [vmem:[%s172 + $0x8] sm:$0xff] %vm211, %v266
      %295 = vst.msk [vmem:[%s172 + $0x10] sm:$0xff] %vm211, %v271
      %296 = vst.msk [vmem:[%s172 + $0x18] sm:$0xff] %vm211, %v274
      %297 = vst.msk [vmem:[%s172 + $0x20] sm:$0xff] %vm211, %v279
      %298 = vst.msk [vmem:[%s172 + $0x28] sm:$0xff] %vm211, %v282
      %299 = vst.msk [vmem:[%s172 + $0x30] sm:$0xff] %vm211, %v287
      %300 = vst.msk [vmem:[%s172 + $0x38] sm:$0xff] %vm211, %v290
      %s301 = smul.u32 8, %s14
      %p302 = scmp.lt.s32.totalorder %s301, 15
      %s303 = scalar_select %p302, %s301, 15
      %s304 = smul.addr %s303, 8
      %s305 = scalar_lea.vmem %s3, %s304
      // Predicated region
      $region33: #{lhsa_block.7} parent=31 // pred_check
        %p306 = pneg %p100
      $region34: #{lhsa_block.7} parent=31 // pred_check_branch
        %308 = sbr.rel (%p306) target = $region36
      $region35: #{lhsa_block.7} parent=31 // pred_region
        %s309 = smul.u32 8, %s14
      $region36: #{lhsa_block.7} parent=31 // pred_fallthru
        _
    $region32: #{lhsa_block.7} parent=5 // pred_fallthru
      _
    %p310 = scmp.le.s32.totalorder 2, %s9
    // Predicated region
    $region37: #{lhsa_block.7} parent=5 // pred_check
      %p311 = pneg %p310
    $region38: #{lhsa_block.7} parent=5 // pred_check_branch
      %313 = sbr.rel (%p311) target = $region40
    $region39: #{lhsa_block.7} parent=5 // pred_region
      %s314 = ssub.s32 %s9, 2
      // Predicated region
      $region41: #{lhsa_block.7} parent=39 // pred_check
        %p315 = pneg %p106
      $region42: #{lhsa_block.7} parent=39 // pred_check_branch
        %317 = sbr.rel (%p315) target = $region44
      $region43: #{lhsa_block.7} parent=39 // pred_region
        %s318 = smul.u32 8, %s15
        %p319 = scmp.lt.s32.totalorder %s318, 15
        %s320 = scalar_select %p319, %s318, 15
        %s321 = smul.addr %s320, 8
        %s322 = scalar_lea.vmem %s3, %s321
      $region44: #{lhsa_block.7} parent=39 // pred_fallthru
        _
    $region40: #{lhsa_block.7} parent=5 // pred_fallthru
      _
  $region6: #{lhsa_block.7} parent=0 // loop_footer
    %s13 = sadd.s32 1, %s9
  $region7: #{lhsa_block.7} parent=0 // loop_footer_branch
    %8 = sbr.rel target = $region3
  $region8: #{lhsa_block.7} parent=0 // loop_exit
    _

// kernel: lhsa_block.9
$region0: #{lhsa_block.9}
  #allocation0 [shape = 'u32[]', space=smem, size = 0x4, offset = 0x4, fixed_abs, tag = 'smem constant byte address 0x4 - core index']
  #allocation1 [shape = 'u32[144,128]{1,0:T(1,128)}', space=vmem, size = 0x12000, scoped, tag = 'internal scratch']
  %s0 = inlined_call_operand.vmem [shape: bf16[128,2], index: 0, kind: input, shape index: {}]
  %s1 = inlined_call_operand.vmem [shape: f32[128,2], index: 1, kind: input, shape index: {}]
  %s2 = inlined_call_operand.vmem [shape: f32[64,64], index: 2, kind: input, shape index: {}]
  %s3 = inlined_call_operand.vmem [shape: bf16[2,6], index: 3, kind: input, shape index: {}]
  %s4 = inlined_call_operand.vmem [shape: f32[1,6], index: 4, kind: input, shape index: {}]
  %s5 = inlined_call_operand.vmem [shape: bf16[2,2], index: 5, kind: input, shape index: {}]
  %s6 = inlined_call_operand.vmem [shape: f32[1,2], index: 6, kind: input, shape index: {}]
  %s7 = inlined_call_operand.vmem [shape: f32[128,2], index: 7, kind: output, shape index: {}]
  %s8 = sld [smem:[#allocation0]]
  $region61: #{lhsa_block.9} parent=0
    _
  %s10 = ssub.s32 1, %s8
  %s11 = scalar_select 0, %s10, %s8
  loop: start=0, step=1, limit=4
  $region2: #{lhsa_block.9} parent=0 // loop_pre_header
    _
  $region3: #{lhsa_block.9} parent=0 // loop_header
    %s13 = sphi 0, %s17
    %p14 = scmp.ge.s32.totalorder %s13, 4
    %s23 = sphi 0, %s25
    %s26 = sphi 0, %s23
    %s27 = sphi 0, %s26
    %s43 = sphi 0, %s27
    %s49 = sphi 0, %s51
    %s52 = sphi 0, %s49
    %s53 = sphi 0, %s52
    %s69 = sphi 0, %s53
    %s73 = sphi 0, %s73
    %s75 = sphi 0, %s73
    %s76 = sphi 0, %s75
    %s90 = sphi 0, %s76
    %s94 = sphi 0, %s94
    %s96 = sphi 0, %s94
    %s97 = sphi 0, %s96
    %s111 = sphi 0, %s97
    %s115 = sphi 0, %s115
    %s117 = sphi 0, %s115
    %s118 = sphi 0, %s117
    %s132 = sphi 0, %s118
    %s136 = sphi 0, %s136
    %s138 = sphi 0, %s136
    %s139 = sphi 0, %s138
    %s153 = sphi 0, %s139
    %s157 = sphi 0, %s157
    %s159 = sphi 0, %s157
    %s160 = sphi 0, %s159
    %s174 = sphi 0, %s160
    %s180 = sphi 0, %s182
    %s183 = sphi 0, %s180
    %s184 = sphi 0, %s183
    %s200 = sphi 0, %s184
  $region4: #{lhsa_block.9} parent=0 // loop_header_branch
    %16 = sbr.rel (%p14) target = $region8
  $region5: #{lhsa_block.9} parent=0 // loop_body
    %s18 = ssub.s32 %s13, 1
    %s19 = ssub.s32 %s13, 2
    %s20 = sadd.s32 %s13, 1
    %s21 = ssub.s32 %s13, %s20
    %p22 = scmp.eq.s32.totalorder %s21, 0
    %s24 = sadd.s32 %s23, 1
    %s25 = scalar_select %p22, %s23, %s24
    %p28 = pneg %p22
    %p29 = scmp.eq.s32.totalorder %s13, 1
    %p30 = por %p28, %p29
    %p31 = scmp.ne.s32.totalorder %s23, %s26
    %p32 = scmp.eq.s32.totalorder %s13, 0
    %p33 = por %p31, %p32
    %p34 = scmp.ne.s32.totalorder %s23, %s26
    %p35 = scmp.eq.s32.totalorder %s18, 1
    %p36 = por %p34, %p35
    %p37 = scmp.ne.s32.totalorder %s26, %s27
    %p38 = scmp.eq.s32.totalorder %s18, 0
    %p39 = por %p37, %p38
    %p40 = scmp.ne.s32.totalorder %s26, %s27
    %p41 = scmp.eq.s32.totalorder %s19, 1
    %p42 = por %p40, %p41
    %p44 = scmp.ne.s32.totalorder %s27, %s43
    %p45 = scmp.eq.s32.totalorder %s19, 0
    %p46 = por %p44, %p45
    %s47 = ssub.s32 %s13, %s20
    %p48 = scmp.eq.s32.totalorder %s47, 0
    %s50 = sadd.s32 %s49, 1
    %s51 = scalar_select %p48, %s49, %s50
    %p54 = pneg %p48
    %p55 = scmp.eq.s32.totalorder %s13, 1
    %p56 = por %p54, %p55
    %p57 = scmp.ne.s32.totalorder %s49, %s52
    %p58 = scmp.eq.s32.totalorder %s13, 0
    %p59 = por %p57, %p58
    %p60 = scmp.ne.s32.totalorder %s49, %s52
    %p61 = scmp.eq.s32.totalorder %s18, 1
    %p62 = por %p60, %p61
    %p63 = scmp.ne.s32.totalorder %s52, %s53
    %p64 = scmp.eq.s32.totalorder %s18, 0
    %p65 = por %p63, %p64
    %p66 = scmp.ne.s32.totalorder %s52, %s53
    %p67 = scmp.eq.s32.totalorder %s19, 1
    %p68 = por %p66, %p67
    %p70 = scmp.ne.s32.totalorder %s53, %s69
    %p71 = scmp.eq.s32.totalorder %s19, 0
    %p72 = por %p70, %p71
    %s74 = sadd.s32 %s73, 1
    %p77 = scmp.eq.s32.totalorder %s13, 1
    %p78 = scmp.ne.s32.totalorder %s73, %s75
    %p79 = scmp.eq.s32.totalorder %s13, 0
    %p80 = por %p78, %p79
    %p81 = scmp.ne.s32.totalorder %s73, %s75
    %p82 = scmp.eq.s32.totalorder %s18, 1
    %p83 = por %p81, %p82
    %p84 = scmp.ne.s32.totalorder %s75, %s76
    %p85 = scmp.eq.s32.totalorder %s18, 0
    %p86 = por %p84, %p85
    %p87 = scmp.ne.s32.totalorder %s75, %s76
    %p88 = scmp.eq.s32.totalorder %s19, 1
    %p89 = por %p87, %p88
    %p91 = scmp.ne.s32.totalorder %s76, %s90
    %p92 = scmp.eq.s32.totalorder %s19, 0
    %p93 = por %p91, %p92
    %s95 = sadd.s32 %s94, 1
    %p98 = scmp.eq.s32.totalorder %s13, 1
    %p99 = scmp.ne.s32.totalorder %s94, %s96
    %p100 = scmp.eq.s32.totalorder %s13, 0
    %p101 = por %p99, %p100
    %p102 = scmp.ne.s32.totalorder %s94, %s96
    %p103 = scmp.eq.s32.totalorder %s18, 1
    %p104 = por %p102, %p103
    %p105 = scmp.ne.s32.totalorder %s96, %s97
    %p106 = scmp.eq.s32.totalorder %s18, 0
    %p107 = por %p105, %p106
    %p108 = scmp.ne.s32.totalorder %s96, %s97
    %p109 = scmp.eq.s32.totalorder %s19, 1
    %p110 = por %p108, %p109
    %p112 = scmp.ne.s32.totalorder %s97, %s111
    %p113 = scmp.eq.s32.totalorder %s19, 0
    %p114 = por %p112, %p113
    %s116 = sadd.s32 %s115, 1
    %p119 = scmp.eq.s32.totalorder %s13, 1
    %p120 = scmp.ne.s32.totalorder %s115, %s117
    %p121 = scmp.eq.s32.totalorder %s13, 0
    %p122 = por %p120, %p121
    %p123 = scmp.ne.s32.totalorder %s115, %s117
    %p124 = scmp.eq.s32.totalorder %s18, 1
    %p125 = por %p123, %p124
    %p126 = scmp.ne.s32.totalorder %s117, %s118
    %p127 = scmp.eq.s32.totalorder %s18, 0
    %p128 = por %p126, %p127
    %p129 = scmp.ne.s32.totalorder %s117, %s118
    %p130 = scmp.eq.s32.totalorder %s19, 1
    %p131 = por %p129, %p130
    %p133 = scmp.ne.s32.totalorder %s118, %s132
    %p134 = scmp.eq.s32.totalorder %s19, 0
    %p135 = por %p133, %p134
    %s137 = sadd.s32 %s136, 1
    %p140 = scmp.eq.s32.totalorder %s13, 1
    %p141 = scmp.ne.s32.totalorder %s136, %s138
    %p142 = scmp.eq.s32.totalorder %s13, 0
    %p143 = por %p141, %p142
    %p144 = scmp.ne.s32.totalorder %s136, %s138
    %p145 = scmp.eq.s32.totalorder %s18, 1
    %p146 = por %p144, %p145
    %p147 = scmp.ne.s32.totalorder %s138, %s139
    %p148 = scmp.eq.s32.totalorder %s18, 0
    %p149 = por %p147, %p148
    %p150 = scmp.ne.s32.totalorder %s138, %s139
    %p151 = scmp.eq.s32.totalorder %s19, 1
    %p152 = por %p150, %p151
    %p154 = scmp.ne.s32.totalorder %s139, %s153
    %p155 = scmp.eq.s32.totalorder %s19, 0
    %p156 = por %p154, %p155
    %s158 = sadd.s32 %s157, 1
    %p161 = scmp.eq.s32.totalorder %s13, 1
    %p162 = scmp.ne.s32.totalorder %s157, %s159
    %p163 = scmp.eq.s32.totalorder %s13, 0
    %p164 = por %p162, %p163
    %p165 = scmp.ne.s32.totalorder %s157, %s159
    %p166 = scmp.eq.s32.totalorder %s18, 1
    %p167 = por %p165, %p166
    %p168 = scmp.ne.s32.totalorder %s159, %s160
    %p169 = scmp.eq.s32.totalorder %s18, 0
    %p170 = por %p168, %p169
    %p171 = scmp.ne.s32.totalorder %s159, %s160
    %p172 = scmp.eq.s32.totalorder %s19, 1
    %p173 = por %p171, %p172
    %p175 = scmp.ne.s32.totalorder %s160, %s174
    %p176 = scmp.eq.s32.totalorder %s19, 0
    %p177 = por %p175, %p176
    %s178 = ssub.s32 %s13, %s20
    %p179 = scmp.eq.s32.totalorder %s178, 0
    %s181 = sadd.s32 %s180, 1
    %s182 = scalar_select %p179, %s180, %s181
    %p185 = pneg %p179
    %p186 = scmp.eq.s32.totalorder %s13, 1
    %p187 = por %p185, %p186
    %p188 = scmp.ne.s32.totalorder %s180, %s183
    %p189 = scmp.eq.s32.totalorder %s13, 0
    %p190 = por %p188, %p189
    %p191 = scmp.ne.s32.totalorder %s180, %s183
    %p192 = scmp.eq.s32.totalorder %s18, 1
    %p193 = por %p191, %p192
    %p194 = scmp.ne.s32.totalorder %s183, %s184
    %p195 = scmp.eq.s32.totalorder %s18, 0
    %p196 = por %p194, %p195
    %p197 = scmp.ne.s32.totalorder %s183, %s184
    %p198 = scmp.eq.s32.totalorder %s19, 1
    %p199 = por %p197, %p198
    %p201 = scmp.ne.s32.totalorder %s184, %s200
    %p202 = scmp.eq.s32.totalorder %s19, 0
    %p203 = por %p201, %p202
    %p204 = scmp.le.s32.totalorder 1, %s13
    %p205 = scmp.lt.s32.totalorder %s13, 3
    %p206 = pnand %p204, %p205
    %p207 = pneg %p206
    // Predicated region
    $region9: #{lhsa_block.9} parent=5 // pred_check
      _
    $region10: #{lhsa_block.9} parent=5 // pred_check_branch
      %209 = sbr.rel (%p206) target = $region12
    $region11: #{lhsa_block.9} parent=5 // pred_region
      %s210 = ssub.s32 %s13, 1
      // Predicated region
      $region13: #{lhsa_block.9} parent=11 // pred_check
        %p211 = pneg %p86
      $region14: #{lhsa_block.9} parent=11 // pred_check_branch
        %213 = sbr.rel (%p211) target = $region16
      $region15: #{lhsa_block.9} parent=11 // pred_region
        _
      $region16: #{lhsa_block.9} parent=11 // pred_fallthru
        _
      // Predicated region
      $region17: #{lhsa_block.9} parent=11 // pred_check
        %p214 = pneg %p107
      $region18: #{lhsa_block.9} parent=11 // pred_check_branch
        %216 = sbr.rel (%p214) target = $region20
      $region19: #{lhsa_block.9} parent=11 // pred_region
        _
      $region20: #{lhsa_block.9} parent=11 // pred_fallthru
        _
      // Predicated region
      $region21: #{lhsa_block.9} parent=11 // pred_check
        %p217 = pneg %p128
      $region22: #{lhsa_block.9} parent=11 // pred_check_branch
        %219 = sbr.rel (%p217) target = $region24
      $region23: #{lhsa_block.9} parent=11 // pred_region
        _
      $region24: #{lhsa_block.9} parent=11 // pred_fallthru
        _
      // Predicated region
      $region25: #{lhsa_block.9} parent=11 // pred_check
        %p220 = pneg %p149
      $region26: #{lhsa_block.9} parent=11 // pred_check_branch
        %222 = sbr.rel (%p220) target = $region28
      $region27: #{lhsa_block.9} parent=11 // pred_region
        _
      $region28: #{lhsa_block.9} parent=11 // pred_fallthru
        _
      // Predicated region
      $region29: #{lhsa_block.9} parent=11 // pred_check
        %p223 = pneg %p170
      $region30: #{lhsa_block.9} parent=11 // pred_check_branch
        %225 = sbr.rel (%p223) target = $region32
      $region31: #{lhsa_block.9} parent=11 // pred_region
        _
      $region32: #{lhsa_block.9} parent=11 // pred_fallthru
        _
    $region12: #{lhsa_block.9} parent=5 // pred_fallthru
      _
    %p226 = scmp.lt.s32.totalorder %s13, 2
    // Predicated region
    $region33: #{lhsa_block.9} parent=5 // pred_check
      %p227 = pneg %p226
    $region34: #{lhsa_block.9} parent=5 // pred_check_branch
      %229 = sbr.rel (%p227) target = $region36
    $region35: #{lhsa_block.9} parent=5 // pred_region
      // Predicated region
      $region37: #{lhsa_block.9} parent=35 // pred_check
        %p230 = pneg %p33
      $region38: #{lhsa_block.9} parent=35 // pred_check_branch
        %232 = sbr.rel (%p230) target = $region40
      $region39: #{lhsa_block.9} parent=35 // pred_region
        %s233 = smul.u32 8, %s13
        %p234 = scmp.lt.s32.totalorder %s233, 15
        %s235 = scalar_select %p234, %s233, 15
        %s236 = smul.addr %s235, 4
        %s237 = scalar_lea.vmem %s0, %s236
        %s238 = smul.u32 8, %s13
      $region40: #{lhsa_block.9} parent=35 // pred_fallthru
        _
      // Predicated region
      $region41: #{lhsa_block.9} parent=35 // pred_check
        %p239 = pneg %p59
      $region42: #{lhsa_block.9} parent=35 // pred_check_branch
        %241 = sbr.rel (%p239) target = $region44
      $region43: #{lhsa_block.9} parent=35 // pred_region
        %s242 = smul.u32 8, %s13
        %p243 = scmp.lt.s32.totalorder %s242, 15
        %s244 = scalar_select %p243, %s242, 15
        %s245 = smul.addr %s244, 8
        %s246 = scalar_lea.vmem %s1, %s245
        %s247 = smul.u32 8, %s13
      $region44: #{lhsa_block.9} parent=35 // pred_fallthru
        _
    $region36: #{lhsa_block.9} parent=5 // pred_fallthru
      _
    %p248 = scmp.le.s32.totalorder 1, %s13
    %p249 = scmp.lt.s32.totalorder %s13, 3
    %p250 = pnand %p248, %p249
    %p251 = pneg %p250
    // Predicated region
    $region45: #{lhsa_block.9} parent=5 // pred_check
      _
    $region46: #{lhsa_block.9} parent=5 // pred_check_branch
      %253 = sbr.rel (%p250) target = $region48
    $region47: #{lhsa_block.9} parent=5 // pred_region
      %s254 = ssub.s32 %s13, 1
      %s255 = smul.u32 8, %s18
      %p256 = scmp.lt.s32.totalorder %s255, 15
      %s257 = scalar_select %p256, %s255, 15
      %s258 = smul.addr %s257, 4
      %s259 = scalar_lea.vmem %s0, %s258
      %p260 = pneg %p39
      %p261 = pneg %p36
      %s262 = smul.u32 8, %s18
      %p263 = scmp.lt.s32.totalorder %s262, 15
      %s264 = scalar_select %p263, %s262, 15
      %s265 = smul.addr %s264, 8
      %s266 = scalar_lea.vmem %s1, %s265
      %p267 = pneg %p65
      %p268 = pneg %p62
      %p269 = pneg %p86
      %p270 = pneg %p83
      %p271 = pneg %p107
      %p272 = pneg %p104
      %p273 = pneg %p128
      %p274 = pneg %p125
      %p275 = pneg %p149
      %p276 = pneg %p146
      %p277 = pneg %p170
      %p278 = pneg %p167
      %p279 = pneg %p196
      %p280 = pneg %p193
      %s281 = smul.u32 8, %s18
      %p282 = scmp.lt.s32.totalorder %s281, 15
      %s283 = scalar_select %p282, %s281, 15
      %s284 = smul.addr %s283, 8
      %s285 = scalar_lea.vmem %s7, %s284
      %s286 = smul.u32 8, %s18
      %p287 = scmp.lt.s32.totalorder %s286, 15
      %s288 = scalar_select %p287, %s286, 15
      %s289 = smul.addr %s288, 4
      %s290 = scalar_lea.vmem %s0, %s289
      %s291 = smul.u32 8, %s18
      %s292 = smul.u32 8, %s18
      %p293 = scmp.lt.s32.totalorder %s292, 15
      %s294 = scalar_select %p293, %s292, 15
      %s295 = smul.addr %s294, 8
      %s296 = scalar_lea.vmem %s1, %s295
      %s297 = smul.u32 8, %s18
      %s298 = smul.u32 8, %s18
      %p299 = scmp.lt.s32.totalorder %s298, 15
      %s300 = scalar_select %p299, %s298, 15
      %s301 = smul.addr %s300, 8
      %s302 = scalar_lea.vmem %s7, %s301
      %s303 = smul.u32 8, %s18
      %v305 = vld [vmem:[%s290] sm:$0xf]
      %v306 = vld [vmem:[%s290 + $0x4] sm:$0xf]
      %v307 = vld [vmem:[%s290 + $0x8] sm:$0xf]
      %v308 = vld [vmem:[%s290 + $0xc] sm:$0xf]
      %v309 = vld [vmem:[%s290 + $0x10] sm:$0xf]
      %v310 = vld [vmem:[%s290 + $0x14] sm:$0xf]
      %v311 = vld [vmem:[%s290 + $0x18] sm:$0xf]
      %v312 = vld [vmem:[%s290 + $0x1c] sm:$0xf]
      %v313 = vld [vmem:[%s3] sm:$0x1]
      %v314 = vld [vmem:[%s4] sm:$0x1]
      %v316 = vlaneseq
      %v317 = vshrl.u32 %v316, 7
      %v318 = vsub.s32 0, %v317
      %v319 = vrot.slane %v314, %v318
      %v329 = vunpack.c.l.b16 %v305
      %v330 = vunpack.c.l.b16 %v306
      %v331 = vunpack.c.l.b16 %v307
      %v332 = vunpack.c.l.b16 %v308
      %v333 = vunpack.c.l.b16 %v309
      %v334 = vunpack.c.l.b16 %v310
      %v335 = vunpack.c.l.b16 %v311
      %v336 = vunpack.c.l.b16 %v312
      %v337 = vpack.c.b16 %v330, %v329
      %v338 = vpack.c.b16 %v332, %v331
      %v339 = vpack.c.b16 %v334, %v333
      %v340 = vpack.c.b16 %v336, %v335
      %vm341 = vcmask 15360
      %v343 = vsel %vm341, %v337, 0
      %v346 = vsel %vm341, %v338, 0
      %v349 = vsel %vm341, %v339, 0
      %v352 = vsel %vm341, %v340, 0
      %vm354 = vcmask 1040384
      %v356 = vsel %vm354, %v313, 0
      %358 = vmatprep.subr.bf16.mxu0 0
      %359 = vmatpush1.bf16.msra.mxu0 %v356
      %360 = vmatprep.subr.bf16.mxu0 0
      %361 = vmatpush1.bf16.msra.mxu0 0
      %362 = vmatprep.subr.bf16.mxu0 0
      %363 = vmatpush1.bf16.msra.mxu0 0
      %364 = vmatprep.subr.bf16.mxu0 0
      %365 = vmatpush1.bf16.msra.mxu0 0
      %366 = vmatprep.subr.bf16.mxu0 0
      %367 = vmatpush1.bf16.msra.mxu0 0
      %368 = vmatprep.subr.bf16.mxu0 0
      %369 = vmatpush1.bf16.msra.mxu0 0
      %370 = vmatprep.subr.bf16.mxu0 0
      %371 = vmatpush1.bf16.msra.mxu0 0
      %372 = vmatprep.subr.bf16.mxu0 0
      %373 = vmatpush1.bf16.msra.mxu0 0
      %374 = vmatprep.subr.bf16.mxu0 0
      %375 = vmatpush1.bf16.msra.mxu0 0
      %376 = vmatprep.subr.bf16.mxu0 0
      %377 = vmatpush1.bf16.msra.mxu0 0
      %378 = vmatprep.subr.bf16.mxu0 0
      %379 = vmatpush1.bf16.msra.mxu0 0
      %380 = vmatprep.subr.bf16.mxu0 0
      %381 = vmatpush1.bf16.msra.mxu0 0
      %382 = vmatprep.subr.bf16.mxu0 0
      %383 = vmatpush1.bf16.msra.mxu0 0
      %384 = vmatprep.subr.bf16.mxu0 0
      %385 = vmatpush1.bf16.msra.mxu0 0
      %386 = vmatprep.subr.bf16.mxu0 0
      %387 = vmatpush1.bf16.msra.mxu0 0
      %388 = vmatprep.subr.bf16.mxu0 0
      %389 = vmatpush1.bf16.msra.mxu0 0
      %390 = vmatprep.mubr.bf16.mxu0 0
      %391 = vmatmul.mubr.bf16.gmra.mrb[0].mxu0 %v343
      %v392 = vpop.f32.mrb[0].mxu0
      %v393 = vadd.f32 %v319, %v392
      %v394 = vpop.f32.mrb[0].mxu0
      %v395 = vpop.f32.mrb[0].mxu0
      %v396 = vadd.f32 %v319, %v395
      %v397 = vpop.f32.mrb[0].mxu0
      %398 = vmatprep.mubr.bf16.mxu0 0
      %399 = vmatmul.mubr.bf16.gmra.mrb[0].mxu0 %v346
      %v400 = vpop.f32.mrb[0].mxu0
      %v401 = vadd.f32 %v319, %v400
      %v402 = vpop.f32.mrb[0].mxu0
      %v403 = vpop.f32.mrb[0].mxu0
      %v404 = vadd.f32 %v319, %v403
      %v405 = vpop.f32.mrb[0].mxu0
      %406 = vmatprep.mubr.bf16.mxu0 0
      %407 = vmatmul.mubr.bf16.gmra.mrb[0].mxu0 %v349
      %v408 = vpop.f32.mrb[0].mxu0
      %v409 = vadd.f32 %v319, %v408
      %v410 = vpop.f32.mrb[0].mxu0
      %v411 = vpop.f32.mrb[0].mxu0
      %v412 = vadd.f32 %v319, %v411
      %v413 = vpop.f32.mrb[0].mxu0
      %414 = vmatprep.mubr.bf16.mxu0 0
      %415 = vmatmul.mubr.bf16.gmra.mrb[0].mxu0 %v352
      %v416 = vpop.f32.mrb[0].mxu0
      %v417 = vadd.f32 %v319, %v416
      %v418 = vpop.f32.mrb[0].mxu0
      %v419 = vpop.f32.mrb[0].mxu0
      %v420 = vadd.f32 %v319, %v419
      %v421 = vpop.f32.mrb[0].mxu0
      %422 = vdwg.mxu0
      %v423 = vpack.c.bf16 %v396, %v393
      %v424 = vpack.c.bf16 %v404, %v401
      %v425 = vpack.c.bf16 %v412, %v409
      %v426 = vpack.c.bf16 %v420, %v417
      %v427 = vld [vmem:[%s2] sm:$0xff]
      %v428 = vld [vmem:[%s2 + $0x8] sm:$0xff]
      %v429 = vld [vmem:[%s2 + $0x10] sm:$0xff]
      %v430 = vld [vmem:[%s2 + $0x18] sm:$0xff]
      %v431 = vld [vmem:[%s2 + $0x20] sm:$0xff]
      %v432 = vld [vmem:[%s2 + $0x28] sm:$0xff]
      %v433 = vld [vmem:[%s2 + $0x30] sm:$0xff]
      %v434 = vld [vmem:[%s2 + $0x38] sm:$0xff]
      %439 = vrot.lane.b32.xlu0 %v423, 126
      %v440 = vpop.permute.xlu0 %439
      %441 = vrot.lane.b32.xlu0 %v424, 126
      %v442 = vpop.permute.xlu0 %441
      %443 = vrot.lane.b32.xlu0 %v425, 126
      %v444 = vpop.permute.xlu0 %443
      %445 = vrot.lane.b32.xlu0 %v426, 126
      %v446 = vpop.permute.xlu0 %445
      %v448 = vsel %vm341, %v423, 0
      %v451 = vsel %vm341, %v424, 0
      %v454 = vsel %vm341, %v425, 0
      %v457 = vsel %vm341, %v426, 0
      %v460 = vsel %vm341, %v440, 0
      %v463 = vsel %vm341, %v442, 0
      %v466 = vsel %vm341, %v444, 0
      %v469 = vsel %vm341, %v446, 0
      %471 = vmatprep.subr.bf16.mxu0 0
      %472 = vmatpush1.bf16.xpose.msra.mxu0 %v460
      %473 = vmatprep.subr.bf16.mxu0 0
      %474 = vmatpush1.bf16.xpose.msra.mxu0 %v463
      %475 = vmatprep.subr.bf16.mxu0 0
      %476 = vmatpush1.bf16.xpose.msra.mxu0 %v466
      %477 = vmatprep.subr.bf16.mxu0 0
      %478 = vmatpush1.bf16.xpose.msra.mxu0 %v469
      %479 = vmatprep.subr.bf16.mxu0 0
      %480 = vmatpush1.bf16.xpose.msra.mxu0 0
      %481 = vmatprep.subr.bf16.mxu0 0
      %482 = vmatpush1.bf16.xpose.msra.mxu0 0
      %483 = vmatprep.subr.bf16.mxu0 0
      %484 = vmatpush1.bf16.xpose.msra.mxu0 0
      %485 = vmatprep.subr.bf16.mxu0 0
      %486 = vmatpush1.bf16.xpose.msra.mxu0 0
      %487 = vmatprep.subr.bf16.mxu0 0
      %488 = vmatpush1.bf16.xpose.msra.mxu0 0
      %489 = vmatprep.subr.bf16.mxu0 0
      %490 = vmatpush1.bf16.xpose.msra.mxu0 0
      %491 = vmatprep.subr.bf16.mxu0 0
      %492 = vmatpush1.bf16.xpose.msra.mxu0 0
      %493 = vmatprep.subr.bf16.mxu0 0
      %494 = vmatpush1.bf16.xpose.msra.mxu0 0
      %495 = vmatprep.subr.bf16.mxu0 0
      %496 = vmatpush1.bf16.xpose.msra.mxu0 0
      %497 = vmatprep.subr.bf16.mxu0 0
      %498 = vmatpush1.bf16.xpose.msra.mxu0 0
      %499 = vmatprep.subr.bf16.mxu0 0
      %500 = vmatpush1.bf16.xpose.msra.mxu0 0
      %501 = vmatprep.subr.bf16.mxu0 0
      %502 = vmatpush1.bf16.xpose.msra.mxu0 0
      %503 = vmatprep.mubr.bf16.mxu0 0
      %504 = vmatmul.mubr.bf16.gmra.mrb[0].mxu0 %v448
      %v505 = vpop.f32.mrb[0].mxu0
      %v506 = vadd.f32 %v427, %v505
      %v507 = vpop.f32.mrb[0].mxu0
      %v508 = vpop.f32.mrb[0].mxu0
      %v509 = vadd.f32 %v428, %v508
      %v510 = vpop.f32.mrb[0].mxu0
      %511 = vmatprep.mubr.bf16.mxu0 0
      %512 = vmatmul.mubr.bf16.gmra.mrb[0].mxu0 %v451
      %v513 = vpop.f32.mrb[0].mxu0
      %v514 = vadd.f32 %v429, %v513
      %v515 = vpop.f32.mrb[0].mxu0
      %v516 = vpop.f32.mrb[0].mxu0
      %v517 = vadd.f32 %v430, %v516
      %v518 = vpop.f32.mrb[0].mxu0
      %519 = vmatprep.mubr.bf16.mxu0 0
      %520 = vmatmul.mubr.bf16.gmra.mrb[0].mxu0 %v454
      %v521 = vpop.f32.mrb[0].mxu0
      %v522 = vadd.f32 %v431, %v521
      %v523 = vpop.f32.mrb[0].mxu0
      %v524 = vpop.f32.mrb[0].mxu0
      %v525 = vadd.f32 %v432, %v524
      %v526 = vpop.f32.mrb[0].mxu0
      %527 = vmatprep.mubr.bf16.mxu0 0
      %528 = vmatmul.mubr.bf16.gmra.mrb[0].mxu0 %v457
      %v529 = vpop.f32.mrb[0].mxu0
      %v530 = vadd.f32 %v433, %v529
      %v531 = vpop.f32.mrb[0].mxu0
      %v532 = vpop.f32.mrb[0].mxu0
      %v533 = vadd.f32 %v434, %v532
      %v534 = vpop.f32.mrb[0].mxu0
      %535 = vdwg.mxu0
      %vm536 = vcmask 523264
      %v537 = vsel %vm536, %v506, -inf
      %538 = vmax.xlane.f32.xlu0 %v537
      %v539 = vpop.xlane.xlu0 %538
      %v540 = vsel %vm536, %v509, -inf
      %541 = vmax.xlane.f32.xlu0 %v540
      %v542 = vpop.xlane.xlu0 %541
      %v543 = vsel %vm536, %v514, -inf
      %544 = vmax.xlane.f32.xlu0 %v543
      %v545 = vpop.xlane.xlu0 %544
      %v546 = vsel %vm536, %v517, -inf
      %547 = vmax.xlane.f32.xlu0 %v546
      %v548 = vpop.xlane.xlu0 %547
      %v549 = vsel %vm536, %v522, -inf
      %550 = vmax.xlane.f32.xlu0 %v549
      %v551 = vpop.xlane.xlu0 %550
      %v552 = vsel %vm536, %v525, -inf
      %553 = vmax.xlane.f32.xlu0 %v552
      %v554 = vpop.xlane.xlu0 %553
      %v555 = vsel %vm536, %v530, -inf
      %556 = vmax.xlane.f32.xlu0 %v555
      %v557 = vpop.xlane.xlu0 %556
      %v558 = vsel %vm536, %v533, -inf
      %559 = vmax.xlane.f32.xlu0 %v558
      %v560 = vpop.xlane.xlu0 %559
      %v561 = vsub.f32 %v506, %v539
      %v562 = vsub.f32 %v509, %v542
      %v563 = vsub.f32 %v514, %v545
      %v564 = vsub.f32 %v517, %v548
      %v565 = vsub.f32 %v522, %v551
      %v566 = vsub.f32 %v525, %v554
      %v567 = vsub.f32 %v530, %v557
      %v568 = vsub.f32 %v533, %v560
      %v569 = vmul.f32 %v561, 1.442695
      %v570 = vpow.pop %v569
      %v571 = vmul.f32 %v562, 1.442695
      %v572 = vpow.pop %v571
      %v573 = vmul.f32 %v563, 1.442695
      %v574 = vpow.pop %v573
      %v575 = vmul.f32 %v564, 1.442695
      %v576 = vpow.pop %v575
      %v577 = vmul.f32 %v565, 1.442695
      %v578 = vpow.pop %v577
      %v579 = vmul.f32 %v566, 1.442695
      %v580 = vpow.pop %v579
      %v581 = vmul.f32 %v567, 1.442695
      %v582 = vpow.pop %v581
      %v583 = vmul.f32 %v568, 1.442695
      %v584 = vpow.pop %v583
      %v585 = vsel %vm536, %v570, 0.0
      %586 = vadd.xlane.f32.xlu0 %v585
      %v587 = vpop.xlane.xlu0 %586
      %v588 = vsel %vm536, %v572, 0.0
      %589 = vadd.xlane.f32.xlu0 %v588
      %v590 = vpop.xlane.xlu0 %589
      %v591 = vsel %vm536, %v574, 0.0
      %592 = vadd.xlane.f32.xlu0 %v591
      %v593 = vpop.xlane.xlu0 %592
      %v594 = vsel %vm536, %v576, 0.0
      %595 = vadd.xlane.f32.xlu0 %v594
      %v596 = vpop.xlane.xlu0 %595
      %v597 = vsel %vm536, %v578, 0.0
      %598 = vadd.xlane.f32.xlu0 %v597
      %v599 = vpop.xlane.xlu0 %598
      %v600 = vsel %vm536, %v580, 0.0
      %601 = vadd.xlane.f32.xlu0 %v600
      %v602 = vpop.xlane.xlu0 %601
      %v603 = vsel %vm536, %v582, 0.0
      %604 = vadd.xlane.f32.xlu0 %v603
      %v605 = vpop.xlane.xlu0 %604
      %v606 = vsel %vm536, %v584, 0.0
      %607 = vadd.xlane.f32.xlu0 %v606
      %v608 = vpop.xlane.xlu0 %607
      %v609 = vrcp.pop %v587
      %v610 = vrcp.pop %v590
      %v611 = vrcp.pop %v593
      %v612 = vrcp.pop %v596
      %v613 = vrcp.pop %v599
      %v614 = vrcp.pop %v602
      %v615 = vrcp.pop %v605
      %v616 = vrcp.pop %v608
      %v617 = vmul.f32 %v570, %v609
      %v618 = vmul.f32 %v572, %v610
      %v619 = vmul.f32 %v574, %v611
      %v620 = vmul.f32 %v576, %v612
      %v621 = vmul.f32 %v578, %v613
      %v622 = vmul.f32 %v580, %v614
      %v623 = vmul.f32 %v582, %v615
      %v624 = vmul.f32 %v584, %v616
      %v625 = vpack.c.bf16 %v618, %v617
      %v626 = vpack.c.bf16 %v620, %v619
      %v627 = vpack.c.bf16 %v622, %v621
      %v628 = vpack.c.bf16 %v624, %v623
      %v629 = vld [vmem:[%s296] sm:$0xff]
      %v630 = vld [vmem:[%s296 + $0x8] sm:$0xff]
      %v631 = vld [vmem:[%s296 + $0x10] sm:$0xff]
      %v632 = vld [vmem:[%s296 + $0x18] sm:$0xff]
      %v633 = vld [vmem:[%s296 + $0x20] sm:$0xff]
      %v634 = vld [vmem:[%s296 + $0x28] sm:$0xff]
      %v635 = vld [vmem:[%s296 + $0x30] sm:$0xff]
      %v636 = vld [vmem:[%s296 + $0x38] sm:$0xff]
      %637 = vrot.lane.b32.xlu0 %v423, 124
      %v638 = vpop.permute.xlu0 %637
      %639 = vrot.lane.b32.xlu0 %v424, 124
      %v640 = vpop.permute.xlu0 %639
      %641 = vrot.lane.b32.xlu0 %v425, 124
      %v642 = vpop.permute.xlu0 %641
      %643 = vrot.lane.b32.xlu0 %v426, 124
      %v644 = vpop.permute.xlu0 %643
      %v650 = vsel %vm536, %v625, 0
      %v653 = vsel %vm536, %v626, 0
      %v656 = vsel %vm536, %v627, 0
      %v659 = vsel %vm536, %v628, 0
      %661 = vmatprep.subr.bf16.mxu0 0
      %662 = vmatpush1.bf16.msra.mxu0 %v638
      %663 = vmatprep.subr.bf16.mxu0 0
      %664 = vmatpush1.bf16.msra.mxu0 %v640
      %665 = vmatprep.subr.bf16.mxu0 0
      %666 = vmatpush1.bf16.msra.mxu0 %v642
      %667 = vmatprep.subr.bf16.mxu0 0
      %668 = vmatpush1.bf16.msra.mxu0 %v644
      %669 = vmatprep.subr.bf16.mxu0 0
      %670 = vmatpush1.bf16.msra.mxu0 0
      %671 = vmatprep.subr.bf16.mxu0 0
      %672 = vmatpush1.bf16.msra.mxu0 0
      %673 = vmatprep.subr.bf16.mxu0 0
      %674 = vmatpush1.bf16.msra.mxu0 0
      %675 = vmatprep.subr.bf16.mxu0 0
      %676 = vmatpush1.bf16.msra.mxu0 0
      %677 = vmatprep.subr.bf16.mxu0 0
      %678 = vmatpush1.bf16.msra.mxu0 0
      %679 = vmatprep.subr.bf16.mxu0 0
      %680 = vmatpush1.bf16.msra.mxu0 0
      %681 = vmatprep.subr.bf16.mxu0 0
      %682 = vmatpush1.bf16.msra.mxu0 0
      %683 = vmatprep.subr.bf16.mxu0 0
      %684 = vmatpush1.bf16.msra.mxu0 0
      %685 = vmatprep.subr.bf16.mxu0 0
      %686 = vmatpush1.bf16.msra.mxu0 0
      %687 = vmatprep.subr.bf16.mxu0 0
      %688 = vmatpush1.bf16.msra.mxu0 0
      %689 = vmatprep.subr.bf16.mxu0 0
      %690 = vmatpush1.bf16.msra.mxu0 0
      %691 = vmatprep.subr.bf16.mxu0 0
      %692 = vmatpush1.bf16.msra.mxu0 0
      %693 = vmatprep.mubr.bf16.mxu0 0
      %694 = vmatmul.mubr.bf16.gmra.mrb[0].mxu0 %v650
      %v695 = vpop.f32.mrb[0].mxu0
      %v696 = vadd.f32 %v629, %v695
      %v697 = vpop.f32.mrb[0].mxu0
      %v698 = vpop.f32.mrb[0].mxu0
      %v699 = vadd.f32 %v630, %v698
      %v700 = vpop.f32.mrb[0].mxu0
      %701 = vmatprep.mubr.bf16.mxu0 0
      %702 = vmatmul.mubr.bf16.gmra.mrb[0].mxu0 %v653
      %v703 = vpop.f32.mrb[0].mxu0
      %v704 = vadd.f32 %v631, %v703
      %v705 = vpop.f32.mrb[0].mxu0
      %v706 = vpop.f32.mrb[0].mxu0
      %v707 = vadd.f32 %v632, %v706
      %v708 = vpop.f32.mrb[0].mxu0
      %709 = vmatprep.mubr.bf16.mxu0 0
      %710 = vmatmul.mubr.bf16.gmra.mrb[0].mxu0 %v656
      %v711 = vpop.f32.mrb[0].mxu0
      %v712 = vadd.f32 %v633, %v711
      %v713 = vpop.f32.mrb[0].mxu0
      %v714 = vpop.f32.mrb[0].mxu0
      %v715 = vadd.f32 %v634, %v714
      %v716 = vpop.f32.mrb[0].mxu0
      %717 = vmatprep.mubr.bf16.mxu0 0
      %718 = vmatmul.mubr.bf16.gmra.mrb[0].mxu0 %v659
      %v719 = vpop.f32.mrb[0].mxu0
      %v720 = vadd.f32 %v635, %v719
      %v721 = vpop.f32.mrb[0].mxu0
      %v722 = vpop.f32.mrb[0].mxu0
      %v723 = vadd.f32 %v636, %v722
      %v724 = vpop.f32.mrb[0].mxu0
      %725 = vdwg.mxu0
      %v726 = vpack.c.bf16 %v699, %v696
      %v727 = vpack.c.bf16 %v707, %v704
      %v728 = vpack.c.bf16 %v715, %v712
      %v729 = vpack.c.bf16 %v723, %v720
      %v730 = vld [vmem:[%s5] sm:$0x1]
      %v731 = vld [vmem:[%s6] sm:$0x1]
      %v733 = vlaneseq
      %v734 = vshrl.u32 %v733, 7
      %v735 = vsub.s32 0, %v734
      %v736 = vrot.slane %v731, %v735
      %v739 = vsel %vm341, %v726, 0
      %v742 = vsel %vm341, %v727, 0
      %v745 = vsel %vm341, %v728, 0
      %v748 = vsel %vm341, %v729, 0
      %v751 = vsel %vm354, %v730, 0
      %753 = vmatprep.subr.bf16.mxu0 0
      %754 = vmatpush1.bf16.msra.mxu0 %v751
      %755 = vmatprep.subr.bf16.mxu0 0
      %756 = vmatpush1.bf16.msra.mxu0 0
      %757 = vmatprep.subr.bf16.mxu0 0
      %758 = vmatpush1.bf16.msra.mxu0 0
      %759 = vmatprep.subr.bf16.mxu0 0
      %760 = vmatpush1.bf16.msra.mxu0 0
      %761 = vmatprep.subr.bf16.mxu0 0
      %762 = vmatpush1.bf16.msra.mxu0 0
      %763 = vmatprep.subr.bf16.mxu0 0
      %764 = vmatpush1.bf16.msra.mxu0 0
      %765 = vmatprep.subr.bf16.mxu0 0
      %766 = vmatpush1.bf16.msra.mxu0 0
      %767 = vmatprep.subr.bf16.mxu0 0
      %768 = vmatpush1.bf16.msra.mxu0 0
      %769 = vmatprep.subr.bf16.mxu0 0
      %770 = vmatpush1.bf16.msra.mxu0 0
      %771 = vmatprep.subr.bf16.mxu0 0
      %772 = vmatpush1.bf16.msra.mxu0 0
      %773 = vmatprep.subr.bf16.mxu0 0
      %774 = vmatpush1.bf16.msra.mxu0 0
      %775 = vmatprep.subr.bf16.mxu0 0
      %776 = vmatpush1.bf16.msra.mxu0 0
      %777 = vmatprep.subr.bf16.mxu0 0
      %778 = vmatpush1.bf16.msra.mxu0 0
      %779 = vmatprep.subr.bf16.mxu0 0
      %780 = vmatpush1.bf16.msra.mxu0 0
      %781 = vmatprep.subr.bf16.mxu0 0
      %782 = vmatpush1.bf16.msra.mxu0 0
      %783 = vmatprep.subr.bf16.mxu0 0
      %784 = vmatpush1.bf16.msra.mxu0 0
      %785 = vmatprep.mubr.bf16.mxu0 0
      %786 = vmatmul.mubr.bf16.gmra.mrb[0].mxu0 %v739
      %v787 = vpop.f32.mrb[0].mxu0
      %v788 = vadd.f32 %v736, %v787
      %v789 = vpop.f32.mrb[0].mxu0
      %v790 = vpop.f32.mrb[0].mxu0
      %v791 = vadd.f32 %v736, %v790
      %v792 = vpop.f32.mrb[0].mxu0
      %793 = vmatprep.mubr.bf16.mxu0 0
      %794 = vmatmul.mubr.bf16.gmra.mrb[0].mxu0 %v742
      %v795 = vpop.f32.mrb[0].mxu0
      %v796 = vadd.f32 %v736, %v795
      %v797 = vpop.f32.mrb[0].mxu0
      %v798 = vpop.f32.mrb[0].mxu0
      %v799 = vadd.f32 %v736, %v798
      %v800 = vpop.f32.mrb[0].mxu0
      %801 = vmatprep.mubr.bf16.mxu0 0
      %802 = vmatmul.mubr.bf16.gmra.mrb[0].mxu0 %v745
      %v803 = vpop.f32.mrb[0].mxu0
      %v804 = vadd.f32 %v736, %v803
      %v805 = vpop.f32.mrb[0].mxu0
      %v806 = vpop.f32.mrb[0].mxu0
      %v807 = vadd.f32 %v736, %v806
      %v808 = vpop.f32.mrb[0].mxu0
      %809 = vmatprep.mubr.bf16.mxu0 0
      %810 = vmatmul.mubr.bf16.gmra.mrb[0].mxu0 %v748
      %v811 = vpop.f32.mrb[0].mxu0
      %v812 = vadd.f32 %v736, %v811
      %v813 = vpop.f32.mrb[0].mxu0
      %v814 = vpop.f32.mrb[0].mxu0
      %v815 = vadd.f32 %v736, %v814
      %v816 = vpop.f32.mrb[0].mxu0
      %817 = vdwg.mxu0
      %818 = vst.msk [vmem:[%s302] sm:$0xff] %vm341, %v788
      %819 = vst.msk [vmem:[%s302 + $0x8] sm:$0xff] %vm341, %v791
      %820 = vst.msk [vmem:[%s302 + $0x10] sm:$0xff] %vm341, %v796
      %821 = vst.msk [vmem:[%s302 + $0x18] sm:$0xff] %vm341, %v799
      %822 = vst.msk [vmem:[%s302 + $0x20] sm:$0xff] %vm341, %v804
      %823 = vst.msk [vmem:[%s302 + $0x28] sm:$0xff] %vm341, %v807
      %824 = vst.msk [vmem:[%s302 + $0x30] sm:$0xff] %vm341, %v812
      %825 = vst.msk [vmem:[%s302 + $0x38] sm:$0xff] %vm341, %v815
      %s826 = smul.u32 8, %s18
      %p827 = scmp.lt.s32.totalorder %s826, 15
      %s828 = scalar_select %p827, %s826, 15
      %s829 = smul.addr %s828, 8
      %s830 = scalar_lea.vmem %s7, %s829
      // Predicated region
      $region49: #{lhsa_block.9} parent=47 // pred_check
        %p831 = pneg %p193
      $region50: #{lhsa_block.9} parent=47 // pred_check_branch
        %833 = sbr.rel (%p831) target = $region52
      $region51: #{lhsa_block.9} parent=47 // pred_region
        %s834 = smul.u32 8, %s18
      $region52: #{lhsa_block.9} parent=47 // pred_fallthru
        _
    $region48: #{lhsa_block.9} parent=5 // pred_fallthru
      _
    %p835 = scmp.le.s32.totalorder 2, %s13
    // Predicated region
    $region53: #{lhsa_block.9} parent=5 // pred_check
      %p836 = pneg %p835
    $region54: #{lhsa_block.9} parent=5 // pred_check_branch
      %838 = sbr.rel (%p836) target = $region56
    $region55: #{lhsa_block.9} parent=5 // pred_region
      %s839 = ssub.s32 %s13, 2
      // Predicated region
      $region57: #{lhsa_block.9} parent=55 // pred_check
        %p840 = pneg %p199
      $region58: #{lhsa_block.9} parent=55 // pred_check_branch
        %842 = sbr.rel (%p840) target = $region60
      $region59: #{lhsa_block.9} parent=55 // pred_region
        %s843 = smul.u32 8, %s19
        %p844 = scmp.lt.s32.totalorder %s843, 15
        %s845 = scalar_select %p844, %s843, 15
        %s846 = smul.addr %s845, 8
        %s847 = scalar_lea.vmem %s7, %s846
      $region60: #{lhsa_block.9} parent=55 // pred_fallthru
        _
    $region56: #{lhsa_block.9} parent=5 // pred_fallthru
      _
  $region6: #{lhsa_block.9} parent=0 // loop_footer
    %s17 = sadd.s32 1, %s13
  $region7: #{lhsa_block.9} parent=0 // loop_footer_branch
    %12 = sbr.rel target = $region3
  $region8: #{lhsa_block.9} parent=0 // loop_exit
    _

// kernel: lhsa_block.10
$region0: #{lhsa_block.10}
  #allocation0 [shape = 'u32[]', space=smem, size = 0x4, offset = 0x4, fixed_abs, tag = 'smem constant byte address 0x4 - core index']
  #allocation1 [shape = 'u32[144,128]{1,0:T(1,128)}', space=vmem, size = 0x12000, scoped, tag = 'internal scratch']
  %s0 = inlined_call_operand.vmem [shape: bf16[512,2], index: 0, kind: input, shape index: {}]
  %s1 = inlined_call_operand.vmem [shape: bf16[2,2], index: 1, kind: input, shape index: {}]
  %s2 = inlined_call_operand.vmem [shape: f32[1,2], index: 2, kind: input, shape index: {}]
  %s3 = inlined_call_operand.vmem [shape: f32[512,2], index: 3, kind: output, shape index: {}]
  %s4 = sld [smem:[#allocation0]]
  $region45: #{lhsa_block.10} parent=0
    _
  %s6 = ssub.s32 1, %s4
  %s7 = scalar_select 0, %s6, %s4
  loop: start=0, step=1, limit=4
  $region2: #{lhsa_block.10} parent=0 // loop_pre_header
    _
  $region3: #{lhsa_block.10} parent=0 // loop_header
    %s9 = sphi 0, %s13
    %p10 = scmp.ge.s32.totalorder %s9, 4
    %s19 = sphi 0, %s21
    %s22 = sphi 0, %s19
    %s23 = sphi 0, %s22
    %s39 = sphi 0, %s23
    %s43 = sphi 0, %s43
    %s45 = sphi 0, %s43
    %s46 = sphi 0, %s45
    %s60 = sphi 0, %s46
    %s64 = sphi 0, %s64
    %s66 = sphi 0, %s64
    %s67 = sphi 0, %s66
    %s81 = sphi 0, %s67
    %s87 = sphi 0, %s89
    %s90 = sphi 0, %s87
    %s91 = sphi 0, %s90
    %s107 = sphi 0, %s91
  $region4: #{lhsa_block.10} parent=0 // loop_header_branch
    %12 = sbr.rel (%p10) target = $region8
  $region5: #{lhsa_block.10} parent=0 // loop_body
    %s14 = ssub.s32 %s9, 1
    %s15 = ssub.s32 %s9, 2
    %s16 = sadd.s32 %s9, 1
    %s17 = ssub.s32 %s9, %s16
    %p18 = scmp.eq.s32.totalorder %s17, 0
    %s20 = sadd.s32 %s19, 1
    %s21 = scalar_select %p18, %s19, %s20
    %p24 = pneg %p18
    %p25 = scmp.eq.s32.totalorder %s9, 1
    %p26 = por %p24, %p25
    %p27 = scmp.ne.s32.totalorder %s19, %s22
    %p28 = scmp.eq.s32.totalorder %s9, 0
    %p29 = por %p27, %p28
    %p30 = scmp.ne.s32.totalorder %s19, %s22
    %p31 = scmp.eq.s32.totalorder %s14, 1
    %p32 = por %p30, %p31
    %p33 = scmp.ne.s32.totalorder %s22, %s23
    %p34 = scmp.eq.s32.totalorder %s14, 0
    %p35 = por %p33, %p34
    %p36 = scmp.ne.s32.totalorder %s22, %s23
    %p37 = scmp.eq.s32.totalorder %s15, 1
    %p38 = por %p36, %p37
    %p40 = scmp.ne.s32.totalorder %s23, %s39
    %p41 = scmp.eq.s32.totalorder %s15, 0
    %p42 = por %p40, %p41
    %s44 = sadd.s32 %s43, 1
    %p47 = scmp.eq.s32.totalorder %s9, 1
    %p48 = scmp.ne.s32.totalorder %s43, %s45
    %p49 = scmp.eq.s32.totalorder %s9, 0
    %p50 = por %p48, %p49
    %p51 = scmp.ne.s32.totalorder %s43, %s45
    %p52 = scmp.eq.s32.totalorder %s14, 1
    %p53 = por %p51, %p52
    %p54 = scmp.ne.s32.totalorder %s45, %s46
    %p55 = scmp.eq.s32.totalorder %s14, 0
    %p56 = por %p54, %p55
    %p57 = scmp.ne.s32.totalorder %s45, %s46
    %p58 = scmp.eq.s32.totalorder %s15, 1
    %p59 = por %p57, %p58
    %p61 = scmp.ne.s32.totalorder %s46, %s60
    %p62 = scmp.eq.s32.totalorder %s15, 0
    %p63 = por %p61, %p62
    %s65 = sadd.s32 %s64, 1
    %p68 = scmp.eq.s32.totalorder %s9, 1
    %p69 = scmp.ne.s32.totalorder %s64, %s66
    %p70 = scmp.eq.s32.totalorder %s9, 0
    %p71 = por %p69, %p70
    %p72 = scmp.ne.s32.totalorder %s64, %s66
    %p73 = scmp.eq.s32.totalorder %s14, 1
    %p74 = por %p72, %p73
    %p75 = scmp.ne.s32.totalorder %s66, %s67
    %p76 = scmp.eq.s32.totalorder %s14, 0
    %p77 = por %p75, %p76
    %p78 = scmp.ne.s32.totalorder %s66, %s67
    %p79 = scmp.eq.s32.totalorder %s15, 1
    %p80 = por %p78, %p79
    %p82 = scmp.ne.s32.totalorder %s67, %s81
    %p83 = scmp.eq.s32.totalorder %s15, 0
    %p84 = por %p82, %p83
    %s85 = ssub.s32 %s9, %s16
    %p86 = scmp.eq.s32.totalorder %s85, 0
    %s88 = sadd.s32 %s87, 1
    %s89 = scalar_select %p86, %s87, %s88
    %p92 = pneg %p86
    %p93 = scmp.eq.s32.totalorder %s9, 1
    %p94 = por %p92, %p93
    %p95 = scmp.ne.s32.totalorder %s87, %s90
    %p96 = scmp.eq.s32.totalorder %s9, 0
    %p97 = por %p95, %p96
    %p98 = scmp.ne.s32.totalorder %s87, %s90
    %p99 = scmp.eq.s32.totalorder %s14, 1
    %p100 = por %p98, %p99
    %p101 = scmp.ne.s32.totalorder %s90, %s91
    %p102 = scmp.eq.s32.totalorder %s14, 0
    %p103 = por %p101, %p102
    %p104 = scmp.ne.s32.totalorder %s90, %s91
    %p105 = scmp.eq.s32.totalorder %s15, 1
    %p106 = por %p104, %p105
    %p108 = scmp.ne.s32.totalorder %s91, %s107
    %p109 = scmp.eq.s32.totalorder %s15, 0
    %p110 = por %p108, %p109
    %p111 = scmp.le.s32.totalorder 1, %s9
    %p112 = scmp.lt.s32.totalorder %s9, 3
    %p113 = pnand %p111, %p112
    %p114 = pneg %p113
    // Predicated region
    $region9: #{lhsa_block.10} parent=5 // pred_check
      _
    $region10: #{lhsa_block.10} parent=5 // pred_check_branch
      %116 = sbr.rel (%p113) target = $region12
    $region11: #{lhsa_block.10} parent=5 // pred_region
      %s117 = ssub.s32 %s9, 1
      // Predicated region
      $region13: #{lhsa_block.10} parent=11 // pred_check
        %p118 = pneg %p56
      $region14: #{lhsa_block.10} parent=11 // pred_check_branch
        %120 = sbr.rel (%p118) target = $region16
      $region15: #{lhsa_block.10} parent=11 // pred_region
        _
      $region16: #{lhsa_block.10} parent=11 // pred_fallthru
        _
      // Predicated region
      $region17: #{lhsa_block.10} parent=11 // pred_check
        %p121 = pneg %p77
      $region18: #{lhsa_block.10} parent=11 // pred_check_branch
        %123 = sbr.rel (%p121) target = $region20
      $region19: #{lhsa_block.10} parent=11 // pred_region
        _
      $region20: #{lhsa_block.10} parent=11 // pred_fallthru
        _
    $region12: #{lhsa_block.10} parent=5 // pred_fallthru
      _
    %p124 = scmp.lt.s32.totalorder %s9, 2
    // Predicated region
    $region21: #{lhsa_block.10} parent=5 // pred_check
      %p125 = pneg %p124
    $region22: #{lhsa_block.10} parent=5 // pred_check_branch
      %127 = sbr.rel (%p125) target = $region24
    $region23: #{lhsa_block.10} parent=5 // pred_region
      // Predicated region
      $region25: #{lhsa_block.10} parent=23 // pred_check
        %p128 = pneg %p29
      $region26: #{lhsa_block.10} parent=23 // pred_check_branch
        %130 = sbr.rel (%p128) target = $region28
      $region27: #{lhsa_block.10} parent=23 // pred_region
        %s131 = smul.u32 32, %s9
        %p132 = scmp.lt.s32.totalorder %s131, 63
        %s133 = scalar_select %p132, %s131, 63
        %s134 = smul.addr %s133, 4
        %s135 = scalar_lea.vmem %s0, %s134
        %s136 = smul.u32 32, %s9
      $region28: #{lhsa_block.10} parent=23 // pred_fallthru
        _
    $region24: #{lhsa_block.10} parent=5 // pred_fallthru
      _
    %p137 = scmp.le.s32.totalorder 1, %s9
    %p138 = scmp.lt.s32.totalorder %s9, 3
    %p139 = pnand %p137, %p138
    %p140 = pneg %p139
    // Predicated region
    $region29: #{lhsa_block.10} parent=5 // pred_check
      _
    $region30: #{lhsa_block.10} parent=5 // pred_check_branch
      %142 = sbr.rel (%p139) target = $region32
    $region31: #{lhsa_block.10} parent=5 // pred_region
      %s143 = ssub.s32 %s9, 1
      %s144 = smul.u32 32, %s14
      %p145 = scmp.lt.s32.totalorder %s144, 63
      %s146 = scalar_select %p145, %s144, 63
      %s147 = smul.addr %s146, 4
      %s148 = scalar_lea.vmem %s0, %s147
      %p149 = pneg %p35
      %p150 = pneg %p32
      %p151 = pneg %p56
      %p152 = pneg %p53
      %p153 = pneg %p77
      %p154 = pneg %p74
      %p155 = pneg %p103
      %p156 = pneg %p100
      %s157 = smul.u32 32, %s14
      %p158 = scmp.lt.s32.totalorder %s157, 63
      %s159 = scalar_select %p158, %s157, 63
      %s160 = smul.addr %s159, 8
      %s161 = scalar_lea.vmem %s3, %s160
      %s162 = smul.u32 32, %s14
      %p163 = scmp.lt.s32.totalorder %s162, 63
      %s164 = scalar_select %p163, %s162, 63
      %s165 = smul.addr %s164, 4
      %s166 = scalar_lea.vmem %s0, %s165
      %s167 = smul.u32 32, %s14
      %s168 = smul.u32 32, %s14
      %p169 = scmp.lt.s32.totalorder %s168, 63
      %s170 = scalar_select %p169, %s168, 63
      %s171 = smul.addr %s170, 8
      %s172 = scalar_lea.vmem %s3, %s171
      %s173 = smul.u32 32, %s14
      %v175 = vld [vmem:[%s166] sm:$0xf]
      %v176 = vld [vmem:[%s166 + $0x4] sm:$0xf]
      %v177 = vld [vmem:[%s166 + $0x8] sm:$0xf]
      %v178 = vld [vmem:[%s166 + $0xc] sm:$0xf]
      %v179 = vld [vmem:[%s166 + $0x10] sm:$0xf]
      %v180 = vld [vmem:[%s166 + $0x14] sm:$0xf]
      %v181 = vld [vmem:[%s166 + $0x18] sm:$0xf]
      %v182 = vld [vmem:[%s166 + $0x1c] sm:$0xf]
      %v183 = vld [vmem:[%s166 + $0x20] sm:$0xf]
      %v184 = vld [vmem:[%s166 + $0x24] sm:$0xf]
      %v185 = vld [vmem:[%s166 + $0x28] sm:$0xf]
      %v186 = vld [vmem:[%s166 + $0x2c] sm:$0xf]
      %v187 = vld [vmem:[%s166 + $0x30] sm:$0xf]
      %v188 = vld [vmem:[%s166 + $0x34] sm:$0xf]
      %v189 = vld [vmem:[%s166 + $0x38] sm:$0xf]
      %v190 = vld [vmem:[%s166 + $0x3c] sm:$0xf]
      %v191 = vld [vmem:[%s166 + $0x40] sm:$0xf]
      %v192 = vld [vmem:[%s166 + $0x44] sm:$0xf]
      %v193 = vld [vmem:[%s166 + $0x48] sm:$0xf]
      %v194 = vld [vmem:[%s166 + $0x4c] sm:$0xf]
      %v195 = vld [vmem:[%s166 + $0x50] sm:$0xf]
      %v196 = vld [vmem:[%s166 + $0x54] sm:$0xf]
      %v197 = vld [vmem:[%s166 + $0x58] sm:$0xf]
      %v198 = vld [vmem:[%s166 + $0x5c] sm:$0xf]
      %v199 = vld [vmem:[%s166 + $0x60] sm:$0xf]
      %v200 = vld [vmem:[%s166 + $0x64] sm:$0xf]
      %v201 = vld [vmem:[%s166 + $0x68] sm:$0xf]
      %v202 = vld [vmem:[%s166 + $0x6c] sm:$0xf]
      %v203 = vld [vmem:[%s166 + $0x70] sm:$0xf]
      %v204 = vld [vmem:[%s166 + $0x74] sm:$0xf]
      %v205 = vld [vmem:[%s166 + $0x78] sm:$0xf]
      %v206 = vld [vmem:[%s166 + $0x7c] sm:$0xf]
      %v207 = vld [vmem:[%s1] sm:$0x1]
      %v208 = vld [vmem:[%s2] sm:$0x1]
      %v210 = vlaneseq
      %v211 = vshrl.u32 %v210, 7
      %v212 = vsub.s32 0, %v211
      %v213 = vrot.slane %v208, %v212
      %v247 = vunpack.c.l.b16 %v175
      %v248 = vunpack.c.l.b16 %v176
      %v249 = vunpack.c.l.b16 %v177
      %v250 = vunpack.c.l.b16 %v178
      %v251 = vunpack.c.l.b16 %v179
      %v252 = vunpack.c.l.b16 %v180
      %v253 = vunpack.c.l.b16 %v181
      %v254 = vunpack.c.l.b16 %v182
      %v255 = vunpack.c.l.b16 %v183
      %v256 = vunpack.c.l.b16 %v184
      %v257 = vunpack.c.l.b16 %v185
      %v258 = vunpack.c.l.b16 %v186
      %v259 = vunpack.c.l.b16 %v187
      %v260 = vunpack.c.l.b16 %v188
      %v261 = vunpack.c.l.b16 %v189
      %v262 = vunpack.c.l.b16 %v190
      %v263 = vunpack.c.l.b16 %v191
      %v264 = vunpack.c.l.b16 %v192
      %v265 = vunpack.c.l.b16 %v193
      %v266 = vunpack.c.l.b16 %v194
      %v267 = vunpack.c.l.b16 %v195
      %v268 = vunpack.c.l.b16 %v196
      %v269 = vunpack.c.l.b16 %v197
      %v270 = vunpack.c.l.b16 %v198
      %v271 = vunpack.c.l.b16 %v199
      %v272 = vunpack.c.l.b16 %v200
      %v273 = vunpack.c.l.b16 %v201
      %v274 = vunpack.c.l.b16 %v202
      %v275 = vunpack.c.l.b16 %v203
      %v276 = vunpack.c.l.b16 %v204
      %v277 = vunpack.c.l.b16 %v205
      %v278 = vunpack.c.l.b16 %v206
      %v279 = vpack.c.b16 %v248, %v247
      %v280 = vpack.c.b16 %v250, %v249
      %v281 = vpack.c.b16 %v252, %v251
      %v282 = vpack.c.b16 %v254, %v253
      %v283 = vpack.c.b16 %v256, %v255
      %v284 = vpack.c.b16 %v258, %v257
      %v285 = vpack.c.b16 %v260, %v259
      %v286 = vpack.c.b16 %v262, %v261
      %v287 = vpack.c.b16 %v264, %v263
      %v288 = vpack.c.b16 %v266, %v265
      %v289 = vpack.c.b16 %v268, %v267
      %v290 = vpack.c.b16 %v270, %v269
      %v291 = vpack.c.b16 %v272, %v271
      %v292 = vpack.c.b16 %v274, %v273
      %v293 = vpack.c.b16 %v276, %v275
      %v294 = vpack.c.b16 %v278, %v277
      %vm295 = vcmask 15360
      %v297 = vsel %vm295, %v279, 0
      %v300 = vsel %vm295, %v280, 0
      %v303 = vsel %vm295, %v281, 0
      %v306 = vsel %vm295, %v282, 0
      %v309 = vsel %vm295, %v283, 0
      %v312 = vsel %vm295, %v284, 0
      %v315 = vsel %vm295, %v285, 0
      %v318 = vsel %vm295, %v286, 0
      %v321 = vsel %vm295, %v287, 0
      %v324 = vsel %vm295, %v288, 0
      %v327 = vsel %vm295, %v289, 0
      %v330 = vsel %vm295, %v290, 0
      %v333 = vsel %vm295, %v291, 0
      %v336 = vsel %vm295, %v292, 0
      %v339 = vsel %vm295, %v293, 0
      %v342 = vsel %vm295, %v294, 0
      %vm344 = vcmask 1040384
      %v346 = vsel %vm344, %v207, 0
      %348 = vmatprep.subr.bf16.mxu0 0
      %349 = vmatpush1.bf16.msra.mxu0 %v346
      %350 = vmatprep.subr.bf16.mxu0 0
      %351 = vmatpush1.bf16.msra.mxu0 0
      %352 = vmatprep.subr.bf16.mxu0 0
      %353 = vmatpush1.bf16.msra.mxu0 0
      %354 = vmatprep.subr.bf16.mxu0 0
      %355 = vmatpush1.bf16.msra.mxu0 0
      %356 = vmatprep.subr.bf16.mxu0 0
      %357 = vmatpush1.bf16.msra.mxu0 0
      %358 = vmatprep.subr.bf16.mxu0 0
      %359 = vmatpush1.bf16.msra.mxu0 0
      %360 = vmatprep.subr.bf16.mxu0 0
      %361 = vmatpush1.bf16.msra.mxu0 0
      %362 = vmatprep.subr.bf16.mxu0 0
      %363 = vmatpush1.bf16.msra.mxu0 0
      %364 = vmatprep.subr.bf16.mxu0 0
      %365 = vmatpush1.bf16.msra.mxu0 0
      %366 = vmatprep.subr.bf16.mxu0 0
      %367 = vmatpush1.bf16.msra.mxu0 0
      %368 = vmatprep.subr.bf16.mxu0 0
      %369 = vmatpush1.bf16.msra.mxu0 0
      %370 = vmatprep.subr.bf16.mxu0 0
      %371 = vmatpush1.bf16.msra.mxu0 0
      %372 = vmatprep.subr.bf16.mxu0 0
      %373 = vmatpush1.bf16.msra.mxu0 0
      %374 = vmatprep.subr.bf16.mxu0 0
      %375 = vmatpush1.bf16.msra.mxu0 0
      %376 = vmatprep.subr.bf16.mxu0 0
      %377 = vmatpush1.bf16.msra.mxu0 0
      %378 = vmatprep.subr.bf16.mxu0 0
      %379 = vmatpush1.bf16.msra.mxu0 0
      %380 = vmatprep.mubr.bf16.mxu0 0
      %381 = vmatmul.mubr.bf16.gmra.mrb[0].mxu0 %v297
      %v382 = vpop.f32.mrb[0].mxu0
      %v383 = vadd.f32 %v213, %v382
      %v384 = vpop.f32.mrb[0].mxu0
      %v385 = vpop.f32.mrb[0].mxu0
      %v386 = vadd.f32 %v213, %v385
      %v387 = vpop.f32.mrb[0].mxu0
      %388 = vmatprep.mubr.bf16.mxu0 0
      %389 = vmatmul.mubr.bf16.gmra.mrb[0].mxu0 %v300
      %v390 = vpop.f32.mrb[0].mxu0
      %v391 = vadd.f32 %v213, %v390
      %v392 = vpop.f32.mrb[0].mxu0
      %v393 = vpop.f32.mrb[0].mxu0
      %v394 = vadd.f32 %v213, %v393
      %v395 = vpop.f32.mrb[0].mxu0
      %396 = vmatprep.mubr.bf16.mxu0 0
      %397 = vmatmul.mubr.bf16.gmra.mrb[0].mxu0 %v303
      %v398 = vpop.f32.mrb[0].mxu0
      %v399 = vadd.f32 %v213, %v398
      %v400 = vpop.f32.mrb[0].mxu0
      %v401 = vpop.f32.mrb[0].mxu0
      %v402 = vadd.f32 %v213, %v401
      %v403 = vpop.f32.mrb[0].mxu0
      %404 = vmatprep.mubr.bf16.mxu0 0
      %405 = vmatmul.mubr.bf16.gmra.mrb[0].mxu0 %v306
      %v406 = vpop.f32.mrb[0].mxu0
      %v407 = vadd.f32 %v213, %v406
      %v408 = vpop.f32.mrb[0].mxu0
      %v409 = vpop.f32.mrb[0].mxu0
      %v410 = vadd.f32 %v213, %v409
      %v411 = vpop.f32.mrb[0].mxu0
      %412 = vmatprep.mubr.bf16.mxu0 0
      %413 = vmatmul.mubr.bf16.gmra.mrb[0].mxu0 %v309
      %v414 = vpop.f32.mrb[0].mxu0
      %v415 = vadd.f32 %v213, %v414
      %v416 = vpop.f32.mrb[0].mxu0
      %v417 = vpop.f32.mrb[0].mxu0
      %v418 = vadd.f32 %v213, %v417
      %v419 = vpop.f32.mrb[0].mxu0
      %420 = vmatprep.mubr.bf16.mxu0 0
      %421 = vmatmul.mubr.bf16.gmra.mrb[0].mxu0 %v312
      %v422 = vpop.f32.mrb[0].mxu0
      %v423 = vadd.f32 %v213, %v422
      %v424 = vpop.f32.mrb[0].mxu0
      %v425 = vpop.f32.mrb[0].mxu0
      %v426 = vadd.f32 %v213, %v425
      %v427 = vpop.f32.mrb[0].mxu0
      %428 = vmatprep.mubr.bf16.mxu0 0
      %429 = vmatmul.mubr.bf16.gmra.mrb[0].mxu0 %v315
      %v430 = vpop.f32.mrb[0].mxu0
      %v431 = vadd.f32 %v213, %v430
      %v432 = vpop.f32.mrb[0].mxu0
      %v433 = vpop.f32.mrb[0].mxu0
      %v434 = vadd.f32 %v213, %v433
      %v435 = vpop.f32.mrb[0].mxu0
      %436 = vmatprep.mubr.bf16.mxu0 0
      %437 = vmatmul.mubr.bf16.gmra.mrb[0].mxu0 %v318
      %v438 = vpop.f32.mrb[0].mxu0
      %v439 = vadd.f32 %v213, %v438
      %v440 = vpop.f32.mrb[0].mxu0
      %v441 = vpop.f32.mrb[0].mxu0
      %v442 = vadd.f32 %v213, %v441
      %v443 = vpop.f32.mrb[0].mxu0
      %444 = vmatprep.mubr.bf16.mxu0 0
      %445 = vmatmul.mubr.bf16.gmra.mrb[0].mxu0 %v321
      %v446 = vpop.f32.mrb[0].mxu0
      %v447 = vadd.f32 %v213, %v446
      %v448 = vpop.f32.mrb[0].mxu0
      %v449 = vpop.f32.mrb[0].mxu0
      %v450 = vadd.f32 %v213, %v449
      %v451 = vpop.f32.mrb[0].mxu0
      %452 = vmatprep.mubr.bf16.mxu0 0
      %453 = vmatmul.mubr.bf16.gmra.mrb[0].mxu0 %v324
      %v454 = vpop.f32.mrb[0].mxu0
      %v455 = vadd.f32 %v213, %v454
      %v456 = vpop.f32.mrb[0].mxu0
      %v457 = vpop.f32.mrb[0].mxu0
      %v458 = vadd.f32 %v213, %v457
      %v459 = vpop.f32.mrb[0].mxu0
      %460 = vmatprep.mubr.bf16.mxu0 0
      %461 = vmatmul.mubr.bf16.gmra.mrb[0].mxu0 %v327
      %v462 = vpop.f32.mrb[0].mxu0
      %v463 = vadd.f32 %v213, %v462
      %v464 = vpop.f32.mrb[0].mxu0
      %v465 = vpop.f32.mrb[0].mxu0
      %v466 = vadd.f32 %v213, %v465
      %v467 = vpop.f32.mrb[0].mxu0
      %468 = vmatprep.mubr.bf16.mxu0 0
      %469 = vmatmul.mubr.bf16.gmra.mrb[0].mxu0 %v330
      %v470 = vpop.f32.mrb[0].mxu0
      %v471 = vadd.f32 %v213, %v470
      %v472 = vpop.f32.mrb[0].mxu0
      %v473 = vpop.f32.mrb[0].mxu0
      %v474 = vadd.f32 %v213, %v473
      %v475 = vpop.f32.mrb[0].mxu0
      %476 = vmatprep.mubr.bf16.mxu0 0
      %477 = vmatmul.mubr.bf16.gmra.mrb[0].mxu0 %v333
      %v478 = vpop.f32.mrb[0].mxu0
      %v479 = vadd.f32 %v213, %v478
      %v480 = vpop.f32.mrb[0].mxu0
      %v481 = vpop.f32.mrb[0].mxu0
      %v482 = vadd.f32 %v213, %v481
      %v483 = vpop.f32.mrb[0].mxu0
      %484 = vmatprep.mubr.bf16.mxu0 0
      %485 = vmatmul.mubr.bf16.gmra.mrb[0].mxu0 %v336
      %v486 = vpop.f32.mrb[0].mxu0
      %v487 = vadd.f32 %v213, %v486
      %v488 = vpop.f32.mrb[0].mxu0
      %v489 = vpop.f32.mrb[0].mxu0
      %v490 = vadd.f32 %v213, %v489
      %v491 = vpop.f32.mrb[0].mxu0
      %492 = vmatprep.mubr.bf16.mxu0 0
      %493 = vmatmul.mubr.bf16.gmra.mrb[0].mxu0 %v339
      %v494 = vpop.f32.mrb[0].mxu0
      %v495 = vadd.f32 %v213, %v494
      %v496 = vpop.f32.mrb[0].mxu0
      %v497 = vpop.f32.mrb[0].mxu0
      %v498 = vadd.f32 %v213, %v497
      %v499 = vpop.f32.mrb[0].mxu0
      %500 = vmatprep.mubr.bf16.mxu0 0
      %501 = vmatmul.mubr.bf16.gmra.mrb[0].mxu0 %v342
      %v502 = vpop.f32.mrb[0].mxu0
      %v503 = vadd.f32 %v213, %v502
      %v504 = vpop.f32.mrb[0].mxu0
      %v505 = vpop.f32.mrb[0].mxu0
      %v506 = vadd.f32 %v213, %v505
      %v507 = vpop.f32.mrb[0].mxu0
      %508 = vdwg.mxu0
      %509 = vst.msk [vmem:[%s172] sm:$0xff] %vm295, %v383
      %510 = vst.msk [vmem:[%s172 + $0x8] sm:$0xff] %vm295, %v386
      %511 = vst.msk [vmem:[%s172 + $0x10] sm:$0xff] %vm295, %v391
      %512 = vst.msk [vmem:[%s172 + $0x18] sm:$0xff] %vm295, %v394
      %513 = vst.msk [vmem:[%s172 + $0x20] sm:$0xff] %vm295, %v399
      %514 = vst.msk [vmem:[%s172 + $0x28] sm:$0xff] %vm295, %v402
      %515 = vst.msk [vmem:[%s172 + $0x30] sm:$0xff] %vm295, %v407
      %516 = vst.msk [vmem:[%s172 + $0x38] sm:$0xff] %vm295, %v410
      %517 = vst.msk [vmem:[%s172 + $0x40] sm:$0xff] %vm295, %v415
      %518 = vst.msk [vmem:[%s172 + $0x48] sm:$0xff] %vm295, %v418
      %519 = vst.msk [vmem:[%s172 + $0x50] sm:$0xff] %vm295, %v423
      %520 = vst.msk [vmem:[%s172 + $0x58] sm:$0xff] %vm295, %v426
      %521 = vst.msk [vmem:[%s172 + $0x60] sm:$0xff] %vm295, %v431
      %522 = vst.msk [vmem:[%s172 + $0x68] sm:$0xff] %vm295, %v434
      %523 = vst.msk [vmem:[%s172 + $0x70] sm:$0xff] %vm295, %v439
      %524 = vst.msk [vmem:[%s172 + $0x78] sm:$0xff] %vm295, %v442
      %525 = vst.msk [vmem:[%s172 + $0x80] sm:$0xff] %vm295, %v447
      %526 = vst.msk [vmem:[%s172 + $0x88] sm:$0xff] %vm295, %v450
      %527 = vst.msk [vmem:[%s172 + $0x90] sm:$0xff] %vm295, %v455
      %528 = vst.msk [vmem:[%s172 + $0x98] sm:$0xff] %vm295, %v458
      %529 = vst.msk [vmem:[%s172 + $0xa0] sm:$0xff] %vm295, %v463
      %530 = vst.msk [vmem:[%s172 + $0xa8] sm:$0xff] %vm295, %v466
      %531 = vst.msk [vmem:[%s172 + $0xb0] sm:$0xff] %vm295, %v471
      %532 = vst.msk [vmem:[%s172 + $0xb8] sm:$0xff] %vm295, %v474
      %533 = vst.msk [vmem:[%s172 + $0xc0] sm:$0xff] %vm295, %v479
      %534 = vst.msk [vmem:[%s172 + $0xc8] sm:$0xff] %vm295, %v482
      %535 = vst.msk [vmem:[%s172 + $0xd0] sm:$0xff] %vm295, %v487
      %536 = vst.msk [vmem:[%s172 + $0xd8] sm:$0xff] %vm295, %v490
      %537 = vst.msk [vmem:[%s172 + $0xe0] sm:$0xff] %vm295, %v495
      %538 = vst.msk [vmem:[%s172 + $0xe8] sm:$0xff] %vm295, %v498
      %539 = vst.msk [vmem:[%s172 + $0xf0] sm:$0xff] %vm295, %v503
      %540 = vst.msk [vmem:[%s172 + $0xf8] sm:$0xff] %vm295, %v506
      %s541 = smul.u32 32, %s14
      %p542 = scmp.lt.s32.totalorder %s541, 63
      %s543 = scalar_select %p542, %s541, 63
      %s544 = smul.addr %s543, 8
      %s545 = scalar_lea.vmem %s3, %s544
      // Predicated region
      $region33: #{lhsa_block.10} parent=31 // pred_check
        %p546 = pneg %p100
      $region34: #{lhsa_block.10} parent=31 // pred_check_branch
        %548 = sbr.rel (%p546) target = $region36
      $region35: #{lhsa_block.10} parent=31 // pred_region
        %s549 = smul.u32 32, %s14
      $region36: #{lhsa_block.10} parent=31 // pred_fallthru
        _
    $region32: #{lhsa_block.10} parent=5 // pred_fallthru
      _
    %p550 = scmp.le.s32.totalorder 2, %s9
    // Predicated region
    $region37: #{lhsa_block.10} parent=5 // pred_check
      %p551 = pneg %p550
    $region38: #{lhsa_block.10} parent=5 // pred_check_branch
      %553 = sbr.rel (%p551) target = $region40
    $region39: #{lhsa_block.10} parent=5 // pred_region
      %s554 = ssub.s32 %s9, 2
      // Predicated region
      $region41: #{lhsa_block.10} parent=39 // pred_check
        %p555 = pneg %p106
      $region42: #{lhsa_block.10} parent=39 // pred_check_branch
        %557 = sbr.rel (%p555) target = $region44
      $region43: #{lhsa_block.10} parent=39 // pred_region
        %s558 = smul.u32 32, %s15
        %p559 = scmp.lt.s32.totalorder %s558, 63
        %s560 = scalar_select %p559, %s558, 63
        %s561 = smul.addr %s560, 8
        %s562 = scalar_lea.vmem %s3, %s561
      $region44: #{lhsa_block.10} parent=39 // pred_fallthru
        _
    $region40: #{lhsa_block.10} parent=5 // pred_fallthru
      _
  $region6: #{lhsa_block.10} parent=0 // loop_footer
    %s13 = sadd.s32 1, %s9
  $region7: #{lhsa_block.10} parent=0 // loop_footer_branch
    %8 = sbr.rel target = $region3
  $region8: #{lhsa_block.10} parent=0 // loop_exit
    _

// kernel: lhsa_block.11
$region0: #{lhsa_block.11}
  #allocation0 [shape = 'u32[]', space=smem, size = 0x4, offset = 0x4, fixed_abs, tag = 'smem constant byte address 0x4 - core index']
  #allocation1 [shape = 'u32[144,128]{1,0:T(1,128)}', space=vmem, size = 0x12000, scoped, tag = 'internal scratch']
  %s0 = inlined_call_operand.vmem [shape: f32[32,42], index: 0, kind: input, shape index: {}]
  %s1 = inlined_call_operand.vmem [shape: f32[9,32], index: 1, kind: input, shape index: {}]
  %s2 = inlined_call_operand.vmem [shape: f32[1,32], index: 2, kind: input, shape index: {}]
  %s3 = inlined_call_operand.vmem [shape: f32[32,32], index: 3, kind: output, shape index: {}]
  %s4 = sld [smem:[#allocation0]]
  $region45: #{lhsa_block.11} parent=0
    _
  %s6 = ssub.s32 1, %s4
  %s7 = scalar_select 0, %s6, %s4
  loop: start=0, step=1, limit=4
  $region2: #{lhsa_block.11} parent=0 // loop_pre_header
    _
  $region3: #{lhsa_block.11} parent=0 // loop_header
    %s9 = sphi 0, %s13
    %p10 = scmp.ge.s32.totalorder %s9, 4
    %s19 = sphi 0, %s21
    %s22 = sphi 0, %s19
    %s23 = sphi 0, %s22
    %s39 = sphi 0, %s23
    %s43 = sphi 0, %s43
    %s45 = sphi 0, %s43
    %s46 = sphi 0, %s45
    %s60 = sphi 0, %s46
    %s64 = sphi 0, %s64
    %s66 = sphi 0, %s64
    %s67 = sphi 0, %s66
    %s81 = sphi 0, %s67
    %s87 = sphi 0, %s89
    %s90 = sphi 0, %s87
    %s91 = sphi 0, %s90
    %s107 = sphi 0, %s91
  $region4: #{lhsa_block.11} parent=0 // loop_header_branch
    %12 = sbr.rel (%p10) target = $region8
  $region5: #{lhsa_block.11} parent=0 // loop_body
    %s14 = ssub.s32 %s9, 1
    %s15 = ssub.s32 %s9, 2
    %s16 = sadd.s32 %s9, 1
    %s17 = ssub.s32 %s9, %s16
    %p18 = scmp.eq.s32.totalorder %s17, 0
    %s20 = sadd.s32 %s19, 1
    %s21 = scalar_select %p18, %s19, %s20
    %p24 = pneg %p18
    %p25 = scmp.eq.s32.totalorder %s9, 1
    %p26 = por %p24, %p25
    %p27 = scmp.ne.s32.totalorder %s19, %s22
    %p28 = scmp.eq.s32.totalorder %s9, 0
    %p29 = por %p27, %p28
    %p30 = scmp.ne.s32.totalorder %s19, %s22
    %p31 = scmp.eq.s32.totalorder %s14, 1
    %p32 = por %p30, %p31
    %p33 = scmp.ne.s32.totalorder %s22, %s23
    %p34 = scmp.eq.s32.totalorder %s14, 0
    %p35 = por %p33, %p34
    %p36 = scmp.ne.s32.totalorder %s22, %s23
    %p37 = scmp.eq.s32.totalorder %s15, 1
    %p38 = por %p36, %p37
    %p40 = scmp.ne.s32.totalorder %s23, %s39
    %p41 = scmp.eq.s32.totalorder %s15, 0
    %p42 = por %p40, %p41
    %s44 = sadd.s32 %s43, 1
    %p47 = scmp.eq.s32.totalorder %s9, 1
    %p48 = scmp.ne.s32.totalorder %s43, %s45
    %p49 = scmp.eq.s32.totalorder %s9, 0
    %p50 = por %p48, %p49
    %p51 = scmp.ne.s32.totalorder %s43, %s45
    %p52 = scmp.eq.s32.totalorder %s14, 1
    %p53 = por %p51, %p52
    %p54 = scmp.ne.s32.totalorder %s45, %s46
    %p55 = scmp.eq.s32.totalorder %s14, 0
    %p56 = por %p54, %p55
    %p57 = scmp.ne.s32.totalorder %s45, %s46
    %p58 = scmp.eq.s32.totalorder %s15, 1
    %p59 = por %p57, %p58
    %p61 = scmp.ne.s32.totalorder %s46, %s60
    %p62 = scmp.eq.s32.totalorder %s15, 0
    %p63 = por %p61, %p62
    %s65 = sadd.s32 %s64, 1
    %p68 = scmp.eq.s32.totalorder %s9, 1
    %p69 = scmp.ne.s32.totalorder %s64, %s66
    %p70 = scmp.eq.s32.totalorder %s9, 0
    %p71 = por %p69, %p70
    %p72 = scmp.ne.s32.totalorder %s64, %s66
    %p73 = scmp.eq.s32.totalorder %s14, 1
    %p74 = por %p72, %p73
    %p75 = scmp.ne.s32.totalorder %s66, %s67
    %p76 = scmp.eq.s32.totalorder %s14, 0
    %p77 = por %p75, %p76
    %p78 = scmp.ne.s32.totalorder %s66, %s67
    %p79 = scmp.eq.s32.totalorder %s15, 1
    %p80 = por %p78, %p79
    %p82 = scmp.ne.s32.totalorder %s67, %s81
    %p83 = scmp.eq.s32.totalorder %s15, 0
    %p84 = por %p82, %p83
    %s85 = ssub.s32 %s9, %s16
    %p86 = scmp.eq.s32.totalorder %s85, 0
    %s88 = sadd.s32 %s87, 1
    %s89 = scalar_select %p86, %s87, %s88
    %p92 = pneg %p86
    %p93 = scmp.eq.s32.totalorder %s9, 1
    %p94 = por %p92, %p93
    %p95 = scmp.ne.s32.totalorder %s87, %s90
    %p96 = scmp.eq.s32.totalorder %s9, 0
    %p97 = por %p95, %p96
    %p98 = scmp.ne.s32.totalorder %s87, %s90
    %p99 = scmp.eq.s32.totalorder %s14, 1
    %p100 = por %p98, %p99
    %p101 = scmp.ne.s32.totalorder %s90, %s91
    %p102 = scmp.eq.s32.totalorder %s14, 0
    %p103 = por %p101, %p102
    %p104 = scmp.ne.s32.totalorder %s90, %s91
    %p105 = scmp.eq.s32.totalorder %s15, 1
    %p106 = por %p104, %p105
    %p108 = scmp.ne.s32.totalorder %s91, %s107
    %p109 = scmp.eq.s32.totalorder %s15, 0
    %p110 = por %p108, %p109
    %p111 = scmp.le.s32.totalorder 1, %s9
    %p112 = scmp.lt.s32.totalorder %s9, 3
    %p113 = pnand %p111, %p112
    %p114 = pneg %p113
    // Predicated region
    $region9: #{lhsa_block.11} parent=5 // pred_check
      _
    $region10: #{lhsa_block.11} parent=5 // pred_check_branch
      %116 = sbr.rel (%p113) target = $region12
    $region11: #{lhsa_block.11} parent=5 // pred_region
      %s117 = ssub.s32 %s9, 1
      // Predicated region
      $region13: #{lhsa_block.11} parent=11 // pred_check
        %p118 = pneg %p56
      $region14: #{lhsa_block.11} parent=11 // pred_check_branch
        %120 = sbr.rel (%p118) target = $region16
      $region15: #{lhsa_block.11} parent=11 // pred_region
        _
      $region16: #{lhsa_block.11} parent=11 // pred_fallthru
        _
      // Predicated region
      $region17: #{lhsa_block.11} parent=11 // pred_check
        %p121 = pneg %p77
      $region18: #{lhsa_block.11} parent=11 // pred_check_branch
        %123 = sbr.rel (%p121) target = $region20
      $region19: #{lhsa_block.11} parent=11 // pred_region
        _
      $region20: #{lhsa_block.11} parent=11 // pred_fallthru
        _
    $region12: #{lhsa_block.11} parent=5 // pred_fallthru
      _
    %p124 = scmp.lt.s32.totalorder %s9, 2
    // Predicated region
    $region21: #{lhsa_block.11} parent=5 // pred_check
      %p125 = pneg %p124
    $region22: #{lhsa_block.11} parent=5 // pred_check_branch
      %127 = sbr.rel (%p125) target = $region24
    $region23: #{lhsa_block.11} parent=5 // pred_region
      // Predicated region
      $region25: #{lhsa_block.11} parent=23 // pred_check
        %p128 = pneg %p29
      $region26: #{lhsa_block.11} parent=23 // pred_check_branch
        %130 = sbr.rel (%p128) target = $region28
      $region27: #{lhsa_block.11} parent=23 // pred_region
        %s131 = smul.u32 2, %s9
        %p132 = scmp.lt.s32.totalorder %s131, 3
        %s133 = scalar_select %p132, %s131, 3
        %s134 = smul.addr %s133, 8
        %s135 = scalar_lea.vmem %s0, %s134
        %s136 = smul.u32 2, %s9
      $region28: #{lhsa_block.11} parent=23 // pred_fallthru
        _
    $region24: #{lhsa_block.11} parent=5 // pred_fallthru
      _
    %p137 = scmp.le.s32.totalorder 1, %s9
    %p138 = scmp.lt.s32.totalorder %s9, 3
    %p139 = pnand %p137, %p138
    %p140 = pneg %p139
    // Predicated region
    $region29: #{lhsa_block.11} parent=5 // pred_check
      _
    $region30: #{lhsa_block.11} parent=5 // pred_check_branch
      %142 = sbr.rel (%p139) target = $region32
    $region31: #{lhsa_block.11} parent=5 // pred_region
      %s143 = ssub.s32 %s9, 1
      %s144 = smul.u32 2, %s14
      %p145 = scmp.lt.s32.totalorder %s144, 3
      %s146 = scalar_select %p145, %s144, 3
      %s147 = smul.addr %s146, 8
      %s148 = scalar_lea.vmem %s0, %s147
      %p149 = pneg %p35
      %p150 = pneg %p32
      %p151 = pneg %p56
      %p152 = pneg %p53
      %p153 = pneg %p77
      %p154 = pneg %p74
      %p155 = pneg %p103
      %p156 = pneg %p100
      %s157 = smul.u32 2, %s14
      %p158 = scmp.lt.s32.totalorder %s157, 3
      %s159 = scalar_select %p158, %s157, 3
      %s160 = smul.addr %s159, 8
      %s161 = scalar_lea.vmem %s3, %s160
      %s162 = smul.u32 2, %s14
      %p163 = scmp.lt.s32.totalorder %s162, 3
      %s164 = scalar_select %p163, %s162, 3
      %s165 = smul.addr %s164, 8
      %s166 = scalar_lea.vmem %s0, %s165
      %s167 = smul.u32 2, %s14
      %s168 = smul.u32 2, %s14
      %p169 = scmp.lt.s32.totalorder %s168, 3
      %s170 = scalar_select %p169, %s168, 3
      %s171 = smul.addr %s170, 8
      %s172 = scalar_lea.vmem %s3, %s171
      %s173 = smul.u32 2, %s14
      %v174 = vld [vmem:[%s166] sm:$0xff]
      %v175 = vld [vmem:[%s166 + $0x8] sm:$0xff]
      %v176 = vld [vmem:[%s1] sm:$0xff]
      %v177 = vld [vmem:[%s1 + $0x8] sm:$0x1]
      %v178 = vlaneseq
      %v179 = vshrl.u32 %v178, 7
      %v180 = vsub.s32 0, %v179
      %v181 = vrot.slane %v176, %v180
      %v182 = vmul.f32 %v181, %v174
      %v183 = vmul.f32 %v181, %v175
      %v184 = vadd.f32 %v182, 0.0
      %v185 = vadd.f32 %v183, 0.0
      %v186 = vlaneseq
      %v187 = vshrl.u32 %v186, 7
      %v188 = vsub.s32 1, %v187
      %v189 = vrot.slane %v176, %v188
      %192 = vrot.lane.b32.xlu0 %v174, 127
      %v193 = vpop.permute.xlu0 %192
      %194 = vrot.lane.b32.xlu0 %v175, 127
      %v195 = vpop.permute.xlu0 %194
      %v198 = vmul.f32 %v189, %v193
      %v199 = vmul.f32 %v189, %v195
      %v200 = vadd.f32 %v184, %v198
      %v201 = vadd.f32 %v185, %v199
      %v202 = vlaneseq
      %v203 = vshrl.u32 %v202, 7
      %v204 = vsub.s32 2, %v203
      %v205 = vrot.slane %v176, %v204
      %206 = vrot.lane.b32.xlu0 %v174, 126
      %v207 = vpop.permute.xlu0 %206
      %208 = vrot.lane.b32.xlu0 %v175, 126
      %v209 = vpop.permute.xlu0 %208
      %v212 = vmul.f32 %v205, %v207
      %v213 = vmul.f32 %v205, %v209
      %v214 = vadd.f32 %v200, %v212
      %v215 = vadd.f32 %v201, %v213
      %v216 = vlaneseq
      %v217 = vshrl.u32 %v216, 7
      %v218 = vsub.s32 3, %v217
      %v219 = vrot.slane %v176, %v218
      %220 = vrot.lane.b32.xlu0 %v174, 124
      %v221 = vpop.permute.xlu0 %220
      %222 = vrot.lane.b32.xlu0 %v175, 124
      %v223 = vpop.permute.xlu0 %222
      %v226 = vmul.f32 %v219, %v221
      %v227 = vmul.f32 %v219, %v223
      %v228 = vadd.f32 %v214, %v226
      %v229 = vadd.f32 %v215, %v227
      %v230 = vlaneseq
      %v231 = vshrl.u32 %v230, 7
      %v232 = vsub.s32 4, %v231
      %v233 = vrot.slane %v176, %v232
      %234 = vrot.lane.b32.xlu0 %v174, 123
      %v235 = vpop.permute.xlu0 %234
      %236 = vrot.lane.b32.xlu0 %v175, 123
      %v237 = vpop.permute.xlu0 %236
      %v240 = vmul.f32 %v233, %v235
      %v241 = vmul.f32 %v233, %v237
      %v242 = vadd.f32 %v228, %v240
      %v243 = vadd.f32 %v229, %v241
      %v244 = vlaneseq
      %v245 = vshrl.u32 %v244, 7
      %v246 = vsub.s32 5, %v245
      %v247 = vrot.slane %v176, %v246
      %248 = vrot.lane.b32.xlu0 %v174, 122
      %v249 = vpop.permute.xlu0 %248
      %250 = vrot.lane.b32.xlu0 %v175, 122
      %v251 = vpop.permute.xlu0 %250
      %v254 = vmul.f32 %v247, %v249
      %v255 = vmul.f32 %v247, %v251
      %v256 = vadd.f32 %v242, %v254
      %v257 = vadd.f32 %v243, %v255
      %v258 = vlaneseq
      %v259 = vshrl.u32 %v258, 7
      %v260 = vsub.s32 6, %v259
      %v261 = vrot.slane %v176, %v260
      %262 = vrot.lane.b32.xlu0 %v174, 120
      %v263 = vpop.permute.xlu0 %262
      %264 = vrot.lane.b32.xlu0 %v175, 120
      %v265 = vpop.permute.xlu0 %264
      %v268 = vmul.f32 %v261, %v263
      %v269 = vmul.f32 %v261, %v265
      %v270 = vadd.f32 %v256, %v268
      %v271 = vadd.f32 %v257, %v269
      %v272 = vlaneseq
      %v273 = vshrl.u32 %v272, 7
      %v274 = vsub.s32 7, %v273
      %v275 = vrot.slane %v176, %v274
      %276 = vrot.lane.b32.xlu0 %v174, 119
      %v277 = vpop.permute.xlu0 %276
      %278 = vrot.lane.b32.xlu0 %v175, 119
      %v279 = vpop.permute.xlu0 %278
      %v282 = vmul.f32 %v275, %v277
      %v283 = vmul.f32 %v275, %v279
      %v284 = vadd.f32 %v270, %v282
      %v285 = vadd.f32 %v271, %v283
      %v286 = vlaneseq
      %v287 = vshrl.u32 %v286, 7
      %v288 = vsub.s32 0, %v287
      %v289 = vrot.slane %v177, %v288
      %290 = vrot.lane.b32.xlu0 %v174, 118
      %v291 = vpop.permute.xlu0 %290
      %292 = vrot.lane.b32.xlu0 %v175, 118
      %v293 = vpop.permute.xlu0 %292
      %v296 = vmul.f32 %v289, %v291
      %v297 = vmul.f32 %v289, %v293
      %v298 = vadd.f32 %v284, %v296
      %v299 = vadd.f32 %v285, %v297
      %v300 = vld [vmem:[%s2] sm:$0x1]
      %v302 = vlaneseq
      %v303 = vshrl.u32 %v302, 7
      %v304 = vsub.s32 0, %v303
      %v305 = vrot.slane %v300, %v304
      %v307 = vadd.f32 %v298, %v305
      %v308 = vadd.f32 %v299, %v305
      %vm309 = vcmask 261120
      %310 = vst.msk [vmem:[%s172] sm:$0xff] %vm309, %v307
      %311 = vst.msk [vmem:[%s172 + $0x8] sm:$0xff] %vm309, %v308
      %s312 = smul.u32 2, %s14
      %p313 = scmp.lt.s32.totalorder %s312, 3
      %s314 = scalar_select %p313, %s312, 3
      %s315 = smul.addr %s314, 8
      %s316 = scalar_lea.vmem %s3, %s315
      // Predicated region
      $region33: #{lhsa_block.11} parent=31 // pred_check
        %p317 = pneg %p100
      $region34: #{lhsa_block.11} parent=31 // pred_check_branch
        %319 = sbr.rel (%p317) target = $region36
      $region35: #{lhsa_block.11} parent=31 // pred_region
        %s320 = smul.u32 2, %s14
      $region36: #{lhsa_block.11} parent=31 // pred_fallthru
        _
    $region32: #{lhsa_block.11} parent=5 // pred_fallthru
      _
    %p321 = scmp.le.s32.totalorder 2, %s9
    // Predicated region
    $region37: #{lhsa_block.11} parent=5 // pred_check
      %p322 = pneg %p321
    $region38: #{lhsa_block.11} parent=5 // pred_check_branch
      %324 = sbr.rel (%p322) target = $region40
    $region39: #{lhsa_block.11} parent=5 // pred_region
      %s325 = ssub.s32 %s9, 2
      // Predicated region
      $region41: #{lhsa_block.11} parent=39 // pred_check
        %p326 = pneg %p106
      $region42: #{lhsa_block.11} parent=39 // pred_check_branch
        %328 = sbr.rel (%p326) target = $region44
      $region43: #{lhsa_block.11} parent=39 // pred_region
        %s329 = smul.u32 2, %s15
        %p330 = scmp.lt.s32.totalorder %s329, 3
        %s331 = scalar_select %p330, %s329, 3
        %s332 = smul.addr %s331, 8
        %s333 = scalar_lea.vmem %s3, %s332
      $region44: #{lhsa_block.11} parent=39 // pred_fallthru
        _
    $region40: #{lhsa_block.11} parent=5 // pred_fallthru
      _
  $region6: #{lhsa_block.11} parent=0 // loop_footer
    %s13 = sadd.s32 1, %s9
  $region7: #{lhsa_block.11} parent=0 // loop_footer_branch
    %8 = sbr.rel target = $region3
  $region8: #{lhsa_block.11} parent=0 // loop_exit
    _

// kernel: lhsa_block.13
$region0: #{lhsa_block.13}
  #allocation0 [shape = 'u32[]', space=smem, size = 0x4, offset = 0x4, fixed_abs, tag = 'smem constant byte address 0x4 - core index']
  #allocation1 [shape = 'u32[144,128]{1,0:T(1,128)}', space=vmem, size = 0x12000, scoped, tag = 'internal scratch']
  %s0 = inlined_call_operand.vmem [shape: f32[2,4,256], index: 0, kind: input, shape index: {}]
  %s1 = inlined_call_operand.vmem [shape: bf16[4,4], index: 1, kind: input, shape index: {}]
  %s2 = inlined_call_operand.vmem [shape: f32[4,1], index: 2, kind: input, shape index: {}]
  %s3 = inlined_call_operand.vmem [shape: f32[2,4,256], index: 3, kind: output, shape index: {}]
  %s4 = sld [smem:[#allocation0]]
  $region45: #{lhsa_block.13} parent=0
    _
  %s6 = ssub.s32 1, %s4
  %s7 = scalar_select 0, %s6, %s4
  loop: start=0, step=1, limit=4
  $region2: #{lhsa_block.13} parent=0 // loop_pre_header
    _
  $region3: #{lhsa_block.13} parent=0 // loop_header
    %s9 = sphi 0, %s13
    %p10 = scmp.ge.s32.totalorder %s9, 4
    %s16 = sphi 0, %s28
    %s17 = sphi 0, %s24
    %s18 = sphi 0, %s16
    %s19 = sphi 0, %s17
    %s20 = sphi 0, %s18
    %s21 = sphi 0, %s19
    %s33 = sphi 0, %s35
    %s36 = sphi 0, %s33
    %s37 = sphi 0, %s36
    %s53 = sphi 0, %s37
    %s57 = sphi 0, %s57
    %s59 = sphi 0, %s57
    %s60 = sphi 0, %s59
    %s74 = sphi 0, %s60
    %s78 = sphi 0, %s78
    %s80 = sphi 0, %s78
    %s81 = sphi 0, %s80
    %s95 = sphi 0, %s81
    %s103 = sphi 0, %s105
    %s106 = sphi 0, %s103
    %s107 = sphi 0, %s106
    %s123 = sphi 0, %s107
  $region4: #{lhsa_block.13} parent=0 // loop_header_branch
    %12 = sbr.rel (%p10) target = $region8
  $region5: #{lhsa_block.13} parent=0 // loop_body
    %s14 = ssub.s32 %s9, 1
    %s15 = ssub.s32 %s9, 2
    %s22 = sadd.s32 1, %s17
    %p23 = scmp.ge.s32.totalorder %s22, 1
    %s24 = scalar_select %p23, 0, %s22
    %s25 = sadd.s32 1, %s16
    %s26 = scalar_select %p23, %s25, %s16
    %p27 = scmp.ge.s32.totalorder %s26, 2
    %s28 = scalar_select %p27, 0, %s26
    %s29 = ssub.s32 %s16, %s28
    %s30 = ssub.s32 %s17, %s24
    %s31 = sor.u32 %s29, %s30
    %p32 = scmp.eq.s32.totalorder %s31, 0
    %s34 = sadd.s32 %s33, 1
    %s35 = scalar_select %p32, %s33, %s34
    %p38 = pneg %p32
    %p39 = scmp.eq.s32.totalorder %s9, 1
    %p40 = por %p38, %p39
    %p41 = scmp.ne.s32.totalorder %s33, %s36
    %p42 = scmp.eq.s32.totalorder %s9, 0
    %p43 = por %p41, %p42
    %p44 = scmp.ne.s32.totalorder %s33, %s36
    %p45 = scmp.eq.s32.totalorder %s14, 1
    %p46 = por %p44, %p45
    %p47 = scmp.ne.s32.totalorder %s36, %s37
    %p48 = scmp.eq.s32.totalorder %s14, 0
    %p49 = por %p47, %p48
    %p50 = scmp.ne.s32.totalorder %s36, %s37
    %p51 = scmp.eq.s32.totalorder %s15, 1
    %p52 = por %p50, %p51
    %p54 = scmp.ne.s32.totalorder %s37, %s53
    %p55 = scmp.eq.s32.totalorder %s15, 0
    %p56 = por %p54, %p55
    %s58 = sadd.s32 %s57, 1
    %p61 = scmp.eq.s32.totalorder %s9, 1
    %p62 = scmp.ne.s32.totalorder %s57, %s59
    %p63 = scmp.eq.s32.totalorder %s9, 0
    %p64 = por %p62, %p63
    %p65 = scmp.ne.s32.totalorder %s57, %s59
    %p66 = scmp.eq.s32.totalorder %s14, 1
    %p67 = por %p65, %p66
    %p68 = scmp.ne.s32.totalorder %s59, %s60
    %p69 = scmp.eq.s32.totalorder %s14, 0
    %p70 = por %p68, %p69
    %p71 = scmp.ne.s32.totalorder %s59, %s60
    %p72 = scmp.eq.s32.totalorder %s15, 1
    %p73 = por %p71, %p72
    %p75 = scmp.ne.s32.totalorder %s60, %s74
    %p76 = scmp.eq.s32.totalorder %s15, 0
    %p77 = por %p75, %p76
    %s79 = sadd.s32 %s78, 1
    %p82 = scmp.eq.s32.totalorder %s9, 1
    %p83 = scmp.ne.s32.totalorder %s78, %s80
    %p84 = scmp.eq.s32.totalorder %s9, 0
    %p85 = por %p83, %p84
    %p86 = scmp.ne.s32.totalorder %s78, %s80
    %p87 = scmp.eq.s32.totalorder %s14, 1
    %p88 = por %p86, %p87
    %p89 = scmp.ne.s32.totalorder %s80, %s81
    %p90 = scmp.eq.s32.totalorder %s14, 0
    %p91 = por %p89, %p90
    %p92 = scmp.ne.s32.totalorder %s80, %s81
    %p93 = scmp.eq.s32.totalorder %s15, 1
    %p94 = por %p92, %p93
    %p96 = scmp.ne.s32.totalorder %s81, %s95
    %p97 = scmp.eq.s32.totalorder %s15, 0
    %p98 = por %p96, %p97
    %s99 = ssub.s32 %s16, %s28
    %s100 = ssub.s32 %s17, %s24
    %s101 = sor.u32 %s99, %s100
    %p102 = scmp.eq.s32.totalorder %s101, 0
    %s104 = sadd.s32 %s103, 1
    %s105 = scalar_select %p102, %s103, %s104
    %p108 = pneg %p102
    %p109 = scmp.eq.s32.totalorder %s9, 1
    %p110 = por %p108, %p109
    %p111 = scmp.ne.s32.totalorder %s103, %s106
    %p112 = scmp.eq.s32.totalorder %s9, 0
    %p113 = por %p111, %p112
    %p114 = scmp.ne.s32.totalorder %s103, %s106
    %p115 = scmp.eq.s32.totalorder %s14, 1
    %p116 = por %p114, %p115
    %p117 = scmp.ne.s32.totalorder %s106, %s107
    %p118 = scmp.eq.s32.totalorder %s14, 0
    %p119 = por %p117, %p118
    %p120 = scmp.ne.s32.totalorder %s106, %s107
    %p121 = scmp.eq.s32.totalorder %s15, 1
    %p122 = por %p120, %p121
    %p124 = scmp.ne.s32.totalorder %s107, %s123
    %p125 = scmp.eq.s32.totalorder %s15, 0
    %p126 = por %p124, %p125
    %p127 = scmp.le.s32.totalorder 1, %s9
    %p128 = scmp.lt.s32.totalorder %s9, 3
    %p129 = pnand %p127, %p128
    %p130 = pneg %p129
    // Predicated region
    $region9: #{lhsa_block.13} parent=5 // pred_check
      _
    $region10: #{lhsa_block.13} parent=5 // pred_check_branch
      %132 = sbr.rel (%p129) target = $region12
    $region11: #{lhsa_block.13} parent=5 // pred_region
      %s133 = ssub.s32 %s9, 1
      // Predicated region
      $region13: #{lhsa_block.13} parent=11 // pred_check
        %p134 = pneg %p70
      $region14: #{lhsa_block.13} parent=11 // pred_check_branch
        %136 = sbr.rel (%p134) target = $region16
      $region15: #{lhsa_block.13} parent=11 // pred_region
        _
      $region16: #{lhsa_block.13} parent=11 // pred_fallthru
        _
      // Predicated region
      $region17: #{lhsa_block.13} parent=11 // pred_check
        %p137 = pneg %p91
      $region18: #{lhsa_block.13} parent=11 // pred_check_branch
        %139 = sbr.rel (%p137) target = $region20
      $region19: #{lhsa_block.13} parent=11 // pred_region
        _
      $region20: #{lhsa_block.13} parent=11 // pred_fallthru
        _
    $region12: #{lhsa_block.13} parent=5 // pred_fallthru
      _
    %p140 = scmp.lt.s32.totalorder %s9, 2
    // Predicated region
    $region21: #{lhsa_block.13} parent=5 // pred_check
      %p141 = pneg %p140
    $region22: #{lhsa_block.13} parent=5 // pred_check_branch
      %143 = sbr.rel (%p141) target = $region24
    $region23: #{lhsa_block.13} parent=5 // pred_region
      // Predicated region
      $region25: #{lhsa_block.13} parent=23 // pred_check
        %p144 = pneg %p43
      $region26: #{lhsa_block.13} parent=23 // pred_check_branch
        %146 = sbr.rel (%p144) target = $region28
      $region27: #{lhsa_block.13} parent=23 // pred_region
        %s147 = smul.u32 2, %s17
        %p148 = scmp.lt.s32.totalorder %s16, 1
        %s149 = scalar_select %p148, %s16, 1
        %p150 = scmp.lt.s32.totalorder %s147, 1
        %s151 = scalar_select %p150, %s147, 1
        %s152 = smul.addr %s149, 2
        %s153 = sadd.s32 %s151, %s152
        %s154 = smul.addr %s153, 4
        %s155 = scalar_lea.vmem %s0, %s154
        %s156 = smul.u32 2, %s17
      $region28: #{lhsa_block.13} parent=23 // pred_fallthru
        _
    $region24: #{lhsa_block.13} parent=5 // pred_fallthru
      _
    %p157 = scmp.le.s32.totalorder 1, %s9
    %p158 = scmp.lt.s32.totalorder %s9, 3
    %p159 = pnand %p157, %p158
    %p160 = pneg %p159
    // Predicated region
    $region29: #{lhsa_block.13} parent=5 // pred_check
      _
    $region30: #{lhsa_block.13} parent=5 // pred_check_branch
      %162 = sbr.rel (%p159) target = $region32
    $region31: #{lhsa_block.13} parent=5 // pred_region
      %s163 = ssub.s32 %s9, 1
      %s164 = smul.u32 2, %s19
      %p165 = scmp.lt.s32.totalorder %s18, 1
      %s166 = scalar_select %p165, %s18, 1
      %p167 = scmp.lt.s32.totalorder %s164, 1
      %s168 = scalar_select %p167, %s164, 1
      %s169 = smul.addr %s166, 2
      %s170 = sadd.s32 %s168, %s169
      %s171 = smul.addr %s170, 4
      %s172 = scalar_lea.vmem %s0, %s171
      %p173 = pneg %p49
      %p174 = pneg %p46
      %p175 = pneg %p70
      %p176 = pneg %p67
      %p177 = pneg %p91
      %p178 = pneg %p88
      %p179 = pneg %p119
      %p180 = pneg %p116
      %s181 = smul.u32 2, %s19
      %p182 = scmp.lt.s32.totalorder %s18, 1
      %s183 = scalar_select %p182, %s18, 1
      %p184 = scmp.lt.s32.totalorder %s181, 1
      %s185 = scalar_select %p184, %s181, 1
      %s186 = smul.addr %s183, 2
      %s187 = sadd.s32 %s185, %s186
      %s188 = smul.addr %s187, 4
      %s189 = scalar_lea.vmem %s3, %s188
      %s190 = smul.u32 2, %s19
      %p191 = scmp.lt.s32.totalorder %s18, 1
      %s192 = scalar_select %p191, %s18, 1
      %p193 = scmp.lt.s32.totalorder %s190, 1
      %s194 = scalar_select %p193, %s190, 1
      %s195 = smul.addr %s192, 2
      %s196 = sadd.s32 %s194, %s195
      %s197 = smul.addr %s196, 4
      %s198 = scalar_lea.vmem %s0, %s197
      %s199 = smul.u32 2, %s19
      %s200 = smul.u32 2, %s19
      %p201 = scmp.lt.s32.totalorder %s18, 1
      %s202 = scalar_select %p201, %s18, 1
      %p203 = scmp.lt.s32.totalorder %s200, 1
      %s204 = scalar_select %p203, %s200, 1
      %s205 = smul.addr %s202, 2
      %s206 = sadd.s32 %s204, %s205
      %s207 = smul.addr %s206, 4
      %s208 = scalar_lea.vmem %s3, %s207
      %s209 = smul.u32 2, %s19
      %v211 = vld [vmem:[%s198] sm:$0xff]
      %v213 = vcombine.high %v211, %v211
      %v215 = vpack.c.bf16 %v211, %v211
      %v216 = vpack.c.bf16 %v213, %v213
      %v217 = vld [vmem:[%s1] sm:$0x3]
      %v218 = vld [vmem:[%s2] sm:$0xf]
      %220 = vset.pattern.permute.xlu0 0
      %221 = vperm.xlu0 %220, %v218
      %v222 = vpop.permute.xlu0 %221
      %vm224 = vcmask 31744
      %v226 = vsel %vm224, %v217, 0
      %vm228 = vcmask 1041408
      %v230 = vsel %vm228, %v215, 0
      %v233 = vsel %vm228, %v216, 0
      %235 = vmatprep.subr.bf16.mxu0 %v233
      %236 = vmatpush1.bf16.msra.mxu0 %v230
      %237 = vmatprep.subr.bf16.mxu0 0
      %238 = vmatpush1.bf16.msra.mxu0 0
      %239 = vmatprep.subr.bf16.mxu0 0
      %240 = vmatpush1.bf16.msra.mxu0 0
      %241 = vmatprep.subr.bf16.mxu0 0
      %242 = vmatpush1.bf16.msra.mxu0 0
      %243 = vmatprep.subr.bf16.mxu0 0
      %244 = vmatpush1.bf16.msra.mxu0 0
      %245 = vmatprep.subr.bf16.mxu0 0
      %246 = vmatpush1.bf16.msra.mxu0 0
      %247 = vmatprep.subr.bf16.mxu0 0
      %248 = vmatpush1.bf16.msra.mxu0 0
      %249 = vmatprep.subr.bf16.mxu0 0
      %250 = vmatpush1.bf16.msra.mxu0 0
      %251 = vmatprep.subr.bf16.mxu0 0
      %252 = vmatpush1.bf16.msra.mxu0 0
      %253 = vmatprep.subr.bf16.mxu0 0
      %254 = vmatpush1.bf16.msra.mxu0 0
      %255 = vmatprep.subr.bf16.mxu0 0
      %256 = vmatpush1.bf16.msra.mxu0 0
      %257 = vmatprep.subr.bf16.mxu0 0
      %258 = vmatpush1.bf16.msra.mxu0 0
      %259 = vmatprep.subr.bf16.mxu0 0
      %260 = vmatpush1.bf16.msra.mxu0 0
      %261 = vmatprep.subr.bf16.mxu0 0
      %262 = vmatpush1.bf16.msra.mxu0 0
      %263 = vmatprep.subr.bf16.mxu0 0
      %264 = vmatpush1.bf16.msra.mxu0 0
      %265 = vmatprep.subr.bf16.mxu0 0
      %266 = vmatpush1.bf16.msra.mxu0 0
      %267 = vmatprep.mubr.bf16.mxu0 0
      %268 = vmatmul.mubr.bf16.gmra.mrb[0].mxu0 %v226
      %v269 = vpop.f32.mrb[0].mxu0
      %v270 = vadd.f32 %v222, %v269
      %v271 = vpop.f32.mrb[0].mxu0
      %v272 = vadd.f32 %v222, %v271
      %v273 = vpop.f32.mrb[0].mxu0
      %v274 = vpop.f32.mrb[0].mxu0
      %275 = vdwg.mxu0
      %v278 = vcombine.low %v270, %v272
      %280 = vst [vmem:[%s208] sm:$0xff] %v278
      %s281 = smul.u32 2, %s19
      %p282 = scmp.lt.s32.totalorder %s18, 1
      %s283 = scalar_select %p282, %s18, 1
      %p284 = scmp.lt.s32.totalorder %s281, 1
      %s285 = scalar_select %p284, %s281, 1
      %s286 = smul.addr %s283, 2
      %s287 = sadd.s32 %s285, %s286
      %s288 = smul.addr %s287, 4
      %s289 = scalar_lea.vmem %s3, %s288
      // Predicated region
      $region33: #{lhsa_block.13} parent=31 // pred_check
        %p290 = pneg %p116
      $region34: #{lhsa_block.13} parent=31 // pred_check_branch
        %292 = sbr.rel (%p290) target = $region36
      $region35: #{lhsa_block.13} parent=31 // pred_region
        %s293 = smul.u32 2, %s19
      $region36: #{lhsa_block.13} parent=31 // pred_fallthru
        _
    $region32: #{lhsa_block.13} parent=5 // pred_fallthru
      _
    %p294 = scmp.le.s32.totalorder 2, %s9
    // Predicated region
    $region37: #{lhsa_block.13} parent=5 // pred_check
      %p295 = pneg %p294
    $region38: #{lhsa_block.13} parent=5 // pred_check_branch
      %297 = sbr.rel (%p295) target = $region40
    $region39: #{lhsa_block.13} parent=5 // pred_region
      %s298 = ssub.s32 %s9, 2
      // Predicated region
      $region41: #{lhsa_block.13} parent=39 // pred_check
        %p299 = pneg %p122
      $region42: #{lhsa_block.13} parent=39 // pred_check_branch
        %301 = sbr.rel (%p299) target = $region44
      $region43: #{lhsa_block.13} parent=39 // pred_region
        %s302 = smul.u32 2, %s21
        %p303 = scmp.lt.s32.totalorder %s20, 1
        %s304 = scalar_select %p303, %s20, 1
        %p305 = scmp.lt.s32.totalorder %s302, 1
        %s306 = scalar_select %p305, %s302, 1
        %s307 = smul.addr %s304, 2
        %s308 = sadd.s32 %s306, %s307
        %s309 = smul.addr %s308, 4
        %s310 = scalar_lea.vmem %s3, %s309
      $region44: #{lhsa_block.13} parent=39 // pred_fallthru
        _
    $region40: #{lhsa_block.13} parent=5 // pred_fallthru
      _
  $region6: #{lhsa_block.13} parent=0 // loop_footer
    %s13 = sadd.s32 1, %s9
  $region7: #{lhsa_block.13} parent=0 // loop_footer_branch
    %8 = sbr.rel target = $region3
  $region8: #{lhsa_block.13} parent=0 // loop_exit
    _

// kernel: lhsa_block.12
$region0: #{lhsa_block.12}
  #allocation0 [shape = 'u32[]', space=smem, size = 0x4, offset = 0x4, fixed_abs, tag = 'smem constant byte address 0x4 - core index']
  #allocation1 [shape = 'u32[144,128]{1,0:T(1,128)}', space=vmem, size = 0x12000, scoped, tag = 'internal scratch']
  %s0 = inlined_call_operand.vmem [shape: bf16[512,2], index: 0, kind: input, shape index: {}]
  %s1 = inlined_call_operand.vmem [shape: f32[512,2], index: 1, kind: input, shape index: {}]
  %s2 = inlined_call_operand.vmem [shape: f32[128,128], index: 2, kind: input, shape index: {}]
  %s3 = inlined_call_operand.vmem [shape: bf16[2,6], index: 3, kind: input, shape index: {}]
  %s4 = inlined_call_operand.vmem [shape: f32[1,6], index: 4, kind: input, shape index: {}]
  %s5 = inlined_call_operand.vmem [shape: bf16[2,2], index: 5, kind: input, shape index: {}]
  %s6 = inlined_call_operand.vmem [shape: f32[1,2], index: 6, kind: input, shape index: {}]
  %s7 = inlined_call_operand.vmem [shape: f32[512,2], index: 7, kind: output, shape index: {}]
  %s8 = sld [smem:[#allocation0]]
  $region61: #{lhsa_block.12} parent=0
    _
  %s10 = ssub.s32 1, %s8
  %s11 = scalar_select 0, %s10, %s8
  loop: start=0, step=1, limit=6
  $region2: #{lhsa_block.12} parent=0 // loop_pre_header
    _
  $region3: #{lhsa_block.12} parent=0 // loop_header
    %s13 = sphi 0, %s17
    %p14 = scmp.ge.s32.totalorder %s13, 6
    %s23 = sphi 0, %s25
    %s26 = sphi 0, %s23
    %s27 = sphi 0, %s26
    %s43 = sphi 0, %s27
    %s49 = sphi 0, %s51
    %s52 = sphi 0, %s49
    %s53 = sphi 0, %s52
    %s69 = sphi 0, %s53
    %s73 = sphi 0, %s73
    %s75 = sphi 0, %s73
    %s76 = sphi 0, %s75
    %s90 = sphi 0, %s76
    %s94 = sphi 0, %s94
    %s96 = sphi 0, %s94
    %s97 = sphi 0, %s96
    %s111 = sphi 0, %s97
    %s115 = sphi 0, %s115
    %s117 = sphi 0, %s115
    %s118 = sphi 0, %s117
    %s132 = sphi 0, %s118
    %s136 = sphi 0, %s136
    %s138 = sphi 0, %s136
    %s139 = sphi 0, %s138
    %s153 = sphi 0, %s139
    %s157 = sphi 0, %s157
    %s159 = sphi 0, %s157
    %s160 = sphi 0, %s159
    %s174 = sphi 0, %s160
    %s180 = sphi 0, %s182
    %s183 = sphi 0, %s180
    %s184 = sphi 0, %s183
    %s200 = sphi 0, %s184
  $region4: #{lhsa_block.12} parent=0 // loop_header_branch
    %16 = sbr.rel (%p14) target = $region8
  $region5: #{lhsa_block.12} parent=0 // loop_body
    %s18 = ssub.s32 %s13, 1
    %s19 = ssub.s32 %s13, 2
    %s20 = sadd.s32 %s13, 1
    %s21 = ssub.s32 %s13, %s20
    %p22 = scmp.eq.s32.totalorder %s21, 0
    %s24 = sadd.s32 %s23, 1
    %s25 = scalar_select %p22, %s23, %s24
    %p28 = pneg %p22
    %p29 = scmp.eq.s32.totalorder %s13, 3
    %p30 = por %p28, %p29
    %p31 = scmp.ne.s32.totalorder %s23, %s26
    %p32 = scmp.eq.s32.totalorder %s13, 0
    %p33 = por %p31, %p32
    %p34 = scmp.ne.s32.totalorder %s23, %s26
    %p35 = scmp.eq.s32.totalorder %s18, 3
    %p36 = por %p34, %p35
    %p37 = scmp.ne.s32.totalorder %s26, %s27
    %p38 = scmp.eq.s32.totalorder %s18, 0
    %p39 = por %p37, %p38
    %p40 = scmp.ne.s32.totalorder %s26, %s27
    %p41 = scmp.eq.s32.totalorder %s19, 3
    %p42 = por %p40, %p41
    %p44 = scmp.ne.s32.totalorder %s27, %s43
    %p45 = scmp.eq.s32.totalorder %s19, 0
    %p46 = por %p44, %p45
    %s47 = ssub.s32 %s13, %s20
    %p48 = scmp.eq.s32.totalorder %s47, 0
    %s50 = sadd.s32 %s49, 1
    %s51 = scalar_select %p48, %s49, %s50
    %p54 = pneg %p48
    %p55 = scmp.eq.s32.totalorder %s13, 3
    %p56 = por %p54, %p55
    %p57 = scmp.ne.s32.totalorder %s49, %s52
    %p58 = scmp.eq.s32.totalorder %s13, 0
    %p59 = por %p57, %p58
    %p60 = scmp.ne.s32.totalorder %s49, %s52
    %p61 = scmp.eq.s32.totalorder %s18, 3
    %p62 = por %p60, %p61
    %p63 = scmp.ne.s32.totalorder %s52, %s53
    %p64 = scmp.eq.s32.totalorder %s18, 0
    %p65 = por %p63, %p64
    %p66 = scmp.ne.s32.totalorder %s52, %s53
    %p67 = scmp.eq.s32.totalorder %s19, 3
    %p68 = por %p66, %p67
    %p70 = scmp.ne.s32.totalorder %s53, %s69
    %p71 = scmp.eq.s32.totalorder %s19, 0
    %p72 = por %p70, %p71
    %s74 = sadd.s32 %s73, 1
    %p77 = scmp.eq.s32.totalorder %s13, 3
    %p78 = scmp.ne.s32.totalorder %s73, %s75
    %p79 = scmp.eq.s32.totalorder %s13, 0
    %p80 = por %p78, %p79
    %p81 = scmp.ne.s32.totalorder %s73, %s75
    %p82 = scmp.eq.s32.totalorder %s18, 3
    %p83 = por %p81, %p82
    %p84 = scmp.ne.s32.totalorder %s75, %s76
    %p85 = scmp.eq.s32.totalorder %s18, 0
    %p86 = por %p84, %p85
    %p87 = scmp.ne.s32.totalorder %s75, %s76
    %p88 = scmp.eq.s32.totalorder %s19, 3
    %p89 = por %p87, %p88
    %p91 = scmp.ne.s32.totalorder %s76, %s90
    %p92 = scmp.eq.s32.totalorder %s19, 0
    %p93 = por %p91, %p92
    %s95 = sadd.s32 %s94, 1
    %p98 = scmp.eq.s32.totalorder %s13, 3
    %p99 = scmp.ne.s32.totalorder %s94, %s96
    %p100 = scmp.eq.s32.totalorder %s13, 0
    %p101 = por %p99, %p100
    %p102 = scmp.ne.s32.totalorder %s94, %s96
    %p103 = scmp.eq.s32.totalorder %s18, 3
    %p104 = por %p102, %p103
    %p105 = scmp.ne.s32.totalorder %s96, %s97
    %p106 = scmp.eq.s32.totalorder %s18, 0
    %p107 = por %p105, %p106
    %p108 = scmp.ne.s32.totalorder %s96, %s97
    %p109 = scmp.eq.s32.totalorder %s19, 3
    %p110 = por %p108, %p109
    %p112 = scmp.ne.s32.totalorder %s97, %s111
    %p113 = scmp.eq.s32.totalorder %s19, 0
    %p114 = por %p112, %p113
    %s116 = sadd.s32 %s115, 1
    %p119 = scmp.eq.s32.totalorder %s13, 3
    %p120 = scmp.ne.s32.totalorder %s115, %s117
    %p121 = scmp.eq.s32.totalorder %s13, 0
    %p122 = por %p120, %p121
    %p123 = scmp.ne.s32.totalorder %s115, %s117
    %p124 = scmp.eq.s32.totalorder %s18, 3
    %p125 = por %p123, %p124
    %p126 = scmp.ne.s32.totalorder %s117, %s118
    %p127 = scmp.eq.s32.totalorder %s18, 0
    %p128 = por %p126, %p127
    %p129 = scmp.ne.s32.totalorder %s117, %s118
    %p130 = scmp.eq.s32.totalorder %s19, 3
    %p131 = por %p129, %p130
    %p133 = scmp.ne.s32.totalorder %s118, %s132
    %p134 = scmp.eq.s32.totalorder %s19, 0
    %p135 = por %p133, %p134
    %s137 = sadd.s32 %s136, 1
    %p140 = scmp.eq.s32.totalorder %s13, 3
    %p141 = scmp.ne.s32.totalorder %s136, %s138
    %p142 = scmp.eq.s32.totalorder %s13, 0
    %p143 = por %p141, %p142
    %p144 = scmp.ne.s32.totalorder %s136, %s138
    %p145 = scmp.eq.s32.totalorder %s18, 3
    %p146 = por %p144, %p145
    %p147 = scmp.ne.s32.totalorder %s138, %s139
    %p148 = scmp.eq.s32.totalorder %s18, 0
    %p149 = por %p147, %p148
    %p150 = scmp.ne.s32.totalorder %s138, %s139
    %p151 = scmp.eq.s32.totalorder %s19, 3
    %p152 = por %p150, %p151
    %p154 = scmp.ne.s32.totalorder %s139, %s153
    %p155 = scmp.eq.s32.totalorder %s19, 0
    %p156 = por %p154, %p155
    %s158 = sadd.s32 %s157, 1
    %p161 = scmp.eq.s32.totalorder %s13, 3
    %p162 = scmp.ne.s32.totalorder %s157, %s159
    %p163 = scmp.eq.s32.totalorder %s13, 0
    %p164 = por %p162, %p163
    %p165 = scmp.ne.s32.totalorder %s157, %s159
    %p166 = scmp.eq.s32.totalorder %s18, 3
    %p167 = por %p165, %p166
    %p168 = scmp.ne.s32.totalorder %s159, %s160
    %p169 = scmp.eq.s32.totalorder %s18, 0
    %p170 = por %p168, %p169
    %p171 = scmp.ne.s32.totalorder %s159, %s160
    %p172 = scmp.eq.s32.totalorder %s19, 3
    %p173 = por %p171, %p172
    %p175 = scmp.ne.s32.totalorder %s160, %s174
    %p176 = scmp.eq.s32.totalorder %s19, 0
    %p177 = por %p175, %p176
    %s178 = ssub.s32 %s13, %s20
    %p179 = scmp.eq.s32.totalorder %s178, 0
    %s181 = sadd.s32 %s180, 1
    %s182 = scalar_select %p179, %s180, %s181
    %p185 = pneg %p179
    %p186 = scmp.eq.s32.totalorder %s13, 3
    %p187 = por %p185, %p186
    %p188 = scmp.ne.s32.totalorder %s180, %s183
    %p189 = scmp.eq.s32.totalorder %s13, 0
    %p190 = por %p188, %p189
    %p191 = scmp.ne.s32.totalorder %s180, %s183
    %p192 = scmp.eq.s32.totalorder %s18, 3
    %p193 = por %p191, %p192
    %p194 = scmp.ne.s32.totalorder %s183, %s184
    %p195 = scmp.eq.s32.totalorder %s18, 0
    %p196 = por %p194, %p195
    %p197 = scmp.ne.s32.totalorder %s183, %s184
    %p198 = scmp.eq.s32.totalorder %s19, 3
    %p199 = por %p197, %p198
    %p201 = scmp.ne.s32.totalorder %s184, %s200
    %p202 = scmp.eq.s32.totalorder %s19, 0
    %p203 = por %p201, %p202
    %p204 = scmp.le.s32.totalorder 1, %s13
    %p205 = scmp.lt.s32.totalorder %s13, 5
    %p206 = pnand %p204, %p205
    %p207 = pneg %p206
    // Predicated region
    $region9: #{lhsa_block.12} parent=5 // pred_check
      _
    $region10: #{lhsa_block.12} parent=5 // pred_check_branch
      %209 = sbr.rel (%p206) target = $region12
    $region11: #{lhsa_block.12} parent=5 // pred_region
      %s210 = ssub.s32 %s13, 1
      // Predicated region
      $region13: #{lhsa_block.12} parent=11 // pred_check
        %p211 = pneg %p86
      $region14: #{lhsa_block.12} parent=11 // pred_check_branch
        %213 = sbr.rel (%p211) target = $region16
      $region15: #{lhsa_block.12} parent=11 // pred_region
        _
      $region16: #{lhsa_block.12} parent=11 // pred_fallthru
        _
      // Predicated region
      $region17: #{lhsa_block.12} parent=11 // pred_check
        %p214 = pneg %p107
      $region18: #{lhsa_block.12} parent=11 // pred_check_branch
        %216 = sbr.rel (%p214) target = $region20
      $region19: #{lhsa_block.12} parent=11 // pred_region
        _
      $region20: #{lhsa_block.12} parent=11 // pred_fallthru
        _
      // Predicated region
      $region21: #{lhsa_block.12} parent=11 // pred_check
        %p217 = pneg %p128
      $region22: #{lhsa_block.12} parent=11 // pred_check_branch
        %219 = sbr.rel (%p217) target = $region24
      $region23: #{lhsa_block.12} parent=11 // pred_region
        _
      $region24: #{lhsa_block.12} parent=11 // pred_fallthru
        _
      // Predicated region
      $region25: #{lhsa_block.12} parent=11 // pred_check
        %p220 = pneg %p149
      $region26: #{lhsa_block.12} parent=11 // pred_check_branch
        %222 = sbr.rel (%p220) target = $region28
      $region27: #{lhsa_block.12} parent=11 // pred_region
        _
      $region28: #{lhsa_block.12} parent=11 // pred_fallthru
        _
      // Predicated region
      $region29: #{lhsa_block.12} parent=11 // pred_check
        %p223 = pneg %p170
      $region30: #{lhsa_block.12} parent=11 // pred_check_branch
        %225 = sbr.rel (%p223) target = $region32
      $region31: #{lhsa_block.12} parent=11 // pred_region
        _
      $region32: #{lhsa_block.12} parent=11 // pred_fallthru
        _
    $region12: #{lhsa_block.12} parent=5 // pred_fallthru
      _
    %p226 = scmp.lt.s32.totalorder %s13, 4
    // Predicated region
    $region33: #{lhsa_block.12} parent=5 // pred_check
      %p227 = pneg %p226
    $region34: #{lhsa_block.12} parent=5 // pred_check_branch
      %229 = sbr.rel (%p227) target = $region36
    $region35: #{lhsa_block.12} parent=5 // pred_region
      // Predicated region
      $region37: #{lhsa_block.12} parent=35 // pred_check
        %p230 = pneg %p33
      $region38: #{lhsa_block.12} parent=35 // pred_check_branch
        %232 = sbr.rel (%p230) target = $region40
      $region39: #{lhsa_block.12} parent=35 // pred_region
        %s233 = smul.u32 16, %s13
        %p234 = scmp.lt.s32.totalorder %s233, 63
        %s235 = scalar_select %p234, %s233, 63
        %s236 = smul.addr %s235, 4
        %s237 = scalar_lea.vmem %s0, %s236
        %s238 = smul.u32 16, %s13
      $region40: #{lhsa_block.12} parent=35 // pred_fallthru
        _
      // Predicated region
      $region41: #{lhsa_block.12} parent=35 // pred_check
        %p239 = pneg %p59
      $region42: #{lhsa_block.12} parent=35 // pred_check_branch
        %241 = sbr.rel (%p239) target = $region44
      $region43: #{lhsa_block.12} parent=35 // pred_region
        %s242 = smul.u32 16, %s13
        %p243 = scmp.lt.s32.totalorder %s242, 63
        %s244 = scalar_select %p243, %s242, 63
        %s245 = smul.addr %s244, 8
        %s246 = scalar_lea.vmem %s1, %s245
        %s247 = smul.u32 16, %s13
      $region44: #{lhsa_block.12} parent=35 // pred_fallthru
        _
    $region36: #{lhsa_block.12} parent=5 // pred_fallthru
      _
    %p248 = scmp.le.s32.totalorder 1, %s13
    %p249 = scmp.lt.s32.totalorder %s13, 5
    %p250 = pnand %p248, %p249
    %p251 = pneg %p250
    // Predicated region
    $region45: #{lhsa_block.12} parent=5 // pred_check
      _
    $region46: #{lhsa_block.12} parent=5 // pred_check_branch
      %253 = sbr.rel (%p250) target = $region48
    $region47: #{lhsa_block.12} parent=5 // pred_region
      %s254 = ssub.s32 %s13, 1
      %s255 = smul.u32 16, %s18
      %p256 = scmp.lt.s32.totalorder %s255, 63
      %s257 = scalar_select %p256, %s255, 63
      %s258 = smul.addr %s257, 4
      %s259 = scalar_lea.vmem %s0, %s258
      %p260 = pneg %p39
      %p261 = pneg %p36
      %s262 = smul.u32 16, %s18
      %p263 = scmp.lt.s32.totalorder %s262, 63
      %s264 = scalar_select %p263, %s262, 63
      %s265 = smul.addr %s264, 8
      %s266 = scalar_lea.vmem %s1, %s265
      %p267 = pneg %p65
      %p268 = pneg %p62
      %p269 = pneg %p86
      %p270 = pneg %p83
      %p271 = pneg %p107
      %p272 = pneg %p104
      %p273 = pneg %p128
      %p274 = pneg %p125
      %p275 = pneg %p149
      %p276 = pneg %p146
      %p277 = pneg %p170
      %p278 = pneg %p167
      %p279 = pneg %p196
      %p280 = pneg %p193
      %s281 = smul.u32 16, %s18
      %p282 = scmp.lt.s32.totalorder %s281, 63
      %s283 = scalar_select %p282, %s281, 63
      %s284 = smul.addr %s283, 8
      %s285 = scalar_lea.vmem %s7, %s284
      %s286 = smul.u32 16, %s18
      %p287 = scmp.lt.s32.totalorder %s286, 63
      %s288 = scalar_select %p287, %s286, 63
      %s289 = smul.addr %s288, 4
      %s290 = scalar_lea.vmem %s0, %s289
      %s291 = smul.u32 16, %s18
      %s292 = smul.u32 16, %s18
      %p293 = scmp.lt.s32.totalorder %s292, 63
      %s294 = scalar_select %p293, %s292, 63
      %s295 = smul.addr %s294, 8
      %s296 = scalar_lea.vmem %s1, %s295
      %s297 = smul.u32 16, %s18
      %s298 = smul.u32 16, %s18
      %p299 = scmp.lt.s32.totalorder %s298, 63
      %s300 = scalar_select %p299, %s298, 63
      %s301 = smul.addr %s300, 8
      %s302 = scalar_lea.vmem %s7, %s301
      %s303 = smul.u32 16, %s18
      %v305 = vld [vmem:[%s290] sm:$0xf]
      %v306 = vld [vmem:[%s290 + $0x4] sm:$0xf]
      %v307 = vld [vmem:[%s290 + $0x8] sm:$0xf]
      %v308 = vld [vmem:[%s290 + $0xc] sm:$0xf]
      %v309 = vld [vmem:[%s290 + $0x10] sm:$0xf]
      %v310 = vld [vmem:[%s290 + $0x14] sm:$0xf]
      %v311 = vld [vmem:[%s290 + $0x18] sm:$0xf]
      %v312 = vld [vmem:[%s290 + $0x1c] sm:$0xf]
      %v313 = vld [vmem:[%s290 + $0x20] sm:$0xf]
      %v314 = vld [vmem:[%s290 + $0x24] sm:$0xf]
      %v315 = vld [vmem:[%s290 + $0x28] sm:$0xf]
      %v316 = vld [vmem:[%s290 + $0x2c] sm:$0xf]
      %v317 = vld [vmem:[%s290 + $0x30] sm:$0xf]
      %v318 = vld [vmem:[%s290 + $0x34] sm:$0xf]
      %v319 = vld [vmem:[%s290 + $0x38] sm:$0xf]
      %v320 = vld [vmem:[%s290 + $0x3c] sm:$0xf]
      %v321 = vld [vmem:[%s3] sm:$0x1]
      %v322 = vld [vmem:[%s4] sm:$0x1]
      %v324 = vlaneseq
      %v325 = vshrl.u32 %v324, 7
      %v326 = vsub.s32 0, %v325
      %v327 = vrot.slane %v322, %v326
      %v345 = vunpack.c.l.b16 %v305
      %v346 = vunpack.c.l.b16 %v306
      %v347 = vunpack.c.l.b16 %v307
      %v348 = vunpack.c.l.b16 %v308
      %v349 = vunpack.c.l.b16 %v309
      %v350 = vunpack.c.l.b16 %v310
      %v351 = vunpack.c.l.b16 %v311
      %v352 = vunpack.c.l.b16 %v312
      %v353 = vunpack.c.l.b16 %v313
      %v354 = vunpack.c.l.b16 %v314
      %v355 = vunpack.c.l.b16 %v315
      %v356 = vunpack.c.l.b16 %v316
      %v357 = vunpack.c.l.b16 %v317
      %v358 = vunpack.c.l.b16 %v318
      %v359 = vunpack.c.l.b16 %v319
      %v360 = vunpack.c.l.b16 %v320
      %v361 = vpack.c.b16 %v346, %v345
      %v362 = vpack.c.b16 %v348, %v347
      %v363 = vpack.c.b16 %v350, %v349
      %v364 = vpack.c.b16 %v352, %v351
      %v365 = vpack.c.b16 %v354, %v353
      %v366 = vpack.c.b16 %v356, %v355
      %v367 = vpack.c.b16 %v358, %v357
      %v368 = vpack.c.b16 %v360, %v359
      %vm369 = vcmask 15360
      %v371 = vsel %vm369, %v361, 0
      %v374 = vsel %vm369, %v362, 0
      %v377 = vsel %vm369, %v363, 0
      %v380 = vsel %vm369, %v364, 0
      %v383 = vsel %vm369, %v365, 0
      %v386 = vsel %vm369, %v366, 0
      %v389 = vsel %vm369, %v367, 0
      %v392 = vsel %vm369, %v368, 0
      %vm394 = vcmask 1040384
      %v396 = vsel %vm394, %v321, 0
      %398 = vmatprep.subr.bf16.mxu0 0
      %399 = vmatpush1.bf16.msra.mxu0 %v396
      %400 = vmatprep.subr.bf16.mxu0 0
      %401 = vmatpush1.bf16.msra.mxu0 0
      %402 = vmatprep.subr.bf16.mxu0 0
      %403 = vmatpush1.bf16.msra.mxu0 0
      %404 = vmatprep.subr.bf16.mxu0 0
      %405 = vmatpush1.bf16.msra.mxu0 0
      %406 = vmatprep.subr.bf16.mxu0 0
      %407 = vmatpush1.bf16.msra.mxu0 0
      %408 = vmatprep.subr.bf16.mxu0 0
      %409 = vmatpush1.bf16.msra.mxu0 0
      %410 = vmatprep.subr.bf16.mxu0 0
      %411 = vmatpush1.bf16.msra.mxu0 0
      %412 = vmatprep.subr.bf16.mxu0 0
      %413 = vmatpush1.bf16.msra.mxu0 0
      %414 = vmatprep.subr.bf16.mxu0 0
      %415 = vmatpush1.bf16.msra.mxu0 0
      %416 = vmatprep.subr.bf16.mxu0 0
      %417 = vmatpush1.bf16.msra.mxu0 0
      %418 = vmatprep.subr.bf16.mxu0 0
      %419 = vmatpush1.bf16.msra.mxu0 0
      %420 = vmatprep.subr.bf16.mxu0 0
      %421 = vmatpush1.bf16.msra.mxu0 0
      %422 = vmatprep.subr.bf16.mxu0 0
      %423 = vmatpush1.bf16.msra.mxu0 0
      %424 = vmatprep.subr.bf16.mxu0 0
      %425 = vmatpush1.bf16.msra.mxu0 0
      %426 = vmatprep.subr.bf16.mxu0 0
      %427 = vmatpush1.bf16.msra.mxu0 0
      %428 = vmatprep.subr.bf16.mxu0 0
      %429 = vmatpush1.bf16.msra.mxu0 0
      %430 = vmatprep.mubr.bf16.mxu0 0
      %431 = vmatmul.mubr.bf16.gmra.mrb[0].mxu0 %v371
      %v432 = vpop.f32.mrb[0].mxu0
      %v433 = vadd.f32 %v327, %v432
      %v434 = vpop.f32.mrb[0].mxu0
      %v435 = vpop.f32.mrb[0].mxu0
      %v436 = vadd.f32 %v327, %v435
      %v437 = vpop.f32.mrb[0].mxu0
      %438 = vmatprep.mubr.bf16.mxu0 0
      %439 = vmatmul.mubr.bf16.gmra.mrb[0].mxu0 %v374
      %v440 = vpop.f32.mrb[0].mxu0
      %v441 = vadd.f32 %v327, %v440
      %v442 = vpop.f32.mrb[0].mxu0
      %v443 = vpop.f32.mrb[0].mxu0
      %v444 = vadd.f32 %v327, %v443
      %v445 = vpop.f32.mrb[0].mxu0
      %446 = vmatprep.mubr.bf16.mxu0 0
      %447 = vmatmul.mubr.bf16.gmra.mrb[0].mxu0 %v377
      %v448 = vpop.f32.mrb[0].mxu0
      %v449 = vadd.f32 %v327, %v448
      %v450 = vpop.f32.mrb[0].mxu0
      %v451 = vpop.f32.mrb[0].mxu0
      %v452 = vadd.f32 %v327, %v451
      %v453 = vpop.f32.mrb[0].mxu0
      %454 = vmatprep.mubr.bf16.mxu0 0
      %455 = vmatmul.mubr.bf16.gmra.mrb[0].mxu0 %v380
      %v456 = vpop.f32.mrb[0].mxu0
      %v457 = vadd.f32 %v327, %v456
      %v458 = vpop.f32.mrb[0].mxu0
      %v459 = vpop.f32.mrb[0].mxu0
      %v460 = vadd.f32 %v327, %v459
      %v461 = vpop.f32.mrb[0].mxu0
      %462 = vmatprep.mubr.bf16.mxu0 0
      %463 = vmatmul.mubr.bf16.gmra.mrb[0].mxu0 %v383
      %v464 = vpop.f32.mrb[0].mxu0
      %v465 = vadd.f32 %v327, %v464
      %v466 = vpop.f32.mrb[0].mxu0
      %v467 = vpop.f32.mrb[0].mxu0
      %v468 = vadd.f32 %v327, %v467
      %v469 = vpop.f32.mrb[0].mxu0
      %470 = vmatprep.mubr.bf16.mxu0 0
      %471 = vmatmul.mubr.bf16.gmra.mrb[0].mxu0 %v386
      %v472 = vpop.f32.mrb[0].mxu0
      %v473 = vadd.f32 %v327, %v472
      %v474 = vpop.f32.mrb[0].mxu0
      %v475 = vpop.f32.mrb[0].mxu0
      %v476 = vadd.f32 %v327, %v475
      %v477 = vpop.f32.mrb[0].mxu0
      %478 = vmatprep.mubr.bf16.mxu0 0
      %479 = vmatmul.mubr.bf16.gmra.mrb[0].mxu0 %v389
      %v480 = vpop.f32.mrb[0].mxu0
      %v481 = vadd.f32 %v327, %v480
      %v482 = vpop.f32.mrb[0].mxu0
      %v483 = vpop.f32.mrb[0].mxu0
      %v484 = vadd.f32 %v327, %v483
      %v485 = vpop.f32.mrb[0].mxu0
      %486 = vmatprep.mubr.bf16.mxu0 0
      %487 = vmatmul.mubr.bf16.gmra.mrb[0].mxu0 %v392
      %v488 = vpop.f32.mrb[0].mxu0
      %v489 = vadd.f32 %v327, %v488
      %v490 = vpop.f32.mrb[0].mxu0
      %v491 = vpop.f32.mrb[0].mxu0
      %v492 = vadd.f32 %v327, %v491
      %v493 = vpop.f32.mrb[0].mxu0
      %494 = vdwg.mxu0
      %v495 = vpack.c.bf16 %v436, %v433
      %v496 = vpack.c.bf16 %v444, %v441
      %v497 = vpack.c.bf16 %v452, %v449
      %v498 = vpack.c.bf16 %v460, %v457
      %v499 = vpack.c.bf16 %v468, %v465
      %v500 = vpack.c.bf16 %v476, %v473
      %v501 = vpack.c.bf16 %v484, %v481
      %v502 = vpack.c.bf16 %v492, %v489
      %v503 = vld [vmem:[%s2] sm:$0xff]
      %v504 = vld [vmem:[%s2 + $0x8] sm:$0xff]
      %v505 = vld [vmem:[%s2 + $0x10] sm:$0xff]
      %v506 = vld [vmem:[%s2 + $0x18] sm:$0xff]
      %v507 = vld [vmem:[%s2 + $0x20] sm:$0xff]
      %v508 = vld [vmem:[%s2 + $0x28] sm:$0xff]
      %v509 = vld [vmem:[%s2 + $0x30] sm:$0xff]
      %v510 = vld [vmem:[%s2 + $0x38] sm:$0xff]
      %v511 = vld [vmem:[%s2 + $0x40] sm:$0xff]
      %v512 = vld [vmem:[%s2 + $0x48] sm:$0xff]
      %v513 = vld [vmem:[%s2 + $0x50] sm:$0xff]
      %v514 = vld [vmem:[%s2 + $0x58] sm:$0xff]
      %v515 = vld [vmem:[%s2 + $0x60] sm:$0xff]
      %v516 = vld [vmem:[%s2 + $0x68] sm:$0xff]
      %v517 = vld [vmem:[%s2 + $0x70] sm:$0xff]
      %v518 = vld [vmem:[%s2 + $0x78] sm:$0xff]
      %527 = vrot.lane.b32.xlu0 %v495, 126
      %v528 = vpop.permute.xlu0 %527
      %529 = vrot.lane.b32.xlu0 %v496, 126
      %v530 = vpop.permute.xlu0 %529
      %531 = vrot.lane.b32.xlu0 %v497, 126
      %v532 = vpop.permute.xlu0 %531
      %533 = vrot.lane.b32.xlu0 %v498, 126
      %v534 = vpop.permute.xlu0 %533
      %535 = vrot.lane.b32.xlu0 %v499, 126
      %v536 = vpop.permute.xlu0 %535
      %537 = vrot.lane.b32.xlu0 %v500, 126
      %v538 = vpop.permute.xlu0 %537
      %539 = vrot.lane.b32.xlu0 %v501, 126
      %v540 = vpop.permute.xlu0 %539
      %541 = vrot.lane.b32.xlu0 %v502, 126
      %v542 = vpop.permute.xlu0 %541
      %v544 = vsel %vm369, %v495, 0
      %v547 = vsel %vm369, %v496, 0
      %v550 = vsel %vm369, %v497, 0
      %v553 = vsel %vm369, %v498, 0
      %v556 = vsel %vm369, %v499, 0
      %v559 = vsel %vm369, %v500, 0
      %v562 = vsel %vm369, %v501, 0
      %v565 = vsel %vm369, %v502, 0
      %v568 = vsel %vm369, %v528, 0
      %v571 = vsel %vm369, %v530, 0
      %v574 = vsel %vm369, %v532, 0
      %v577 = vsel %vm369, %v534, 0
      %v580 = vsel %vm369, %v536, 0
      %v583 = vsel %vm369, %v538, 0
      %v586 = vsel %vm369, %v540, 0
      %v589 = vsel %vm369, %v542, 0
      %591 = vmatprep.subr.bf16.mxu0 0
      %592 = vmatpush1.bf16.xpose.msra.mxu0 %v568
      %593 = vmatprep.subr.bf16.mxu0 0
      %594 = vmatpush1.bf16.xpose.msra.mxu0 %v571
      %595 = vmatprep.subr.bf16.mxu0 0
      %596 = vmatpush1.bf16.xpose.msra.mxu0 %v574
      %597 = vmatprep.subr.bf16.mxu0 0
      %598 = vmatpush1.bf16.xpose.msra.mxu0 %v577
      %599 = vmatprep.subr.bf16.mxu0 0
      %600 = vmatpush1.bf16.xpose.msra.mxu0 %v580
      %601 = vmatprep.subr.bf16.mxu0 0
      %602 = vmatpush1.bf16.xpose.msra.mxu0 %v583
      %603 = vmatprep.subr.bf16.mxu0 0
      %604 = vmatpush1.bf16.xpose.msra.mxu0 %v586
      %605 = vmatprep.subr.bf16.mxu0 0
      %606 = vmatpush1.bf16.xpose.msra.mxu0 %v589
      %607 = vmatprep.subr.bf16.mxu0 0
      %608 = vmatpush1.bf16.xpose.msra.mxu0 0
      %609 = vmatprep.subr.bf16.mxu0 0
      %610 = vmatpush1.bf16.xpose.msra.mxu0 0
      %611 = vmatprep.subr.bf16.mxu0 0
      %612 = vmatpush1.bf16.xpose.msra.mxu0 0
      %613 = vmatprep.subr.bf16.mxu0 0
      %614 = vmatpush1.bf16.xpose.msra.mxu0 0
      %615 = vmatprep.subr.bf16.mxu0 0
      %616 = vmatpush1.bf16.xpose.msra.mxu0 0
      %617 = vmatprep.subr.bf16.mxu0 0
      %618 = vmatpush1.bf16.xpose.msra.mxu0 0
      %619 = vmatprep.subr.bf16.mxu0 0
      %620 = vmatpush1.bf16.xpose.msra.mxu0 0
      %621 = vmatprep.subr.bf16.mxu0 0
      %622 = vmatpush1.bf16.xpose.msra.mxu0 0
      %623 = vmatprep.mubr.bf16.mxu0 0
      %624 = vmatmul.mubr.bf16.gmra.mrb[0].mxu0 %v544
      %v625 = vpop.f32.mrb[0].mxu0
      %v626 = vadd.f32 %v503, %v625
      %v627 = vpop.f32.mrb[0].mxu0
      %v628 = vpop.f32.mrb[0].mxu0
      %v629 = vadd.f32 %v504, %v628
      %v630 = vpop.f32.mrb[0].mxu0
      %631 = vmatprep.mubr.bf16.mxu0 0
      %632 = vmatmul.mubr.bf16.gmra.mrb[0].mxu0 %v547
      %v633 = vpop.f32.mrb[0].mxu0
      %v634 = vadd.f32 %v505, %v633
      %v635 = vpop.f32.mrb[0].mxu0
      %v636 = vpop.f32.mrb[0].mxu0
      %v637 = vadd.f32 %v506, %v636
      %v638 = vpop.f32.mrb[0].mxu0
      %639 = vmatprep.mubr.bf16.mxu0 0
      %640 = vmatmul.mubr.bf16.gmra.mrb[0].mxu0 %v550
      %v641 = vpop.f32.mrb[0].mxu0
      %v642 = vadd.f32 %v507, %v641
      %v643 = vpop.f32.mrb[0].mxu0
      %v644 = vpop.f32.mrb[0].mxu0
      %v645 = vadd.f32 %v508, %v644
      %v646 = vpop.f32.mrb[0].mxu0
      %647 = vmatprep.mubr.bf16.mxu0 0
      %648 = vmatmul.mubr.bf16.gmra.mrb[0].mxu0 %v553
      %v649 = vpop.f32.mrb[0].mxu0
      %v650 = vadd.f32 %v509, %v649
      %v651 = vpop.f32.mrb[0].mxu0
      %v652 = vpop.f32.mrb[0].mxu0
      %v653 = vadd.f32 %v510, %v652
      %v654 = vpop.f32.mrb[0].mxu0
      %655 = vmatprep.mubr.bf16.mxu0 0
      %656 = vmatmul.mubr.bf16.gmra.mrb[0].mxu0 %v556
      %v657 = vpop.f32.mrb[0].mxu0
      %v658 = vadd.f32 %v511, %v657
      %v659 = vpop.f32.mrb[0].mxu0
      %v660 = vpop.f32.mrb[0].mxu0
      %v661 = vadd.f32 %v512, %v660
      %v662 = vpop.f32.mrb[0].mxu0
      %663 = vmatprep.mubr.bf16.mxu0 0
      %664 = vmatmul.mubr.bf16.gmra.mrb[0].mxu0 %v559
      %v665 = vpop.f32.mrb[0].mxu0
      %v666 = vadd.f32 %v513, %v665
      %v667 = vpop.f32.mrb[0].mxu0
      %v668 = vpop.f32.mrb[0].mxu0
      %v669 = vadd.f32 %v514, %v668
      %v670 = vpop.f32.mrb[0].mxu0
      %671 = vmatprep.mubr.bf16.mxu0 0
      %672 = vmatmul.mubr.bf16.gmra.mrb[0].mxu0 %v562
      %v673 = vpop.f32.mrb[0].mxu0
      %v674 = vadd.f32 %v515, %v673
      %v675 = vpop.f32.mrb[0].mxu0
      %v676 = vpop.f32.mrb[0].mxu0
      %v677 = vadd.f32 %v516, %v676
      %v678 = vpop.f32.mrb[0].mxu0
      %679 = vmatprep.mubr.bf16.mxu0 0
      %680 = vmatmul.mubr.bf16.gmra.mrb[0].mxu0 %v565
      %v681 = vpop.f32.mrb[0].mxu0
      %v682 = vadd.f32 %v517, %v681
      %v683 = vpop.f32.mrb[0].mxu0
      %v684 = vpop.f32.mrb[0].mxu0
      %v685 = vadd.f32 %v518, %v684
      %v686 = vpop.f32.mrb[0].mxu0
      %687 = vdwg.mxu0
      %688 = vmax.xlane.f32.xlu0 %v626
      %v689 = vpop.xlane.xlu0 %688
      %690 = vmax.xlane.f32.xlu0 %v629
      %v691 = vpop.xlane.xlu0 %690
      %692 = vmax.xlane.f32.xlu0 %v634
      %v693 = vpop.xlane.xlu0 %692
      %694 = vmax.xlane.f32.xlu0 %v637
      %v695 = vpop.xlane.xlu0 %694
      %696 = vmax.xlane.f32.xlu0 %v642
      %v697 = vpop.xlane.xlu0 %696
      %698 = vmax.xlane.f32.xlu0 %v645
      %v699 = vpop.xlane.xlu0 %698
      %700 = vmax.xlane.f32.xlu0 %v650
      %v701 = vpop.xlane.xlu0 %700
      %702 = vmax.xlane.f32.xlu0 %v653
      %v703 = vpop.xlane.xlu0 %702
      %704 = vmax.xlane.f32.xlu0 %v658
      %v705 = vpop.xlane.xlu0 %704
      %706 = vmax.xlane.f32.xlu0 %v661
      %v707 = vpop.xlane.xlu0 %706
      %708 = vmax.xlane.f32.xlu0 %v666
      %v709 = vpop.xlane.xlu0 %708
      %710 = vmax.xlane.f32.xlu0 %v669
      %v711 = vpop.xlane.xlu0 %710
      %712 = vmax.xlane.f32.xlu0 %v674
      %v713 = vpop.xlane.xlu0 %712
      %714 = vmax.xlane.f32.xlu0 %v677
      %v715 = vpop.xlane.xlu0 %714
      %716 = vmax.xlane.f32.xlu0 %v682
      %v717 = vpop.xlane.xlu0 %716
      %718 = vmax.xlane.f32.xlu0 %v685
      %v719 = vpop.xlane.xlu0 %718
      %v720 = vsub.f32 %v626, %v689
      %v721 = vsub.f32 %v629, %v691
      %v722 = vsub.f32 %v634, %v693
      %v723 = vsub.f32 %v637, %v695
      %v724 = vsub.f32 %v642, %v697
      %v725 = vsub.f32 %v645, %v699
      %v726 = vsub.f32 %v650, %v701
      %v727 = vsub.f32 %v653, %v703
      %v728 = vsub.f32 %v658, %v705
      %v729 = vsub.f32 %v661, %v707
      %v730 = vsub.f32 %v666, %v709
      %v731 = vsub.f32 %v669, %v711
      %v732 = vsub.f32 %v674, %v713
      %v733 = vsub.f32 %v677, %v715
      %v734 = vsub.f32 %v682, %v717
      %v735 = vsub.f32 %v685, %v719
      %v736 = vmul.f32 %v720, 1.442695
      %v737 = vpow.pop %v736
      %v738 = vmul.f32 %v721, 1.442695
      %v739 = vpow.pop %v738
      %v740 = vmul.f32 %v722, 1.442695
      %v741 = vpow.pop %v740
      %v742 = vmul.f32 %v723, 1.442695
      %v743 = vpow.pop %v742
      %v744 = vmul.f32 %v724, 1.442695
      %v745 = vpow.pop %v744
      %v746 = vmul.f32 %v725, 1.442695
      %v747 = vpow.pop %v746
      %v748 = vmul.f32 %v726, 1.442695
      %v749 = vpow.pop %v748
      %v750 = vmul.f32 %v727, 1.442695
      %v751 = vpow.pop %v750
      %v752 = vmul.f32 %v728, 1.442695
      %v753 = vpow.pop %v752
      %v754 = vmul.f32 %v729, 1.442695
      %v755 = vpow.pop %v754
      %v756 = vmul.f32 %v730, 1.442695
      %v757 = vpow.pop %v756
      %v758 = vmul.f32 %v731, 1.442695
      %v759 = vpow.pop %v758
      %v760 = vmul.f32 %v732, 1.442695
      %v761 = vpow.pop %v760
      %v762 = vmul.f32 %v733, 1.442695
      %v763 = vpow.pop %v762
      %v764 = vmul.f32 %v734, 1.442695
      %v765 = vpow.pop %v764
      %v766 = vmul.f32 %v735, 1.442695
      %v767 = vpow.pop %v766
      %768 = vadd.xlane.f32.xlu0 %v737
      %v769 = vpop.xlane.xlu0 %768
      %770 = vadd.xlane.f32.xlu0 %v739
      %v771 = vpop.xlane.xlu0 %770
      %772 = vadd.xlane.f32.xlu0 %v741
      %v773 = vpop.xlane.xlu0 %772
      %774 = vadd.xlane.f32.xlu0 %v743
      %v775 = vpop.xlane.xlu0 %774
      %776 = vadd.xlane.f32.xlu0 %v745
      %v777 = vpop.xlane.xlu0 %776
      %778 = vadd.xlane.f32.xlu0 %v747
      %v779 = vpop.xlane.xlu0 %778
      %780 = vadd.xlane.f32.xlu0 %v749
      %v781 = vpop.xlane.xlu0 %780
      %782 = vadd.xlane.f32.xlu0 %v751
      %v783 = vpop.xlane.xlu0 %782
      %784 = vadd.xlane.f32.xlu0 %v753
      %v785 = vpop.xlane.xlu0 %784
      %786 = vadd.xlane.f32.xlu0 %v755
      %v787 = vpop.xlane.xlu0 %786
      %788 = vadd.xlane.f32.xlu0 %v757
      %v789 = vpop.xlane.xlu0 %788
      %790 = vadd.xlane.f32.xlu0 %v759
      %v791 = vpop.xlane.xlu0 %790
      %792 = vadd.xlane.f32.xlu0 %v761
      %v793 = vpop.xlane.xlu0 %792
      %794 = vadd.xlane.f32.xlu0 %v763
      %v795 = vpop.xlane.xlu0 %794
      %796 = vadd.xlane.f32.xlu0 %v765
      %v797 = vpop.xlane.xlu0 %796
      %798 = vadd.xlane.f32.xlu0 %v767
      %v799 = vpop.xlane.xlu0 %798
      %v800 = vrcp.pop %v769
      %v801 = vrcp.pop %v771
      %v802 = vrcp.pop %v773
      %v803 = vrcp.pop %v775
      %v804 = vrcp.pop %v777
      %v805 = vrcp.pop %v779
      %v806 = vrcp.pop %v781
      %v807 = vrcp.pop %v783
      %v808 = vrcp.pop %v785
      %v809 = vrcp.pop %v787
      %v810 = vrcp.pop %v789
      %v811 = vrcp.pop %v791
      %v812 = vrcp.pop %v793
      %v813 = vrcp.pop %v795
      %v814 = vrcp.pop %v797
      %v815 = vrcp.pop %v799
      %v816 = vmul.f32 %v737, %v800
      %v817 = vmul.f32 %v739, %v801
      %v818 = vmul.f32 %v741, %v802
      %v819 = vmul.f32 %v743, %v803
      %v820 = vmul.f32 %v745, %v804
      %v821 = vmul.f32 %v747, %v805
      %v822 = vmul.f32 %v749, %v806
      %v823 = vmul.f32 %v751, %v807
      %v824 = vmul.f32 %v753, %v808
      %v825 = vmul.f32 %v755, %v809
      %v826 = vmul.f32 %v757, %v810
      %v827 = vmul.f32 %v759, %v811
      %v828 = vmul.f32 %v761, %v812
      %v829 = vmul.f32 %v763, %v813
      %v830 = vmul.f32 %v765, %v814
      %v831 = vmul.f32 %v767, %v815
      %v832 = vpack.c.bf16 %v817, %v816
      %v833 = vpack.c.bf16 %v819, %v818
      %v834 = vpack.c.bf16 %v821, %v820
      %v835 = vpack.c.bf16 %v823, %v822
      %v836 = vpack.c.bf16 %v825, %v824
      %v837 = vpack.c.bf16 %v827, %v826
      %v838 = vpack.c.bf16 %v829, %v828
      %v839 = vpack.c.bf16 %v831, %v830
      %v840 = vld [vmem:[%s296] sm:$0xff]
      %v841 = vld [vmem:[%s296 + $0x8] sm:$0xff]
      %v842 = vld [vmem:[%s296 + $0x10] sm:$0xff]
      %v843 = vld [vmem:[%s296 + $0x18] sm:$0xff]
      %v844 = vld [vmem:[%s296 + $0x20] sm:$0xff]
      %v845 = vld [vmem:[%s296 + $0x28] sm:$0xff]
      %v846 = vld [vmem:[%s296 + $0x30] sm:$0xff]
      %v847 = vld [vmem:[%s296 + $0x38] sm:$0xff]
      %v848 = vld [vmem:[%s296 + $0x40] sm:$0xff]
      %v849 = vld [vmem:[%s296 + $0x48] sm:$0xff]
      %v850 = vld [vmem:[%s296 + $0x50] sm:$0xff]
      %v851 = vld [vmem:[%s296 + $0x58] sm:$0xff]
      %v852 = vld [vmem:[%s296 + $0x60] sm:$0xff]
      %v853 = vld [vmem:[%s296 + $0x68] sm:$0xff]
      %v854 = vld [vmem:[%s296 + $0x70] sm:$0xff]
      %v855 = vld [vmem:[%s296 + $0x78] sm:$0xff]
      %856 = vrot.lane.b32.xlu0 %v495, 124
      %v857 = vpop.permute.xlu0 %856
      %858 = vrot.lane.b32.xlu0 %v496, 124
      %v859 = vpop.permute.xlu0 %858
      %860 = vrot.lane.b32.xlu0 %v497, 124
      %v861 = vpop.permute.xlu0 %860
      %862 = vrot.lane.b32.xlu0 %v498, 124
      %v863 = vpop.permute.xlu0 %862
      %864 = vrot.lane.b32.xlu0 %v499, 124
      %v865 = vpop.permute.xlu0 %864
      %866 = vrot.lane.b32.xlu0 %v500, 124
      %v867 = vpop.permute.xlu0 %866
      %868 = vrot.lane.b32.xlu0 %v501, 124
      %v869 = vpop.permute.xlu0 %868
      %870 = vrot.lane.b32.xlu0 %v502, 124
      %v871 = vpop.permute.xlu0 %870
      %880 = vmatprep.subr.bf16.mxu0 0
      %881 = vmatpush1.bf16.msra.mxu0 %v857
      %882 = vmatprep.subr.bf16.mxu0 0
      %883 = vmatpush1.bf16.msra.mxu0 %v859
      %884 = vmatprep.subr.bf16.mxu0 0
      %885 = vmatpush1.bf16.msra.mxu0 %v861
      %886 = vmatprep.subr.bf16.mxu0 0
      %887 = vmatpush1.bf16.msra.mxu0 %v863
      %888 = vmatprep.subr.bf16.mxu0 0
      %889 = vmatpush1.bf16.msra.mxu0 %v865
      %890 = vmatprep.subr.bf16.mxu0 0
      %891 = vmatpush1.bf16.msra.mxu0 %v867
      %892 = vmatprep.subr.bf16.mxu0 0
      %893 = vmatpush1.bf16.msra.mxu0 %v869
      %894 = vmatprep.subr.bf16.mxu0 0
      %895 = vmatpush1.bf16.msra.mxu0 %v871
      %896 = vmatprep.subr.bf16.mxu0 0
      %897 = vmatpush1.bf16.msra.mxu0 0
      %898 = vmatprep.subr.bf16.mxu0 0
      %899 = vmatpush1.bf16.msra.mxu0 0
      %900 = vmatprep.subr.bf16.mxu0 0
      %901 = vmatpush1.bf16.msra.mxu0 0
      %902 = vmatprep.subr.bf16.mxu0 0
      %903 = vmatpush1.bf16.msra.mxu0 0
      %904 = vmatprep.subr.bf16.mxu0 0
      %905 = vmatpush1.bf16.msra.mxu0 0
      %906 = vmatprep.subr.bf16.mxu0 0
      %907 = vmatpush1.bf16.msra.mxu0 0
      %908 = vmatprep.subr.bf16.mxu0 0
      %909 = vmatpush1.bf16.msra.mxu0 0
      %910 = vmatprep.subr.bf16.mxu0 0
      %911 = vmatpush1.bf16.msra.mxu0 0
      %912 = vmatprep.mubr.bf16.mxu0 0
      %913 = vmatmul.mubr.bf16.gmra.mrb[0].mxu0 %v832
      %v914 = vpop.f32.mrb[0].mxu0
      %v915 = vadd.f32 %v840, %v914
      %v916 = vpop.f32.mrb[0].mxu0
      %v917 = vpop.f32.mrb[0].mxu0
      %v918 = vadd.f32 %v841, %v917
      %v919 = vpop.f32.mrb[0].mxu0
      %920 = vmatprep.mubr.bf16.mxu0 0
      %921 = vmatmul.mubr.bf16.gmra.mrb[0].mxu0 %v833
      %v922 = vpop.f32.mrb[0].mxu0
      %v923 = vadd.f32 %v842, %v922
      %v924 = vpop.f32.mrb[0].mxu0
      %v925 = vpop.f32.mrb[0].mxu0
      %v926 = vadd.f32 %v843, %v925
      %v927 = vpop.f32.mrb[0].mxu0
      %928 = vmatprep.mubr.bf16.mxu0 0
      %929 = vmatmul.mubr.bf16.gmra.mrb[0].mxu0 %v834
      %v930 = vpop.f32.mrb[0].mxu0
      %v931 = vadd.f32 %v844, %v930
      %v932 = vpop.f32.mrb[0].mxu0
      %v933 = vpop.f32.mrb[0].mxu0
      %v934 = vadd.f32 %v845, %v933
      %v935 = vpop.f32.mrb[0].mxu0
      %936 = vmatprep.mubr.bf16.mxu0 0
      %937 = vmatmul.mubr.bf16.gmra.mrb[0].mxu0 %v835
      %v938 = vpop.f32.mrb[0].mxu0
      %v939 = vadd.f32 %v846, %v938
      %v940 = vpop.f32.mrb[0].mxu0
      %v941 = vpop.f32.mrb[0].mxu0
      %v942 = vadd.f32 %v847, %v941
      %v943 = vpop.f32.mrb[0].mxu0
      %944 = vmatprep.mubr.bf16.mxu0 0
      %945 = vmatmul.mubr.bf16.gmra.mrb[0].mxu0 %v836
      %v946 = vpop.f32.mrb[0].mxu0
      %v947 = vadd.f32 %v848, %v946
      %v948 = vpop.f32.mrb[0].mxu0
      %v949 = vpop.f32.mrb[0].mxu0
      %v950 = vadd.f32 %v849, %v949
      %v951 = vpop.f32.mrb[0].mxu0
      %952 = vmatprep.mubr.bf16.mxu0 0
      %953 = vmatmul.mubr.bf16.gmra.mrb[0].mxu0 %v837
      %v954 = vpop.f32.mrb[0].mxu0
      %v955 = vadd.f32 %v850, %v954
      %v956 = vpop.f32.mrb[0].mxu0
      %v957 = vpop.f32.mrb[0].mxu0
      %v958 = vadd.f32 %v851, %v957
      %v959 = vpop.f32.mrb[0].mxu0
      %960 = vmatprep.mubr.bf16.mxu0 0
      %961 = vmatmul.mubr.bf16.gmra.mrb[0].mxu0 %v838
      %v962 = vpop.f32.mrb[0].mxu0
      %v963 = vadd.f32 %v852, %v962
      %v964 = vpop.f32.mrb[0].mxu0
      %v965 = vpop.f32.mrb[0].mxu0
      %v966 = vadd.f32 %v853, %v965
      %v967 = vpop.f32.mrb[0].mxu0
      %968 = vmatprep.mubr.bf16.mxu0 0
      %969 = vmatmul.mubr.bf16.gmra.mrb[0].mxu0 %v839
      %v970 = vpop.f32.mrb[0].mxu0
      %v971 = vadd.f32 %v854, %v970
      %v972 = vpop.f32.mrb[0].mxu0
      %v973 = vpop.f32.mrb[0].mxu0
      %v974 = vadd.f32 %v855, %v973
      %v975 = vpop.f32.mrb[0].mxu0
      %976 = vdwg.mxu0
      %v977 = vpack.c.bf16 %v918, %v915
      %v978 = vpack.c.bf16 %v926, %v923
      %v979 = vpack.c.bf16 %v934, %v931
      %v980 = vpack.c.bf16 %v942, %v939
      %v981 = vpack.c.bf16 %v950, %v947
      %v982 = vpack.c.bf16 %v958, %v955
      %v983 = vpack.c.bf16 %v966, %v963
      %v984 = vpack.c.bf16 %v974, %v971
      %v985 = vld [vmem:[%s5] sm:$0x1]
      %v986 = vld [vmem:[%s6] sm:$0x1]
      %v988 = vlaneseq
      %v989 = vshrl.u32 %v988, 7
      %v990 = vsub.s32 0, %v989
      %v991 = vrot.slane %v986, %v990
      %v994 = vsel %vm369, %v977, 0
      %v997 = vsel %vm369, %v978, 0
      %v1000 = vsel %vm369, %v979, 0
      %v1003 = vsel %vm369, %v980, 0
      %v1006 = vsel %vm369, %v981, 0
      %v1009 = vsel %vm369, %v982, 0
      %v1012 = vsel %vm369, %v983, 0
      %v1015 = vsel %vm369, %v984, 0
      %v1018 = vsel %vm394, %v985, 0
      %1020 = vmatprep.subr.bf16.mxu0 0
      %1021 = vmatpush1.bf16.msra.mxu0 %v1018
      %1022 = vmatprep.subr.bf16.mxu0 0
      %1023 = vmatpush1.bf16.msra.mxu0 0
      %1024 = vmatprep.subr.bf16.mxu0 0
      %1025 = vmatpush1.bf16.msra.mxu0 0
      %1026 = vmatprep.subr.bf16.mxu0 0
      %1027 = vmatpush1.bf16.msra.mxu0 0
      %1028 = vmatprep.subr.bf16.mxu0 0
      %1029 = vmatpush1.bf16.msra.mxu0 0
      %1030 = vmatprep.subr.bf16.mxu0 0
      %1031 = vmatpush1.bf16.msra.mxu0 0
      %1032 = vmatprep.subr.bf16.mxu0 0
      %1033 = vmatpush1.bf16.msra.mxu0 0
      %1034 = vmatprep.subr.bf16.mxu0 0
      %1035 = vmatpush1.bf16.msra.mxu0 0
      %1036 = vmatprep.subr.bf16.mxu0 0
      %1037 = vmatpush1.bf16.msra.mxu0 0
      %1038 = vmatprep.subr.bf16.mxu0 0
      %1039 = vmatpush1.bf16.msra.mxu0 0
      %1040 = vmatprep.subr.bf16.mxu0 0
      %1041 = vmatpush1.bf16.msra.mxu0 0
      %1042 = vmatprep.subr.bf16.mxu0 0
      %1043 = vmatpush1.bf16.msra.mxu0 0
      %1044 = vmatprep.subr.bf16.mxu0 0
      %1045 = vmatpush1.bf16.msra.mxu0 0
      %1046 = vmatprep.subr.bf16.mxu0 0
      %1047 = vmatpush1.bf16.msra.mxu0 0
      %1048 = vmatprep.subr.bf16.mxu0 0
      %1049 = vmatpush1.bf16.msra.mxu0 0
      %1050 = vmatprep.subr.bf16.mxu0 0
      %1051 = vmatpush1.bf16.msra.mxu0 0
      %1052 = vmatprep.mubr.bf16.mxu0 0
      %1053 = vmatmul.mubr.bf16.gmra.mrb[0].mxu0 %v994
      %v1054 = vpop.f32.mrb[0].mxu0
      %v1055 = vadd.f32 %v991, %v1054
      %v1056 = vpop.f32.mrb[0].mxu0
      %v1057 = vpop.f32.mrb[0].mxu0
      %v1058 = vadd.f32 %v991, %v1057
      %v1059 = vpop.f32.mrb[0].mxu0
      %1060 = vmatprep.mubr.bf16.mxu0 0
      %1061 = vmatmul.mubr.bf16.gmra.mrb[0].mxu0 %v997
      %v1062 = vpop.f32.mrb[0].mxu0
      %v1063 = vadd.f32 %v991, %v1062
      %v1064 = vpop.f32.mrb[0].mxu0
      %v1065 = vpop.f32.mrb[0].mxu0
      %v1066 = vadd.f32 %v991, %v1065
      %v1067 = vpop.f32.mrb[0].mxu0
      %1068 = vmatprep.mubr.bf16.mxu0 0
      %1069 = vmatmul.mubr.bf16.gmra.mrb[0].mxu0 %v1000
      %v1070 = vpop.f32.mrb[0].mxu0
      %v1071 = vadd.f32 %v991, %v1070
      %v1072 = vpop.f32.mrb[0].mxu0
      %v1073 = vpop.f32.mrb[0].mxu0
      %v1074 = vadd.f32 %v991, %v1073
      %v1075 = vpop.f32.mrb[0].mxu0
      %1076 = vmatprep.mubr.bf16.mxu0 0
      %1077 = vmatmul.mubr.bf16.gmra.mrb[0].mxu0 %v1003
      %v1078 = vpop.f32.mrb[0].mxu0
      %v1079 = vadd.f32 %v991, %v1078
      %v1080 = vpop.f32.mrb[0].mxu0
      %v1081 = vpop.f32.mrb[0].mxu0
      %v1082 = vadd.f32 %v991, %v1081
      %v1083 = vpop.f32.mrb[0].mxu0
      %1084 = vmatprep.mubr.bf16.mxu0 0
      %1085 = vmatmul.mubr.bf16.gmra.mrb[0].mxu0 %v1006
      %v1086 = vpop.f32.mrb[0].mxu0
      %v1087 = vadd.f32 %v991, %v1086
      %v1088 = vpop.f32.mrb[0].mxu0
      %v1089 = vpop.f32.mrb[0].mxu0
      %v1090 = vadd.f32 %v991, %v1089
      %v1091 = vpop.f32.mrb[0].mxu0
      %1092 = vmatprep.mubr.bf16.mxu0 0
      %1093 = vmatmul.mubr.bf16.gmra.mrb[0].mxu0 %v1009
      %v1094 = vpop.f32.mrb[0].mxu0
      %v1095 = vadd.f32 %v991, %v1094
      %v1096 = vpop.f32.mrb[0].mxu0
      %v1097 = vpop.f32.mrb[0].mxu0
      %v1098 = vadd.f32 %v991, %v1097
      %v1099 = vpop.f32.mrb[0].mxu0
      %1100 = vmatprep.mubr.bf16.mxu0 0
      %1101 = vmatmul.mubr.bf16.gmra.mrb[0].mxu0 %v1012
      %v1102 = vpop.f32.mrb[0].mxu0
      %v1103 = vadd.f32 %v991, %v1102
      %v1104 = vpop.f32.mrb[0].mxu0
      %v1105 = vpop.f32.mrb[0].mxu0
      %v1106 = vadd.f32 %v991, %v1105
      %v1107 = vpop.f32.mrb[0].mxu0
      %1108 = vmatprep.mubr.bf16.mxu0 0
      %1109 = vmatmul.mubr.bf16.gmra.mrb[0].mxu0 %v1015
      %v1110 = vpop.f32.mrb[0].mxu0
      %v1111 = vadd.f32 %v991, %v1110
      %v1112 = vpop.f32.mrb[0].mxu0
      %v1113 = vpop.f32.mrb[0].mxu0
      %v1114 = vadd.f32 %v991, %v1113
      %v1115 = vpop.f32.mrb[0].mxu0
      %1116 = vdwg.mxu0
      %1117 = vst.msk [vmem:[%s302] sm:$0xff] %vm369, %v1055
      %1118 = vst.msk [vmem:[%s302 + $0x8] sm:$0xff] %vm369, %v1058
      %1119 = vst.msk [vmem:[%s302 + $0x10] sm:$0xff] %vm369, %v1063
      %1120 = vst.msk [vmem:[%s302 + $0x18] sm:$0xff] %vm369, %v1066
      %1121 = vst.msk [vmem:[%s302 + $0x20] sm:$0xff] %vm369, %v1071
      %1122 = vst.msk [vmem:[%s302 + $0x28] sm:$0xff] %vm369, %v1074
      %1123 = vst.msk [vmem:[%s302 + $0x30] sm:$0xff] %vm369, %v1079
      %1124 = vst.msk [vmem:[%s302 + $0x38] sm:$0xff] %vm369, %v1082
      %1125 = vst.msk [vmem:[%s302 + $0x40] sm:$0xff] %vm369, %v1087
      %1126 = vst.msk [vmem:[%s302 + $0x48] sm:$0xff] %vm369, %v1090
      %1127 = vst.msk [vmem:[%s302 + $0x50] sm:$0xff] %vm369, %v1095
      %1128 = vst.msk [vmem:[%s302 + $0x58] sm:$0xff] %vm369, %v1098
      %1129 = vst.msk [vmem:[%s302 + $0x60] sm:$0xff] %vm369, %v1103
      %1130 = vst.msk [vmem:[%s302 + $0x68] sm:$0xff] %vm369, %v1106
      %1131 = vst.msk [vmem:[%s302 + $0x70] sm:$0xff] %vm369, %v1111
      %1132 = vst.msk [vmem:[%s302 + $0x78] sm:$0xff] %vm369, %v1114
      %s1133 = smul.u32 16, %s18
      %p1134 = scmp.lt.s32.totalorder %s1133, 63
      %s1135 = scalar_select %p1134, %s1133, 63
      %s1136 = smul.addr %s1135, 8
      %s1137 = scalar_lea.vmem %s7, %s1136
      // Predicated region
      $region49: #{lhsa_block.12} parent=47 // pred_check
        %p1138 = pneg %p193
      $region50: #{lhsa_block.12} parent=47 // pred_check_branch
        %1140 = sbr.rel (%p1138) target = $region52
      $region51: #{lhsa_block.12} parent=47 // pred_region
        %s1141 = smul.u32 16, %s18
      $region52: #{lhsa_block.12} parent=47 // pred_fallthru
        _
    $region48: #{lhsa_block.12} parent=5 // pred_fallthru
      _
    %p1142 = scmp.le.s32.totalorder 2, %s13
    // Predicated region
    $region53: #{lhsa_block.12} parent=5 // pred_check
      %p1143 = pneg %p1142
    $region54: #{lhsa_block.12} parent=5 // pred_check_branch
      %1145 = sbr.rel (%p1143) target = $region56
    $region55: #{lhsa_block.12} parent=5 // pred_region
      %s1146 = ssub.s32 %s13, 2
      // Predicated region
      $region57: #{lhsa_block.12} parent=55 // pred_check
        %p1147 = pneg %p199
      $region58: #{lhsa_block.12} parent=55 // pred_check_branch
        %1149 = sbr.rel (%p1147) target = $region60
      $region59: #{lhsa_block.12} parent=55 // pred_region
        %s1150 = smul.u32 16, %s19
        %p1151 = scmp.lt.s32.totalorder %s1150, 63
        %s1152 = scalar_select %p1151, %s1150, 63
        %s1153 = smul.addr %s1152, 8
        %s1154 = scalar_lea.vmem %s7, %s1153
      $region60: #{lhsa_block.12} parent=55 // pred_fallthru
        _
    $region56: #{lhsa_block.12} parent=5 // pred_fallthru
      _
  $region6: #{lhsa_block.12} parent=0 // loop_footer
    %s17 = sadd.s32 1, %s13
  $region7: #{lhsa_block.12} parent=0 // loop_footer_branch
    %12 = sbr.rel target = $region3
  $region8: #{lhsa_block.12} parent=0 // loop_exit
    _

</llo_original>
